<compile_context>
chip_gen: v6e
topology: v6e:2x2x1
jax: 0.10.0
libtpu: 0.0.40
codegen_flags: <defaults>
</compile_context>

<pallas_src>
import jax
import jax.numpy as jnp
from jax.experimental import pallas as pl
from jax.experimental.pallas import tpu as pltpu

# ---- model hyper-parameters (match the nn.Module __init__) -----------------
OBS_DIM = 32          # np.array(observation_space.shape).prod()
ACT_DIM = 4           # np.prod(action_space.shape)
HID1 = 256            # fc1 / residual block width
HID2 = 128            # fc2 width
BLOCK_NUM = 3         # number of ResidualBlock's
LOG_STD_MIN = -5.0
LOG_STD_MAX = 2.0

HEAD_W = 2 * ACT_DIM  # fused mean|log_std head width (= full last dim of output)
MAX_TB = 128          # batch tile upper bound (fills MXU rows; do NOT raise)
MIN_TB = 16           # so each tile splits into two 8-row (f32-tile-aligned) sub-tiles


def _round_up(n, m):
    return (n + m - 1) // m * m


def _ra_actor_kernel(x_ref, w1_ref, b1_ref, wblk_ref, bblk_ref,
                     w2_ref, b2_ref, wh_ref, bh_ref, out_ref):
    """Whole MLP for one batch tile; two interleaved independent sub-tiles."""
    f32 = jnp.float32
    bf16 = jnp.bfloat16

    tb = x_ref.shape[0]
    if tb >= 2 * 8 and (tb // 2) % 8 == 0:          # static (trace-time) decision
        half = tb // 2
        xs = [x_ref[pl.ds(0, half), :], x_ref[pl.ds(half, half), :]]
    else:
        half = tb
        xs = [x_ref[...]]

    # x = self.fc1(x)            (NOTE: no activation after fc1 in the module)
    hs = [jnp.dot(x, w1_ref[...], preferred_element_type=f32) + b1_ref[...]
          for x in xs]

    # residual blocks: h = relu(fc2(relu(fc1(h))) + h)
    # residual held in bf16 (doubles as the bf16 dot input -> low vreg pressure)
    for i in range(BLOCK_NUM):
        res_bf = [h.astype(bf16) for h in hs]
        zs = [jnp.dot(r, wblk_ref[2 * i], preferred_element_type=f32)
              + bblk_ref[2 * i] for r in res_bf]
        zs = [jnp.maximum(z, 0.0).astype(bf16) for z in zs]
        zs = [jnp.dot(z, wblk_ref[2 * i + 1], preferred_element_type=f32)
              + bblk_ref[2 * i + 1] for z in zs]
        hs = [jnp.maximum(z + r.astype(f32), 0.0) for z, r in zip(zs, res_bf)]

    # x = relu(fc2(x))
    hs = [jnp.maximum(jnp.dot(h.astype(bf16), w2_ref[...],
                              preferred_element_type=f32) + b2_ref[...], 0.0)
          for h in hs]

    # fused heads: lanes [0, ACT_DIM) = mean, [ACT_DIM, 2*ACT_DIM) = log_std
    for s, h in enumerate(hs):
        heads = jnp.dot(h.astype(bf16), wh_ref[...],
                        preferred_element_type=f32) + bh_ref[...]
        lane = jax.lax.broadcasted_iota(jnp.int32, heads.shape, 1)
        squashed = (LOG_STD_MIN
                    + 0.5 * (LOG_STD_MAX - LOG_STD_MIN) * (jnp.tanh(heads) + 1.0))
        out = jnp.where(lane >= ACT_DIM, squashed, heads)
        if len(hs) == 1:
            out_ref[...] = out
        else:
            out_ref[pl.ds(s * half, half), :] = out


@jax.jit
def ra_actor_forward(x, params):
    """Returns (mean, log_std), matching RAActorVectorObs.forward."""
    (w1, b1, wblk, bblk, w2, b2, wh, bh) = params
    B = x.shape[0]
    # Batch tile: multiple of 16 (two 8-row sub-tiles), <=128, and chosen so the
    # grid has >=2 steps whenever B allows it (v7x 2-TC sharding).
    tb = min(MAX_TB, max(MIN_TB, _round_up((B + 1) // 2, MIN_TB)))
    b_pad = _round_up(B, tb)
    if b_pad != B:
        x = jnp.pad(x, ((0, b_pad - B), (0, 0)))
    x = x.astype(jnp.bfloat16)          # halve input DMA; MXU-native input

    full = lambda shape: pl.BlockSpec(shape, lambda i: (0,) * len(shape))

    grid_spec = pltpu.PrefetchScalarGridSpec(
        num_scalar_prefetch=0,
        grid=(b_pad // tb,),
        in_specs=[
            pl.BlockSpec((tb, OBS_DIM), lambda i: (i, 0)),          # x (bf16)
            full((OBS_DIM, HID1)), full((1, HID1)),                 # fc1 (bf16 w, f32 b)
            full((2 * BLOCK_NUM, HID1, HID1)),                      # block weights (bf16)
            full((2 * BLOCK_NUM, 1, HID1)),                         # block biases (f32)
            full((HID1, HID2)), full((1, HID2)),                    # fc2
            full((HID2, HEAD_W)), full((1, HEAD_W)),                # fused mean|logstd head
        ],
        out_specs=pl.BlockSpec((tb, HEAD_W), lambda i: (i, 0)),
    )

    out = pl.pallas_call(
        _ra_actor_kernel,
        out_shape=jax.ShapeDtypeStruct((b_pad, HEAD_W), jnp.float32),
        grid_spec=grid_spec,
        compiler_params=pltpu.CompilerParams(
            dimension_semantics=("parallel",)),
    )(x, w1, b1, wblk, bblk, w2, b2, wh, bh)

    mean = out[:B, :ACT_DIM]
    log_std = out[:B, ACT_DIM:2 * ACT_DIM]
    return mean, log_std


def _linear_init(key, fan_in, fan_out):
    """Deterministic PyTorch-style Linear init: U(-1/sqrt(fan_in), 1/sqrt(fan_in))."""
    kw, kb = jax.random.split(key)
    bound = 1.0 / jnp.sqrt(jnp.float32(fan_in))
    w = jax.random.uniform(kw, (fan_in, fan_out), jnp.float32, -bound, bound)
    b = jax.random.uniform(kb, (1, fan_out), jnp.float32, -bound, bound)
    return w, b


def make_params(key):
    keys = jax.random.split(key, 4 + 2 * BLOCK_NUM)
    w1, b1 = _linear_init(keys[0], OBS_DIM, HID1)
    blk_w, blk_b = [], []
    for i in range(BLOCK_NUM):
        wa, ba = _linear_init(keys[1 + 2 * i], HID1, HID1)
        wb, bb = _linear_init(keys[2 + 2 * i], HID1, HID1)
        blk_w += [wa, wb]
        blk_b += [ba, bb]
    wblk = jnp.stack(blk_w, axis=0)                       # (6, 256, 256)
    bblk = jnp.stack(blk_b, axis=0)                       # (6, 1, 256)
    w2, b2 = _linear_init(keys[1 + 2 * BLOCK_NUM], HID1, HID2)
    wm, bm = _linear_init(keys[2 + 2 * BLOCK_NUM], HID2, ACT_DIM)
    wl, bl = _linear_init(keys[3 + 2 * BLOCK_NUM], HID2, ACT_DIM)

    # Fuse fc_mean | fc_logstd into one (HID2, 2*ACT_DIM) head.
    wh = jnp.concatenate([wm, wl], axis=1)                # (128, 8)
    bh = jnp.concatenate([bm, bl], axis=1)                # (1, 8)

    bf16 = jnp.bfloat16   # weights bf16 (halves HBM stream); biases stay f32
    return (w1.astype(bf16), b1, wblk.astype(bf16), bblk,
            w2.astype(bf16), b2, wh.astype(bf16), bh)


def reference_forward_matched(x, params):
    """Pure-JAX reference mirroring the kernel's exact precision path
    (bf16 dot inputs, bf16 residual hold, f32 accumulation / elementwise)."""
    (w1, b1, wblk, bblk, w2, b2, wh, bh) = params
    f32, bf16 = jnp.float32, jnp.bfloat16
    dot = lambda a, w: jnp.dot(a, w, preferred_element_type=f32)
    h = dot(x.astype(bf16), w1) + b1
    for i in range(BLOCK_NUM):
        res_bf = h.astype(bf16)
        z = jnp.maximum(dot(res_bf, wblk[2 * i]) + bblk[2 * i], 0.0)
        z = dot(z.astype(bf16), wblk[2 * i + 1]) + bblk[2 * i + 1]
        h = jnp.maximum(z + res_bf.astype(f32), 0.0)
    h = jnp.maximum(dot(h.astype(bf16), w2) + b2, 0.0)
    heads = dot(h.astype(bf16), wh) + bh
    mean = heads[:, :ACT_DIM]
    log_std = jnp.tanh(heads[:, ACT_DIM:2 * ACT_DIM])
    log_std = LOG_STD_MIN + 0.5 * (LOG_STD_MAX - LOG_STD_MIN) * (log_std + 1.0)
    return mean, log_std


def reference_forward_f32(x, params):
    """Pure-JAX f32 reference of the original module (bf16-stored weights are
    upcast; activations / dots / residual all f32). Bounds the kernel's
    bf16-activation-path error against the true f32 forward."""
    (w1, b1, wblk, bblk, w2, b2, wh, bh) = params
    f32 = jnp.float32
    dot = lambda a, w: jnp.dot(a.astype(f32), w.astype(f32),
                               preferred_element_type=f32)
    h = dot(x, w1) + b1
    for i in range(BLOCK_NUM):
        residual = h
        z = jnp.maximum(dot(h, wblk[2 * i]) + bblk[2 * i], 0.0)
        z = dot(z, wblk[2 * i + 1]) + bblk[2 * i + 1]
        h = jnp.maximum(z + residual, 0.0)
    h = jnp.maximum(dot(h, w2) + b2, 0.0)
    heads = dot(h, wh) + bh
    mean = heads[:, :ACT_DIM]
    log_std = jnp.tanh(heads[:, ACT_DIM:2 * ACT_DIM])
    log_std = LOG_STD_MIN + 0.5 * (LOG_STD_MAX - LOG_STD_MIN) * (log_std + 1.0)
    return mean, log_std


def _check(x, params):
    mean, log_std = ra_actor_forward(x, params)
    jax.block_until_ready((mean, log_std))
    # Matched-precision check (kernel vs identical bf16 path): tight tolerance.
    m1, l1 = reference_forward_matched(x, params)
    assert jnp.allclose(mean, m1, atol=5e-3, rtol=5e-3)
    assert jnp.allclose(log_std, l1, atol=5e-3, rtol=5e-3)
    # f32-path check (bounds bf16 activation/residual error vs true forward).
    m2, l2 = reference_forward_f32(x, params)
    assert jnp.allclose(mean, m2, atol=3e-2, rtol=3e-2)
    assert jnp.allclose(log_std, l2, atol=3e-2, rtol=3e-2)
    return mean, log_std


if __name__ == "__main__":
    key = jax.random.PRNGKey(0)
    kx, kp = jax.random.split(key)
    params = make_params(kp)

    # action_scale / action_bias buffers are only used in get_action (sampling),
    # not in forward(); forward() is what the kernel implements.
    # TODO(synk): get_action() uses torch.distributions.Normal.rsample — RNG
    # sampling / log_prob left outside the kernel scope.

    # Batch of 256 -> two grid steps of tb=128 (MXU-row-filling, 2-TC shardable),
    # each split into two 64-row sub-tiles with interleaved dot chains.
    x = jax.random.normal(kx, (256, OBS_DIM), jnp.float32)
    _check(x, params)

    # Small / ragged batch path (zero-padded up to the 16-row tile).
    x_small = jax.random.normal(kx, (6, OBS_DIM), jnp.float32)
    _check(x_small, params)

    print("KERNEL_OK")
</pallas_src>

<mosaic_0001>
module attributes {stable_mosaic.version = 11 : i64} {
  func.func @_ra_actor_kernel(%arg0: i32, %arg1: memref<128x32xbf16, #tpu.memory_space<vmem>>, %arg2: memref<32x256xbf16, #tpu.memory_space<vmem>>, %arg3: memref<1x256xf32, #tpu.memory_space<vmem>>, %arg4: memref<6x256x256xbf16, #tpu.memory_space<vmem>>, %arg5: memref<6x1x256xf32, #tpu.memory_space<vmem>>, %arg6: memref<256x128xbf16, #tpu.memory_space<vmem>>, %arg7: memref<1x128xf32, #tpu.memory_space<vmem>>, %arg8: memref<128x8xbf16, #tpu.memory_space<vmem>>, %arg9: memref<1x8xf32, #tpu.memory_space<vmem>>, %arg10: memref<128x8xf32, #tpu.memory_space<vmem>>) attributes {dimension_semantics = [#tpu.dimension_semantics<parallel>], iteration_bounds = array<i64: 2>, scalar_prefetch = 0 : i64, scratch_operands = 0 : i64, tpu.core_type = #tpu.core_type<tc>, window_params = [{transform_indices = @transform_0, window_bounds = array<i64: 128, 32>}, {pipeline_mode = #tpu.pipeline_mode<synchronous>, transform_indices = @transform_1, window_bounds = array<i64: 32, 256>}, {pipeline_mode = #tpu.pipeline_mode<synchronous>, transform_indices = @transform_2, window_bounds = array<i64: 1, 256>}, {pipeline_mode = #tpu.pipeline_mode<synchronous>, transform_indices = @transform_3, window_bounds = array<i64: 6, 256, 256>}, {pipeline_mode = #tpu.pipeline_mode<synchronous>, transform_indices = @transform_4, window_bounds = array<i64: 6, 1, 256>}, {pipeline_mode = #tpu.pipeline_mode<synchronous>, transform_indices = @transform_5, window_bounds = array<i64: 256, 128>}, {pipeline_mode = #tpu.pipeline_mode<synchronous>, transform_indices = @transform_6, window_bounds = array<i64: 1, 128>}, {pipeline_mode = #tpu.pipeline_mode<synchronous>, transform_indices = @transform_7, window_bounds = array<i64: 128, 8>}, {pipeline_mode = #tpu.pipeline_mode<synchronous>, transform_indices = @transform_8, window_bounds = array<i64: 1, 8>}, {transform_indices = @transform_9, window_bounds = array<i64: 128, 8>}]} {
    %c0 = arith.constant 0 : index
    %c0_0 = arith.constant 0 : index
    %0 = vector.load %arg1[%c0, %c0_0] : memref<128x32xbf16, #tpu.memory_space<vmem>>, vector<64x32xbf16>
    %c64 = arith.constant 64 : index
    %c0_1 = arith.constant 0 : index
    %1 = vector.load %arg1[%c64, %c0_1] : memref<128x32xbf16, #tpu.memory_space<vmem>>, vector<64x32xbf16>
    %c0_2 = arith.constant 0 : index
    %c0_3 = arith.constant 0 : index
    %2 = vector.load %arg2[%c0_2, %c0_3] : memref<32x256xbf16, #tpu.memory_space<vmem>>, vector<32x256xbf16>
    %cst = arith.constant dense<0.000000e+00> : vector<64x256xf32>
    %3 = tpu.matmul %0, %2, %cst {dimension_numbers = #tpu.dot_dimension_numbers<[1], [0], [0], [1], [0, 0, 1, 1], [], []>} : vector<64x32xbf16>, vector<32x256xbf16>, vector<64x256xf32> -> vector<64x256xf32>
    %c0_4 = arith.constant 0 : index
    %c0_5 = arith.constant 0 : index
    %4 = vector.load %arg3[%c0_4, %c0_5] : memref<1x256xf32, #tpu.memory_space<vmem>>, vector<1x256xf32>
    %5 = vector.broadcast %4 : vector<1x256xf32> to vector<64x256xf32>
    %6 = arith.addf %3, %5 : vector<64x256xf32>
    %c0_6 = arith.constant 0 : index
    %c0_7 = arith.constant 0 : index
    %7 = vector.load %arg2[%c0_6, %c0_7] : memref<32x256xbf16, #tpu.memory_space<vmem>>, vector<32x256xbf16>
    %cst_8 = arith.constant dense<0.000000e+00> : vector<64x256xf32>
    %8 = tpu.matmul %1, %7, %cst_8 {dimension_numbers = #tpu.dot_dimension_numbers<[1], [0], [0], [1], [0, 0, 1, 1], [], []>} : vector<64x32xbf16>, vector<32x256xbf16>, vector<64x256xf32> -> vector<64x256xf32>
    %c0_9 = arith.constant 0 : index
    %c0_10 = arith.constant 0 : index
    %9 = vector.load %arg3[%c0_9, %c0_10] : memref<1x256xf32, #tpu.memory_space<vmem>>, vector<1x256xf32>
    %10 = vector.broadcast %9 : vector<1x256xf32> to vector<64x256xf32>
    %11 = arith.addf %8, %10 : vector<64x256xf32>
    %12 = arith.truncf %6 : vector<64x256xf32> to vector<64x256xbf16>
    %13 = arith.truncf %11 : vector<64x256xf32> to vector<64x256xbf16>
    %c0_11 = arith.constant 0 : index
    %c0_12 = arith.constant 0 : index
    %c0_13 = arith.constant 0 : index
    %14 = vector.load %arg4[%c0_11, %c0_12, %c0_13] : memref<6x256x256xbf16, #tpu.memory_space<vmem>>, vector<1x256x256xbf16>
    %15 = vector.shape_cast %14 : vector<1x256x256xbf16> to vector<256x256xbf16>
    %cst_14 = arith.constant dense<0.000000e+00> : vector<64x256xf32>
    %16 = tpu.matmul %12, %15, %cst_14 {dimension_numbers = #tpu.dot_dimension_numbers<[1], [0], [0], [1], [0, 0, 1, 1], [], []>} : vector<64x256xbf16>, vector<256x256xbf16>, vector<64x256xf32> -> vector<64x256xf32>
    %c0_15 = arith.constant 0 : index
    %c0_16 = arith.constant 0 : index
    %c0_17 = arith.constant 0 : index
    %17 = vector.load %arg5[%c0_15, %c0_16, %c0_17] : memref<6x1x256xf32, #tpu.memory_space<vmem>>, vector<1x1x256xf32>
    %18 = vector.shape_cast %17 : vector<1x1x256xf32> to vector<1x256xf32>
    %19 = vector.broadcast %18 : vector<1x256xf32> to vector<64x256xf32>
    %20 = arith.addf %16, %19 : vector<64x256xf32>
    %c0_18 = arith.constant 0 : index
    %c0_19 = arith.constant 0 : index
    %c0_20 = arith.constant 0 : index
    %21 = vector.load %arg4[%c0_18, %c0_19, %c0_20] : memref<6x256x256xbf16, #tpu.memory_space<vmem>>, vector<1x256x256xbf16>
    %22 = vector.shape_cast %21 : vector<1x256x256xbf16> to vector<256x256xbf16>
    %cst_21 = arith.constant dense<0.000000e+00> : vector<64x256xf32>
    %23 = tpu.matmul %13, %22, %cst_21 {dimension_numbers = #tpu.dot_dimension_numbers<[1], [0], [0], [1], [0, 0, 1, 1], [], []>} : vector<64x256xbf16>, vector<256x256xbf16>, vector<64x256xf32> -> vector<64x256xf32>
    %c0_22 = arith.constant 0 : index
    %c0_23 = arith.constant 0 : index
    %c0_24 = arith.constant 0 : index
    %24 = vector.load %arg5[%c0_22, %c0_23, %c0_24] : memref<6x1x256xf32, #tpu.memory_space<vmem>>, vector<1x1x256xf32>
    %25 = vector.shape_cast %24 : vector<1x1x256xf32> to vector<1x256xf32>
    %26 = vector.broadcast %25 : vector<1x256xf32> to vector<64x256xf32>
    %27 = arith.addf %23, %26 : vector<64x256xf32>
    %cst_25 = arith.constant 0.000000e+00 : f32
    %28 = vector.broadcast %cst_25 : f32 to vector<64x256xf32>
    %29 = arith.maximumf %20, %28 : vector<64x256xf32>
    %30 = arith.truncf %29 : vector<64x256xf32> to vector<64x256xbf16>
    %cst_26 = arith.constant 0.000000e+00 : f32
    %31 = vector.broadcast %cst_26 : f32 to vector<64x256xf32>
    %32 = arith.maximumf %27, %31 : vector<64x256xf32>
    %33 = arith.truncf %32 : vector<64x256xf32> to vector<64x256xbf16>
    %c1 = arith.constant 1 : index
    %c0_27 = arith.constant 0 : index
    %c0_28 = arith.constant 0 : index
    %34 = vector.load %arg4[%c1, %c0_27, %c0_28] : memref<6x256x256xbf16, #tpu.memory_space<vmem>>, vector<1x256x256xbf16>
    %35 = vector.shape_cast %34 : vector<1x256x256xbf16> to vector<256x256xbf16>
    %cst_29 = arith.constant dense<0.000000e+00> : vector<64x256xf32>
    %36 = tpu.matmul %30, %35, %cst_29 {dimension_numbers = #tpu.dot_dimension_numbers<[1], [0], [0], [1], [0, 0, 1, 1], [], []>} : vector<64x256xbf16>, vector<256x256xbf16>, vector<64x256xf32> -> vector<64x256xf32>
    %c1_30 = arith.constant 1 : index
    %c0_31 = arith.constant 0 : index
    %c0_32 = arith.constant 0 : index
    %37 = vector.load %arg5[%c1_30, %c0_31, %c0_32] : memref<6x1x256xf32, #tpu.memory_space<vmem>>, vector<1x1x256xf32>
    %38 = vector.shape_cast %37 : vector<1x1x256xf32> to vector<1x256xf32>
    %39 = vector.broadcast %38 : vector<1x256xf32> to vector<64x256xf32>
    %40 = arith.addf %36, %39 : vector<64x256xf32>
    %c1_33 = arith.constant 1 : index
    %c0_34 = arith.constant 0 : index
    %c0_35 = arith.constant 0 : index
    %41 = vector.load %arg4[%c1_33, %c0_34, %c0_35] : memref<6x256x256xbf16, #tpu.memory_space<vmem>>, vector<1x256x256xbf16>
    %42 = vector.shape_cast %41 : vector<1x256x256xbf16> to vector<256x256xbf16>
    %cst_36 = arith.constant dense<0.000000e+00> : vector<64x256xf32>
    %43 = tpu.matmul %33, %42, %cst_36 {dimension_numbers = #tpu.dot_dimension_numbers<[1], [0], [0], [1], [0, 0, 1, 1], [], []>} : vector<64x256xbf16>, vector<256x256xbf16>, vector<64x256xf32> -> vector<64x256xf32>
    %c1_37 = arith.constant 1 : index
    %c0_38 = arith.constant 0 : index
    %c0_39 = arith.constant 0 : index
    %44 = vector.load %arg5[%c1_37, %c0_38, %c0_39] : memref<6x1x256xf32, #tpu.memory_space<vmem>>, vector<1x1x256xf32>
    %45 = vector.shape_cast %44 : vector<1x1x256xf32> to vector<1x256xf32>
    %46 = vector.broadcast %45 : vector<1x256xf32> to vector<64x256xf32>
    %47 = arith.addf %43, %46 : vector<64x256xf32>
    %48 = arith.extf %12 : vector<64x256xbf16> to vector<64x256xf32>
    %49 = arith.addf %40, %48 : vector<64x256xf32>
    %cst_40 = arith.constant 0.000000e+00 : f32
    %50 = vector.broadcast %cst_40 : f32 to vector<64x256xf32>
    %51 = arith.maximumf %49, %50 : vector<64x256xf32>
    %52 = arith.extf %13 : vector<64x256xbf16> to vector<64x256xf32>
    %53 = arith.addf %47, %52 : vector<64x256xf32>
    %cst_41 = arith.constant 0.000000e+00 : f32
    %54 = vector.broadcast %cst_41 : f32 to vector<64x256xf32>
    %55 = arith.maximumf %53, %54 : vector<64x256xf32>
    %56 = arith.truncf %51 : vector<64x256xf32> to vector<64x256xbf16>
    %57 = arith.truncf %55 : vector<64x256xf32> to vector<64x256xbf16>
    %c2 = arith.constant 2 : index
    %c0_42 = arith.constant 0 : index
    %c0_43 = arith.constant 0 : index
    %58 = vector.load %arg4[%c2, %c0_42, %c0_43] : memref<6x256x256xbf16, #tpu.memory_space<vmem>>, vector<1x256x256xbf16>
    %59 = vector.shape_cast %58 : vector<1x256x256xbf16> to vector<256x256xbf16>
    %cst_44 = arith.constant dense<0.000000e+00> : vector<64x256xf32>
    %60 = tpu.matmul %56, %59, %cst_44 {dimension_numbers = #tpu.dot_dimension_numbers<[1], [0], [0], [1], [0, 0, 1, 1], [], []>} : vector<64x256xbf16>, vector<256x256xbf16>, vector<64x256xf32> -> vector<64x256xf32>
    %c2_45 = arith.constant 2 : index
    %c0_46 = arith.constant 0 : index
    %c0_47 = arith.constant 0 : index
    %61 = vector.load %arg5[%c2_45, %c0_46, %c0_47] : memref<6x1x256xf32, #tpu.memory_space<vmem>>, vector<1x1x256xf32>
    %62 = vector.shape_cast %61 : vector<1x1x256xf32> to vector<1x256xf32>
    %63 = vector.broadcast %62 : vector<1x256xf32> to vector<64x256xf32>
    %64 = arith.addf %60, %63 : vector<64x256xf32>
    %c2_48 = arith.constant 2 : index
    %c0_49 = arith.constant 0 : index
    %c0_50 = arith.constant 0 : index
    %65 = vector.load %arg4[%c2_48, %c0_49, %c0_50] : memref<6x256x256xbf16, #tpu.memory_space<vmem>>, vector<1x256x256xbf16>
    %66 = vector.shape_cast %65 : vector<1x256x256xbf16> to vector<256x256xbf16>
    %cst_51 = arith.constant dense<0.000000e+00> : vector<64x256xf32>
    %67 = tpu.matmul %57, %66, %cst_51 {dimension_numbers = #tpu.dot_dimension_numbers<[1], [0], [0], [1], [0, 0, 1, 1], [], []>} : vector<64x256xbf16>, vector<256x256xbf16>, vector<64x256xf32> -> vector<64x256xf32>
    %c2_52 = arith.constant 2 : index
    %c0_53 = arith.constant 0 : index
    %c0_54 = arith.constant 0 : index
    %68 = vector.load %arg5[%c2_52, %c0_53, %c0_54] : memref<6x1x256xf32, #tpu.memory_space<vmem>>, vector<1x1x256xf32>
    %69 = vector.shape_cast %68 : vector<1x1x256xf32> to vector<1x256xf32>
    %70 = vector.broadcast %69 : vector<1x256xf32> to vector<64x256xf32>
    %71 = arith.addf %67, %70 : vector<64x256xf32>
    %cst_55 = arith.constant 0.000000e+00 : f32
    %72 = vector.broadcast %cst_55 : f32 to vector<64x256xf32>
    %73 = arith.maximumf %64, %72 : vector<64x256xf32>
    %74 = arith.truncf %73 : vector<64x256xf32> to vector<64x256xbf16>
    %cst_56 = arith.constant 0.000000e+00 : f32
    %75 = vector.broadcast %cst_56 : f32 to vector<64x256xf32>
    %76 = arith.maximumf %71, %75 : vector<64x256xf32>
    %77 = arith.truncf %76 : vector<64x256xf32> to vector<64x256xbf16>
    %c3 = arith.constant 3 : index
    %c0_57 = arith.constant 0 : index
    %c0_58 = arith.constant 0 : index
    %78 = vector.load %arg4[%c3, %c0_57, %c0_58] : memref<6x256x256xbf16, #tpu.memory_space<vmem>>, vector<1x256x256xbf16>
    %79 = vector.shape_cast %78 : vector<1x256x256xbf16> to vector<256x256xbf16>
    %cst_59 = arith.constant dense<0.000000e+00> : vector<64x256xf32>
    %80 = tpu.matmul %74, %79, %cst_59 {dimension_numbers = #tpu.dot_dimension_numbers<[1], [0], [0], [1], [0, 0, 1, 1], [], []>} : vector<64x256xbf16>, vector<256x256xbf16>, vector<64x256xf32> -> vector<64x256xf32>
    %c3_60 = arith.constant 3 : index
    %c0_61 = arith.constant 0 : index
    %c0_62 = arith.constant 0 : index
    %81 = vector.load %arg5[%c3_60, %c0_61, %c0_62] : memref<6x1x256xf32, #tpu.memory_space<vmem>>, vector<1x1x256xf32>
    %82 = vector.shape_cast %81 : vector<1x1x256xf32> to vector<1x256xf32>
    %83 = vector.broadcast %82 : vector<1x256xf32> to vector<64x256xf32>
    %84 = arith.addf %80, %83 : vector<64x256xf32>
    %c3_63 = arith.constant 3 : index
    %c0_64 = arith.constant 0 : index
    %c0_65 = arith.constant 0 : index
    %85 = vector.load %arg4[%c3_63, %c0_64, %c0_65] : memref<6x256x256xbf16, #tpu.memory_space<vmem>>, vector<1x256x256xbf16>
    %86 = vector.shape_cast %85 : vector<1x256x256xbf16> to vector<256x256xbf16>
    %cst_66 = arith.constant dense<0.000000e+00> : vector<64x256xf32>
    %87 = tpu.matmul %77, %86, %cst_66 {dimension_numbers = #tpu.dot_dimension_numbers<[1], [0], [0], [1], [0, 0, 1, 1], [], []>} : vector<64x256xbf16>, vector<256x256xbf16>, vector<64x256xf32> -> vector<64x256xf32>
    %c3_67 = arith.constant 3 : index
    %c0_68 = arith.constant 0 : index
    %c0_69 = arith.constant 0 : index
    %88 = vector.load %arg5[%c3_67, %c0_68, %c0_69] : memref<6x1x256xf32, #tpu.memory_space<vmem>>, vector<1x1x256xf32>
    %89 = vector.shape_cast %88 : vector<1x1x256xf32> to vector<1x256xf32>
    %90 = vector.broadcast %89 : vector<1x256xf32> to vector<64x256xf32>
    %91 = arith.addf %87, %90 : vector<64x256xf32>
    %92 = arith.extf %56 : vector<64x256xbf16> to vector<64x256xf32>
    %93 = arith.addf %84, %92 : vector<64x256xf32>
    %cst_70 = arith.constant 0.000000e+00 : f32
    %94 = vector.broadcast %cst_70 : f32 to vector<64x256xf32>
    %95 = arith.maximumf %93, %94 : vector<64x256xf32>
    %96 = arith.extf %57 : vector<64x256xbf16> to vector<64x256xf32>
    %97 = arith.addf %91, %96 : vector<64x256xf32>
    %cst_71 = arith.constant 0.000000e+00 : f32
    %98 = vector.broadcast %cst_71 : f32 to vector<64x256xf32>
    %99 = arith.maximumf %97, %98 : vector<64x256xf32>
    %100 = arith.truncf %95 : vector<64x256xf32> to vector<64x256xbf16>
    %101 = arith.truncf %99 : vector<64x256xf32> to vector<64x256xbf16>
    %c4 = arith.constant 4 : index
    %c0_72 = arith.constant 0 : index
    %c0_73 = arith.constant 0 : index
    %102 = vector.load %arg4[%c4, %c0_72, %c0_73] : memref<6x256x256xbf16, #tpu.memory_space<vmem>>, vector<1x256x256xbf16>
    %103 = vector.shape_cast %102 : vector<1x256x256xbf16> to vector<256x256xbf16>
    %cst_74 = arith.constant dense<0.000000e+00> : vector<64x256xf32>
    %104 = tpu.matmul %100, %103, %cst_74 {dimension_numbers = #tpu.dot_dimension_numbers<[1], [0], [0], [1], [0, 0, 1, 1], [], []>} : vector<64x256xbf16>, vector<256x256xbf16>, vector<64x256xf32> -> vector<64x256xf32>
    %c4_75 = arith.constant 4 : index
    %c0_76 = arith.constant 0 : index
    %c0_77 = arith.constant 0 : index
    %105 = vector.load %arg5[%c4_75, %c0_76, %c0_77] : memref<6x1x256xf32, #tpu.memory_space<vmem>>, vector<1x1x256xf32>
    %106 = vector.shape_cast %105 : vector<1x1x256xf32> to vector<1x256xf32>
    %107 = vector.broadcast %106 : vector<1x256xf32> to vector<64x256xf32>
    %108 = arith.addf %104, %107 : vector<64x256xf32>
    %c4_78 = arith.constant 4 : index
    %c0_79 = arith.constant 0 : index
    %c0_80 = arith.constant 0 : index
    %109 = vector.load %arg4[%c4_78, %c0_79, %c0_80] : memref<6x256x256xbf16, #tpu.memory_space<vmem>>, vector<1x256x256xbf16>
    %110 = vector.shape_cast %109 : vector<1x256x256xbf16> to vector<256x256xbf16>
    %cst_81 = arith.constant dense<0.000000e+00> : vector<64x256xf32>
    %111 = tpu.matmul %101, %110, %cst_81 {dimension_numbers = #tpu.dot_dimension_numbers<[1], [0], [0], [1], [0, 0, 1, 1], [], []>} : vector<64x256xbf16>, vector<256x256xbf16>, vector<64x256xf32> -> vector<64x256xf32>
    %c4_82 = arith.constant 4 : index
    %c0_83 = arith.constant 0 : index
    %c0_84 = arith.constant 0 : index
    %112 = vector.load %arg5[%c4_82, %c0_83, %c0_84] : memref<6x1x256xf32, #tpu.memory_space<vmem>>, vector<1x1x256xf32>
    %113 = vector.shape_cast %112 : vector<1x1x256xf32> to vector<1x256xf32>
    %114 = vector.broadcast %113 : vector<1x256xf32> to vector<64x256xf32>
    %115 = arith.addf %111, %114 : vector<64x256xf32>
    %cst_85 = arith.constant 0.000000e+00 : f32
    %116 = vector.broadcast %cst_85 : f32 to vector<64x256xf32>
    %117 = arith.maximumf %108, %116 : vector<64x256xf32>
    %118 = arith.truncf %117 : vector<64x256xf32> to vector<64x256xbf16>
    %cst_86 = arith.constant 0.000000e+00 : f32
    %119 = vector.broadcast %cst_86 : f32 to vector<64x256xf32>
    %120 = arith.maximumf %115, %119 : vector<64x256xf32>
    %121 = arith.truncf %120 : vector<64x256xf32> to vector<64x256xbf16>
    %c5 = arith.constant 5 : index
    %c0_87 = arith.constant 0 : index
    %c0_88 = arith.constant 0 : index
    %122 = vector.load %arg4[%c5, %c0_87, %c0_88] : memref<6x256x256xbf16, #tpu.memory_space<vmem>>, vector<1x256x256xbf16>
    %123 = vector.shape_cast %122 : vector<1x256x256xbf16> to vector<256x256xbf16>
    %cst_89 = arith.constant dense<0.000000e+00> : vector<64x256xf32>
    %124 = tpu.matmul %118, %123, %cst_89 {dimension_numbers = #tpu.dot_dimension_numbers<[1], [0], [0], [1], [0, 0, 1, 1], [], []>} : vector<64x256xbf16>, vector<256x256xbf16>, vector<64x256xf32> -> vector<64x256xf32>
    %c5_90 = arith.constant 5 : index
    %c0_91 = arith.constant 0 : index
    %c0_92 = arith.constant 0 : index
    %125 = vector.load %arg5[%c5_90, %c0_91, %c0_92] : memref<6x1x256xf32, #tpu.memory_space<vmem>>, vector<1x1x256xf32>
    %126 = vector.shape_cast %125 : vector<1x1x256xf32> to vector<1x256xf32>
    %127 = vector.broadcast %126 : vector<1x256xf32> to vector<64x256xf32>
    %128 = arith.addf %124, %127 : vector<64x256xf32>
    %c5_93 = arith.constant 5 : index
    %c0_94 = arith.constant 0 : index
    %c0_95 = arith.constant 0 : index
    %129 = vector.load %arg4[%c5_93, %c0_94, %c0_95] : memref<6x256x256xbf16, #tpu.memory_space<vmem>>, vector<1x256x256xbf16>
    %130 = vector.shape_cast %129 : vector<1x256x256xbf16> to vector<256x256xbf16>
    %cst_96 = arith.constant dense<0.000000e+00> : vector<64x256xf32>
    %131 = tpu.matmul %121, %130, %cst_96 {dimension_numbers = #tpu.dot_dimension_numbers<[1], [0], [0], [1], [0, 0, 1, 1], [], []>} : vector<64x256xbf16>, vector<256x256xbf16>, vector<64x256xf32> -> vector<64x256xf32>
    %c5_97 = arith.constant 5 : index
    %c0_98 = arith.constant 0 : index
    %c0_99 = arith.constant 0 : index
    %132 = vector.load %arg5[%c5_97, %c0_98, %c0_99] : memref<6x1x256xf32, #tpu.memory_space<vmem>>, vector<1x1x256xf32>
    %133 = vector.shape_cast %132 : vector<1x1x256xf32> to vector<1x256xf32>
    %134 = vector.broadcast %133 : vector<1x256xf32> to vector<64x256xf32>
    %135 = arith.addf %131, %134 : vector<64x256xf32>
    %136 = arith.extf %100 : vector<64x256xbf16> to vector<64x256xf32>
    %137 = arith.addf %128, %136 : vector<64x256xf32>
    %cst_100 = arith.constant 0.000000e+00 : f32
    %138 = vector.broadcast %cst_100 : f32 to vector<64x256xf32>
    %139 = arith.maximumf %137, %138 : vector<64x256xf32>
    %140 = arith.extf %101 : vector<64x256xbf16> to vector<64x256xf32>
    %141 = arith.addf %135, %140 : vector<64x256xf32>
    %cst_101 = arith.constant 0.000000e+00 : f32
    %142 = vector.broadcast %cst_101 : f32 to vector<64x256xf32>
    %143 = arith.maximumf %141, %142 : vector<64x256xf32>
    %144 = arith.truncf %139 : vector<64x256xf32> to vector<64x256xbf16>
    %c0_102 = arith.constant 0 : index
    %c0_103 = arith.constant 0 : index
    %145 = vector.load %arg6[%c0_102, %c0_103] : memref<256x128xbf16, #tpu.memory_space<vmem>>, vector<256x128xbf16>
    %cst_104 = arith.constant dense<0.000000e+00> : vector<64x128xf32>
    %146 = tpu.matmul %144, %145, %cst_104 {dimension_numbers = #tpu.dot_dimension_numbers<[1], [0], [0], [1], [0, 0, 1, 1], [], []>} : vector<64x256xbf16>, vector<256x128xbf16>, vector<64x128xf32> -> vector<64x128xf32>
    %c0_105 = arith.constant 0 : index
    %c0_106 = arith.constant 0 : index
    %147 = vector.load %arg7[%c0_105, %c0_106] : memref<1x128xf32, #tpu.memory_space<vmem>>, vector<1x128xf32>
    %148 = vector.broadcast %147 : vector<1x128xf32> to vector<64x128xf32>
    %149 = arith.addf %146, %148 : vector<64x128xf32>
    %cst_107 = arith.constant 0.000000e+00 : f32
    %150 = vector.broadcast %cst_107 : f32 to vector<64x128xf32>
    %151 = arith.maximumf %149, %150 : vector<64x128xf32>
    %152 = arith.truncf %143 : vector<64x256xf32> to vector<64x256xbf16>
    %c0_108 = arith.constant 0 : index
    %c0_109 = arith.constant 0 : index
    %153 = vector.load %arg6[%c0_108, %c0_109] : memref<256x128xbf16, #tpu.memory_space<vmem>>, vector<256x128xbf16>
    %cst_110 = arith.constant dense<0.000000e+00> : vector<64x128xf32>
    %154 = tpu.matmul %152, %153, %cst_110 {dimension_numbers = #tpu.dot_dimension_numbers<[1], [0], [0], [1], [0, 0, 1, 1], [], []>} : vector<64x256xbf16>, vector<256x128xbf16>, vector<64x128xf32> -> vector<64x128xf32>
    %c0_111 = arith.constant 0 : index
    %c0_112 = arith.constant 0 : index
    %155 = vector.load %arg7[%c0_111, %c0_112] : memref<1x128xf32, #tpu.memory_space<vmem>>, vector<1x128xf32>
    %156 = vector.broadcast %155 : vector<1x128xf32> to vector<64x128xf32>
    %157 = arith.addf %154, %156 : vector<64x128xf32>
    %cst_113 = arith.constant 0.000000e+00 : f32
    %158 = vector.broadcast %cst_113 : f32 to vector<64x128xf32>
    %159 = arith.maximumf %157, %158 : vector<64x128xf32>
    %160 = arith.truncf %151 : vector<64x128xf32> to vector<64x128xbf16>
    %c0_114 = arith.constant 0 : index
    %c0_115 = arith.constant 0 : index
    %161 = vector.load %arg8[%c0_114, %c0_115] : memref<128x8xbf16, #tpu.memory_space<vmem>>, vector<128x8xbf16>
    %cst_116 = arith.constant dense<0.000000e+00> : vector<64x8xf32>
    %162 = tpu.matmul %160, %161, %cst_116 {dimension_numbers = #tpu.dot_dimension_numbers<[1], [0], [0], [1], [0, 0, 1, 1], [], []>} : vector<64x128xbf16>, vector<128x8xbf16>, vector<64x8xf32> -> vector<64x8xf32>
    %c0_117 = arith.constant 0 : index
    %c0_118 = arith.constant 0 : index
    %163 = vector.load %arg9[%c0_117, %c0_118] : memref<1x8xf32, #tpu.memory_space<vmem>>, vector<1x8xf32>
    %164 = vector.broadcast %163 : vector<1x8xf32> to vector<64x8xf32>
    %165 = arith.addf %162, %164 : vector<64x8xf32>
    %166 = tpu.iota {dimensions = array<i32: 1>} : vector<64x8xi32>
    %167 = math.tanh %165 : vector<64x8xf32>
    %cst_119 = arith.constant 1.000000e+00 : f32
    %168 = vector.broadcast %cst_119 : f32 to vector<64x8xf32>
    %169 = arith.addf %167, %168 : vector<64x8xf32>
    %cst_120 = arith.constant 3.500000e+00 : f32
    %170 = vector.broadcast %cst_120 : f32 to vector<64x8xf32>
    %171 = arith.mulf %170, %169 : vector<64x8xf32>
    %cst_121 = arith.constant -5.000000e+00 : f32
    %172 = vector.broadcast %cst_121 : f32 to vector<64x8xf32>
    %173 = arith.addf %172, %171 : vector<64x8xf32>
    %c4_i32 = arith.constant 4 : i32
    %174 = vector.broadcast %c4_i32 : i32 to vector<64x8xi32>
    %175 = arith.cmpi sge, %166, %174 : vector<64x8xi32>
    %176 = arith.select %175, %173, %165 : vector<64x8xi1>, vector<64x8xf32>
    %c0_122 = arith.constant 0 : index
    %c0_123 = arith.constant 0 : index
    %177 = vector.load %arg10[%c0_122, %c0_123] : memref<128x8xf32, #tpu.memory_space<vmem>>, vector<64x8xf32>
    tpu.vector_store %arg10[%c0_122, %c0_123], %176 {strides = array<i32>} : memref<128x8xf32, #tpu.memory_space<vmem>>, vector<64x8xf32>,
    %178 = arith.truncf %159 : vector<64x128xf32> to vector<64x128xbf16>
    %c0_124 = arith.constant 0 : index
    %c0_125 = arith.constant 0 : index
    %179 = vector.load %arg8[%c0_124, %c0_125] : memref<128x8xbf16, #tpu.memory_space<vmem>>, vector<128x8xbf16>
    %cst_126 = arith.constant dense<0.000000e+00> : vector<64x8xf32>
    %180 = tpu.matmul %178, %179, %cst_126 {dimension_numbers = #tpu.dot_dimension_numbers<[1], [0], [0], [1], [0, 0, 1, 1], [], []>} : vector<64x128xbf16>, vector<128x8xbf16>, vector<64x8xf32> -> vector<64x8xf32>
    %c0_127 = arith.constant 0 : index
    %c0_128 = arith.constant 0 : index
    %181 = vector.load %arg9[%c0_127, %c0_128] : memref<1x8xf32, #tpu.memory_space<vmem>>, vector<1x8xf32>
    %182 = vector.broadcast %181 : vector<1x8xf32> to vector<64x8xf32>
    %183 = arith.addf %180, %182 : vector<64x8xf32>
    %184 = tpu.iota {dimensions = array<i32: 1>} : vector<64x8xi32>
    %185 = math.tanh %183 : vector<64x8xf32>
    %cst_129 = arith.constant 1.000000e+00 : f32
    %186 = vector.broadcast %cst_129 : f32 to vector<64x8xf32>
    %187 = arith.addf %185, %186 : vector<64x8xf32>
    %cst_130 = arith.constant 3.500000e+00 : f32
    %188 = vector.broadcast %cst_130 : f32 to vector<64x8xf32>
    %189 = arith.mulf %188, %187 : vector<64x8xf32>
    %cst_131 = arith.constant -5.000000e+00 : f32
    %190 = vector.broadcast %cst_131 : f32 to vector<64x8xf32>
    %191 = arith.addf %190, %189 : vector<64x8xf32>
    %c4_i32_132 = arith.constant 4 : i32
    %192 = vector.broadcast %c4_i32_132 : i32 to vector<64x8xi32>
    %193 = arith.cmpi sge, %184, %192 : vector<64x8xi32>
    %194 = arith.select %193, %191, %183 : vector<64x8xi1>, vector<64x8xf32>
    %c64_133 = arith.constant 64 : index
    %c0_134 = arith.constant 0 : index
    %195 = vector.load %arg10[%c64_133, %c0_134] : memref<128x8xf32, #tpu.memory_space<vmem>>, vector<64x8xf32>
    tpu.vector_store %arg10[%c64_133, %c0_134], %194 {strides = array<i32>} : memref<128x8xf32, #tpu.memory_space<vmem>>, vector<64x8xf32>,
    return
  }
  func.func @transform_0(%arg0: i32) -> (i32, i32) {
    %c0_i32 = arith.constant 0 : i32
    %c0_i32_0 = arith.constant 0 : i32
    return %arg0, %c0_i32 : i32, i32
  }
  func.func @transform_1(%arg0: i32) -> (i32, i32) {
    %c0_i32 = arith.constant 0 : i32
    %c0_i32_0 = arith.constant 0 : i32
    %c0_i32_1 = arith.constant 0 : i32
    return %c0_i32, %c0_i32_0 : i32, i32
  }
  func.func @transform_2(%arg0: i32) -> (i32, i32) {
    %c0_i32 = arith.constant 0 : i32
    %c0_i32_0 = arith.constant 0 : i32
    %c0_i32_1 = arith.constant 0 : i32
    return %c0_i32, %c0_i32_0 : i32, i32
  }
  func.func @transform_3(%arg0: i32) -> (i32, i32, i32) {
    %c0_i32 = arith.constant 0 : i32
    %c0_i32_0 = arith.constant 0 : i32
    %c0_i32_1 = arith.constant 0 : i32
    %c0_i32_2 = arith.constant 0 : i32
    return %c0_i32, %c0_i32_0, %c0_i32_1 : i32, i32, i32
  }
  func.func @transform_4(%arg0: i32) -> (i32, i32, i32) {
    %c0_i32 = arith.constant 0 : i32
    %c0_i32_0 = arith.constant 0 : i32
    %c0_i32_1 = arith.constant 0 : i32
    %c0_i32_2 = arith.constant 0 : i32
    return %c0_i32, %c0_i32_0, %c0_i32_1 : i32, i32, i32
  }
  func.func @transform_5(%arg0: i32) -> (i32, i32) {
    %c0_i32 = arith.constant 0 : i32
    %c0_i32_0 = arith.constant 0 : i32
    %c0_i32_1 = arith.constant 0 : i32
    return %c0_i32, %c0_i32_0 : i32, i32
  }
  func.func @transform_6(%arg0: i32) -> (i32, i32) {
    %c0_i32 = arith.constant 0 : i32
    %c0_i32_0 = arith.constant 0 : i32
    %c0_i32_1 = arith.constant 0 : i32
    return %c0_i32, %c0_i32_0 : i32, i32
  }
  func.func @transform_7(%arg0: i32) -> (i32, i32) {
    %c0_i32 = arith.constant 0 : i32
    %c0_i32_0 = arith.constant 0 : i32
    %c0_i32_1 = arith.constant 0 : i32
    return %c0_i32, %c0_i32_0 : i32, i32
  }
  func.func @transform_8(%arg0: i32) -> (i32, i32) {
    %c0_i32 = arith.constant 0 : i32
    %c0_i32_0 = arith.constant 0 : i32
    %c0_i32_1 = arith.constant 0 : i32
    return %c0_i32, %c0_i32_0 : i32, i32
  }
  func.func @transform_9(%arg0: i32) -> (i32, i32) {
    %c0_i32 = arith.constant 0 : i32
    %c0_i32_0 = arith.constant 0 : i32
    return %arg0, %c0_i32 : i32, i32
  }
}

</mosaic_0001>

<llo_original>
// kernel: ra_actor_forward.1
$region0: #{ra_actor_forward.1}
  #allocation0 [shape = 'u32[]', space=smem, size = 0x4, offset = 0x4, fixed_abs, tag = 'smem constant byte address 0x4 - core index']
  #allocation1 [shape = 'u32[144,128]{1,0:T(1,128)}', space=vmem, size = 0x12000, scoped, tag = 'internal scratch']
  %s0 = inlined_call_operand.vmem [shape: bf16[256,32], index: 0, kind: input, shape index: {}]
  %s1 = inlined_call_operand.vmem [shape: bf16[32,256], index: 1, kind: input, shape index: {}]
  %s2 = inlined_call_operand.vmem [shape: f32[1,256], index: 2, kind: input, shape index: {}]
  %s3 = inlined_call_operand.hbm [shape: bf16[6,256,256], index: 3, kind: input, shape index: {}]
  %s4 = inlined_call_operand.vmem [shape: f32[6,1,256], index: 4, kind: input, shape index: {}]
  %s5 = inlined_call_operand.vmem [shape: bf16[256,128], index: 5, kind: input, shape index: {}]
  %s6 = inlined_call_operand.vmem [shape: f32[1,128], index: 6, kind: input, shape index: {}]
  %s7 = inlined_call_operand.vmem [shape: bf16[128,8], index: 7, kind: input, shape index: {}]
  %s8 = inlined_call_operand.vmem [shape: f32[1,8], index: 8, kind: input, shape index: {}]
  %s9 = inlined_call_operand.vmem [shape: f32[256,8], index: 9, kind: output, shape index: {}]
  %s10 = sld [smem:[#allocation0]]
  $region73: #{ra_actor_forward.1} parent=0
    _
  %s12 = ssub.s32 1, %s10
  %s13 = scalar_select 0, %s12, %s10
  $region1: #{ra_actor_forward.1} parent=0
    #allocation2 [shape = 'u8[786432]{0}', space=vmem, size = 0xc0000, scoped, tag = 'input window, operand 3, single buffered']
    #allocation3 [shape = 's32[2]{0}', space=sflag, size = 0x8, scoped, tag = 'scoped memory for ra_actor_forward.1']
    %14 = vsyncpa [#allocation3], 0
    loop: start=0, step=1, limit=4
    $region2: #{ra_actor_forward.1} parent=1 // loop_pre_header
      _
    $region3: #{ra_actor_forward.1} parent=1 // loop_header
      %s16 = sphi 0, %s20
      %p17 = scmp.ge.s32.totalorder %s16, 4
      %s26 = sphi 0, %s28
      %s29 = sphi 0, %s26
      %s30 = sphi 0, %s29
      %s46 = sphi 0, %s30
      %s50 = sphi 0, %s50
      %s52 = sphi 0, %s50
      %s53 = sphi 0, %s52
      %s67 = sphi 0, %s53
      %s71 = sphi 0, %s71
      %s73 = sphi 0, %s71
      %s74 = sphi 0, %s73
      %s88 = sphi 0, %s74
      %s92 = sphi 0, %s92
      %s94 = sphi 0, %s92
      %s95 = sphi 0, %s94
      %s109 = sphi 0, %s95
      %s113 = sphi 0, %s113
      %s115 = sphi 0, %s113
      %s116 = sphi 0, %s115
      %s130 = sphi 0, %s116
      %s134 = sphi 0, %s134
      %s136 = sphi 0, %s134
      %s137 = sphi 0, %s136
      %s151 = sphi 0, %s137
      %s155 = sphi 0, %s155
      %s157 = sphi 0, %s155
      %s158 = sphi 0, %s157
      %s172 = sphi 0, %s158
      %s176 = sphi 0, %s176
      %s178 = sphi 0, %s176
      %s179 = sphi 0, %s178
      %s193 = sphi 0, %s179
      %s197 = sphi 0, %s197
      %s199 = sphi 0, %s197
      %s200 = sphi 0, %s199
      %s214 = sphi 0, %s200
      %s220 = sphi 0, %s222
      %s223 = sphi 0, %s220
      %s224 = sphi 0, %s223
      %s240 = sphi 0, %s224
    $region4: #{ra_actor_forward.1} parent=1 // loop_header_branch
      %19 = sbr.rel (%p17) target = $region8
    $region5: #{ra_actor_forward.1} parent=1 // loop_body
      %s21 = ssub.s32 %s16, 1
      %s22 = ssub.s32 %s16, 2
      %s23 = sadd.s32 %s16, 1
      %s24 = ssub.s32 %s16, %s23
      %p25 = scmp.eq.s32.totalorder %s24, 0
      %s27 = sadd.s32 %s26, 1
      %s28 = scalar_select %p25, %s26, %s27
      %p31 = pneg %p25
      %p32 = scmp.eq.s32.totalorder %s16, 1
      %p33 = por %p31, %p32
      %p34 = scmp.ne.s32.totalorder %s26, %s29
      %p35 = scmp.eq.s32.totalorder %s16, 0
      %p36 = por %p34, %p35
      %p37 = scmp.ne.s32.totalorder %s26, %s29
      %p38 = scmp.eq.s32.totalorder %s21, 1
      %p39 = por %p37, %p38
      %p40 = scmp.ne.s32.totalorder %s29, %s30
      %p41 = scmp.eq.s32.totalorder %s21, 0
      %p42 = por %p40, %p41
      %p43 = scmp.ne.s32.totalorder %s29, %s30
      %p44 = scmp.eq.s32.totalorder %s22, 1
      %p45 = por %p43, %p44
      %p47 = scmp.ne.s32.totalorder %s30, %s46
      %p48 = scmp.eq.s32.totalorder %s22, 0
      %p49 = por %p47, %p48
      %s51 = sadd.s32 %s50, 1
      %p54 = scmp.eq.s32.totalorder %s16, 1
      %p55 = scmp.ne.s32.totalorder %s50, %s52
      %p56 = scmp.eq.s32.totalorder %s16, 0
      %p57 = por %p55, %p56
      %p58 = scmp.ne.s32.totalorder %s50, %s52
      %p59 = scmp.eq.s32.totalorder %s21, 1
      %p60 = por %p58, %p59
      %p61 = scmp.ne.s32.totalorder %s52, %s53
      %p62 = scmp.eq.s32.totalorder %s21, 0
      %p63 = por %p61, %p62
      %p64 = scmp.ne.s32.totalorder %s52, %s53
      %p65 = scmp.eq.s32.totalorder %s22, 1
      %p66 = por %p64, %p65
      %p68 = scmp.ne.s32.totalorder %s53, %s67
      %p69 = scmp.eq.s32.totalorder %s22, 0
      %p70 = por %p68, %p69
      %s72 = sadd.s32 %s71, 1
      %p75 = scmp.eq.s32.totalorder %s16, 1
      %p76 = scmp.ne.s32.totalorder %s71, %s73
      %p77 = scmp.eq.s32.totalorder %s16, 0
      %p78 = por %p76, %p77
      %p79 = scmp.ne.s32.totalorder %s71, %s73
      %p80 = scmp.eq.s32.totalorder %s21, 1
      %p81 = por %p79, %p80
      %p82 = scmp.ne.s32.totalorder %s73, %s74
      %p83 = scmp.eq.s32.totalorder %s21, 0
      %p84 = por %p82, %p83
      %p85 = scmp.ne.s32.totalorder %s73, %s74
      %p86 = scmp.eq.s32.totalorder %s22, 1
      %p87 = por %p85, %p86
      %p89 = scmp.ne.s32.totalorder %s74, %s88
      %p90 = scmp.eq.s32.totalorder %s22, 0
      %p91 = por %p89, %p90
      %s93 = sadd.s32 %s92, 1
      %p96 = scmp.eq.s32.totalorder %s16, 1
      %p97 = scmp.ne.s32.totalorder %s92, %s94
      %p98 = scmp.eq.s32.totalorder %s16, 0
      %p99 = por %p97, %p98
      %p100 = scmp.ne.s32.totalorder %s92, %s94
      %p101 = scmp.eq.s32.totalorder %s21, 1
      %p102 = por %p100, %p101
      %p103 = scmp.ne.s32.totalorder %s94, %s95
      %p104 = scmp.eq.s32.totalorder %s21, 0
      %p105 = por %p103, %p104
      %p106 = scmp.ne.s32.totalorder %s94, %s95
      %p107 = scmp.eq.s32.totalorder %s22, 1
      %p108 = por %p106, %p107
      %p110 = scmp.ne.s32.totalorder %s95, %s109
      %p111 = scmp.eq.s32.totalorder %s22, 0
      %p112 = por %p110, %p111
      %s114 = sadd.s32 %s113, 1
      %p117 = scmp.eq.s32.totalorder %s16, 1
      %p118 = scmp.ne.s32.totalorder %s113, %s115
      %p119 = scmp.eq.s32.totalorder %s16, 0
      %p120 = por %p118, %p119
      %p121 = scmp.ne.s32.totalorder %s113, %s115
      %p122 = scmp.eq.s32.totalorder %s21, 1
      %p123 = por %p121, %p122
      %p124 = scmp.ne.s32.totalorder %s115, %s116
      %p125 = scmp.eq.s32.totalorder %s21, 0
      %p126 = por %p124, %p125
      %p127 = scmp.ne.s32.totalorder %s115, %s116
      %p128 = scmp.eq.s32.totalorder %s22, 1
      %p129 = por %p127, %p128
      %p131 = scmp.ne.s32.totalorder %s116, %s130
      %p132 = scmp.eq.s32.totalorder %s22, 0
      %p133 = por %p131, %p132
      %s135 = sadd.s32 %s134, 1
      %p138 = scmp.eq.s32.totalorder %s16, 1
      %p139 = scmp.ne.s32.totalorder %s134, %s136
      %p140 = scmp.eq.s32.totalorder %s16, 0
      %p141 = por %p139, %p140
      %p142 = scmp.ne.s32.totalorder %s134, %s136
      %p143 = scmp.eq.s32.totalorder %s21, 1
      %p144 = por %p142, %p143
      %p145 = scmp.ne.s32.totalorder %s136, %s137
      %p146 = scmp.eq.s32.totalorder %s21, 0
      %p147 = por %p145, %p146
      %p148 = scmp.ne.s32.totalorder %s136, %s137
      %p149 = scmp.eq.s32.totalorder %s22, 1
      %p150 = por %p148, %p149
      %p152 = scmp.ne.s32.totalorder %s137, %s151
      %p153 = scmp.eq.s32.totalorder %s22, 0
      %p154 = por %p152, %p153
      %s156 = sadd.s32 %s155, 1
      %p159 = scmp.eq.s32.totalorder %s16, 1
      %p160 = scmp.ne.s32.totalorder %s155, %s157
      %p161 = scmp.eq.s32.totalorder %s16, 0
      %p162 = por %p160, %p161
      %p163 = scmp.ne.s32.totalorder %s155, %s157
      %p164 = scmp.eq.s32.totalorder %s21, 1
      %p165 = por %p163, %p164
      %p166 = scmp.ne.s32.totalorder %s157, %s158
      %p167 = scmp.eq.s32.totalorder %s21, 0
      %p168 = por %p166, %p167
      %p169 = scmp.ne.s32.totalorder %s157, %s158
      %p170 = scmp.eq.s32.totalorder %s22, 1
      %p171 = por %p169, %p170
      %p173 = scmp.ne.s32.totalorder %s158, %s172
      %p174 = scmp.eq.s32.totalorder %s22, 0
      %p175 = por %p173, %p174
      %s177 = sadd.s32 %s176, 1
      %p180 = scmp.eq.s32.totalorder %s16, 1
      %p181 = scmp.ne.s32.totalorder %s176, %s178
      %p182 = scmp.eq.s32.totalorder %s16, 0
      %p183 = por %p181, %p182
      %p184 = scmp.ne.s32.totalorder %s176, %s178
      %p185 = scmp.eq.s32.totalorder %s21, 1
      %p186 = por %p184, %p185
      %p187 = scmp.ne.s32.totalorder %s178, %s179
      %p188 = scmp.eq.s32.totalorder %s21, 0
      %p189 = por %p187, %p188
      %p190 = scmp.ne.s32.totalorder %s178, %s179
      %p191 = scmp.eq.s32.totalorder %s22, 1
      %p192 = por %p190, %p191
      %p194 = scmp.ne.s32.totalorder %s179, %s193
      %p195 = scmp.eq.s32.totalorder %s22, 0
      %p196 = por %p194, %p195
      %s198 = sadd.s32 %s197, 1
      %p201 = scmp.eq.s32.totalorder %s16, 1
      %p202 = scmp.ne.s32.totalorder %s197, %s199
      %p203 = scmp.eq.s32.totalorder %s16, 0
      %p204 = por %p202, %p203
      %p205 = scmp.ne.s32.totalorder %s197, %s199
      %p206 = scmp.eq.s32.totalorder %s21, 1
      %p207 = por %p205, %p206
      %p208 = scmp.ne.s32.totalorder %s199, %s200
      %p209 = scmp.eq.s32.totalorder %s21, 0
      %p210 = por %p208, %p209
      %p211 = scmp.ne.s32.totalorder %s199, %s200
      %p212 = scmp.eq.s32.totalorder %s22, 1
      %p213 = por %p211, %p212
      %p215 = scmp.ne.s32.totalorder %s200, %s214
      %p216 = scmp.eq.s32.totalorder %s22, 0
      %p217 = por %p215, %p216
      %s218 = ssub.s32 %s16, %s23
      %p219 = scmp.eq.s32.totalorder %s218, 0
      %s221 = sadd.s32 %s220, 1
      %s222 = scalar_select %p219, %s220, %s221
      %p225 = pneg %p219
      %p226 = scmp.eq.s32.totalorder %s16, 1
      %p227 = por %p225, %p226
      %p228 = scmp.ne.s32.totalorder %s220, %s223
      %p229 = scmp.eq.s32.totalorder %s16, 0
      %p230 = por %p228, %p229
      %p231 = scmp.ne.s32.totalorder %s220, %s223
      %p232 = scmp.eq.s32.totalorder %s21, 1
      %p233 = por %p231, %p232
      %p234 = scmp.ne.s32.totalorder %s223, %s224
      %p235 = scmp.eq.s32.totalorder %s21, 0
      %p236 = por %p234, %p235
      %p237 = scmp.ne.s32.totalorder %s223, %s224
      %p238 = scmp.eq.s32.totalorder %s22, 1
      %p239 = por %p237, %p238
      %p241 = scmp.ne.s32.totalorder %s224, %s240
      %p242 = scmp.eq.s32.totalorder %s22, 0
      %p243 = por %p241, %p242
      %p244 = scmp.le.s32.totalorder 1, %s16
      %p245 = scmp.lt.s32.totalorder %s16, 3
      %p246 = pnand %p244, %p245
      %p247 = pneg %p246
      // Predicated region
      $region9: #{ra_actor_forward.1} parent=5 // pred_check
        _
      $region10: #{ra_actor_forward.1} parent=5 // pred_check_branch
        %249 = sbr.rel (%p246) target = $region12
      $region11: #{ra_actor_forward.1} parent=5 // pred_region
        %s250 = ssub.s32 %s16, 1
        // Predicated region
        $region13: #{ra_actor_forward.1} parent=11 // pred_check
          %p251 = pneg %p63
        $region14: #{ra_actor_forward.1} parent=11 // pred_check_branch
          %253 = sbr.rel (%p251) target = $region16
        $region15: #{ra_actor_forward.1} parent=11 // pred_region
          _
        $region16: #{ra_actor_forward.1} parent=11 // pred_fallthru
          _
        // Predicated region
        $region17: #{ra_actor_forward.1} parent=11 // pred_check
          %p254 = pneg %p84
        $region18: #{ra_actor_forward.1} parent=11 // pred_check_branch
          %256 = sbr.rel (%p254) target = $region20
        $region19: #{ra_actor_forward.1} parent=11 // pred_region
          _
        $region20: #{ra_actor_forward.1} parent=11 // pred_fallthru
          _
        // Predicated region
        $region21: #{ra_actor_forward.1} parent=11 // pred_check
          %p257 = pneg %p105
        $region22: #{ra_actor_forward.1} parent=11 // pred_check_branch
          %259 = sbr.rel (%p257) target = $region24
        $region23: #{ra_actor_forward.1} parent=11 // pred_region
          %s261 = ssub.s32 24576, 24576
          %262 = vsyncadd [#allocation3], %s261
          %s263 = sshll.u32 [#allocation2], 4
          %s264 = int_to_ptr.vmem [resolvable:$true] %s263
          %269 = dma.hbm_to_vmem [thread:$0]  %s3, 24576, %s264, [#allocation3], 128, 128, 8
        $region24: #{ra_actor_forward.1} parent=11 // pred_fallthru
          _
        // Predicated region
        $region25: #{ra_actor_forward.1} parent=11 // pred_check
          %p270 = pneg %p126
        $region26: #{ra_actor_forward.1} parent=11 // pred_check_branch
          %272 = sbr.rel (%p270) target = $region28
        $region27: #{ra_actor_forward.1} parent=11 // pred_region
          _
        $region28: #{ra_actor_forward.1} parent=11 // pred_fallthru
          _
        // Predicated region
        $region29: #{ra_actor_forward.1} parent=11 // pred_check
          %p273 = pneg %p147
        $region30: #{ra_actor_forward.1} parent=11 // pred_check_branch
          %275 = sbr.rel (%p273) target = $region32
        $region31: #{ra_actor_forward.1} parent=11 // pred_region
          _
        $region32: #{ra_actor_forward.1} parent=11 // pred_fallthru
          _
        // Predicated region
        $region33: #{ra_actor_forward.1} parent=11 // pred_check
          %p276 = pneg %p168
        $region34: #{ra_actor_forward.1} parent=11 // pred_check_branch
          %278 = sbr.rel (%p276) target = $region36
        $region35: #{ra_actor_forward.1} parent=11 // pred_region
          _
        $region36: #{ra_actor_forward.1} parent=11 // pred_fallthru
          _
        // Predicated region
        $region37: #{ra_actor_forward.1} parent=11 // pred_check
          %p279 = pneg %p189
        $region38: #{ra_actor_forward.1} parent=11 // pred_check_branch
          %281 = sbr.rel (%p279) target = $region40
        $region39: #{ra_actor_forward.1} parent=11 // pred_region
          _
        $region40: #{ra_actor_forward.1} parent=11 // pred_fallthru
          _
        // Predicated region
        $region41: #{ra_actor_forward.1} parent=11 // pred_check
          %p282 = pneg %p210
        $region42: #{ra_actor_forward.1} parent=11 // pred_check_branch
          %284 = sbr.rel (%p282) target = $region44
        $region43: #{ra_actor_forward.1} parent=11 // pred_region
          _
        $region44: #{ra_actor_forward.1} parent=11 // pred_fallthru
          _
      $region12: #{ra_actor_forward.1} parent=5 // pred_fallthru
        _
      %p285 = scmp.lt.s32.totalorder %s16, 2
      // Predicated region
      $region45: #{ra_actor_forward.1} parent=5 // pred_check
        %p286 = pneg %p285
      $region46: #{ra_actor_forward.1} parent=5 // pred_check_branch
        %288 = sbr.rel (%p286) target = $region48
      $region47: #{ra_actor_forward.1} parent=5 // pred_region
        // Predicated region
        $region49: #{ra_actor_forward.1} parent=47 // pred_check
          %p289 = pneg %p36
        $region50: #{ra_actor_forward.1} parent=47 // pred_check_branch
          %291 = sbr.rel (%p289) target = $region52
        $region51: #{ra_actor_forward.1} parent=47 // pred_region
          %s292 = smul.u32 16, %s16
          %p293 = scmp.lt.s32.totalorder %s292, 31
          %s294 = scalar_select %p293, %s292, 31
          %s295 = smul.addr %s294, 4
          %s296 = scalar_lea.vmem %s0, %s295
          %s297 = smul.u32 16, %s16
        $region52: #{ra_actor_forward.1} parent=47 // pred_fallthru
          _
      $region48: #{ra_actor_forward.1} parent=5 // pred_fallthru
        _
      %p298 = scmp.le.s32.totalorder 1, %s16
      %p299 = scmp.lt.s32.totalorder %s16, 3
      %p300 = pnand %p298, %p299
      %p301 = pneg %p300
      // Predicated region
      $region53: #{ra_actor_forward.1} parent=5 // pred_check
        _
      $region54: #{ra_actor_forward.1} parent=5 // pred_check_branch
        %303 = sbr.rel (%p300) target = $region56
      $region55: #{ra_actor_forward.1} parent=5 // pred_region
        %s304 = ssub.s32 %s16, 1
        // Predicated region
        $region57: #{ra_actor_forward.1} parent=55 // pred_check
          %p305 = pneg %p105
        $region58: #{ra_actor_forward.1} parent=55 // pred_check_branch
          %307 = sbr.rel (%p305) target = $region60
        $region59: #{ra_actor_forward.1} parent=55 // pred_region
          %308 = dma.done [#allocation3], 24576
        $region60: #{ra_actor_forward.1} parent=55 // pred_fallthru
          _
        %s309 = smul.u32 16, %s21
        %p310 = scmp.lt.s32.totalorder %s309, 31
        %s311 = scalar_select %p310, %s309, 31
        %s312 = smul.addr %s311, 4
        %s313 = scalar_lea.vmem %s0, %s312
        %p314 = pneg %p42
        %p315 = pneg %p39
        %p316 = pneg %p63
        %p317 = pneg %p60
        %p318 = pneg %p84
        %p319 = pneg %p81
        %p320 = pneg %p105
        %p321 = pneg %p102
        %p322 = pneg %p126
        %p323 = pneg %p123
        %p324 = pneg %p147
        %p325 = pneg %p144
        %p326 = pneg %p168
        %p327 = pneg %p165
        %p328 = pneg %p189
        %p329 = pneg %p186
        %p330 = pneg %p210
        %p331 = pneg %p207
        %p332 = pneg %p236
        %p333 = pneg %p233
        %s334 = smul.u32 16, %s21
        %p335 = scmp.lt.s32.totalorder %s334, 31
        %s336 = scalar_select %p335, %s334, 31
        %s337 = smul.addr %s336, 8
        %s338 = scalar_lea.vmem %s9, %s337
        %s339 = smul.u32 16, %s21
        %p340 = scmp.lt.s32.totalorder %s339, 31
        %s341 = scalar_select %p340, %s339, 31
        %s342 = smul.addr %s341, 4
        %s343 = scalar_lea.vmem %s0, %s342
        %s344 = smul.u32 16, %s21
        %s345 = smul.u32 16, %s21
        %p346 = scmp.lt.s32.totalorder %s345, 31
        %s347 = scalar_select %p346, %s345, 31
        %s348 = smul.addr %s347, 8
        %s349 = scalar_lea.vmem %s9, %s348
        %s350 = smul.u32 16, %s21
        %v352 = vld [vmem:[%s343] sm:$0xf]
        %v353 = vld [vmem:[%s343 + $0x4] sm:$0xf]
        %v354 = vld [vmem:[%s343 + $0x8] sm:$0xf]
        %v355 = vld [vmem:[%s343 + $0xc] sm:$0xf]
        %v356 = vld [vmem:[%s343 + $0x10] sm:$0xf]
        %v357 = vld [vmem:[%s343 + $0x14] sm:$0xf]
        %v358 = vld [vmem:[%s343 + $0x18] sm:$0xf]
        %v359 = vld [vmem:[%s343 + $0x1c] sm:$0xf]
        %v360 = vld [vmem:[%s343 + $0x20] sm:$0xf]
        %v361 = vld [vmem:[%s343 + $0x24] sm:$0xf]
        %v362 = vld [vmem:[%s343 + $0x28] sm:$0xf]
        %v363 = vld [vmem:[%s343 + $0x2c] sm:$0xf]
        %v364 = vld [vmem:[%s343 + $0x30] sm:$0xf]
        %v365 = vld [vmem:[%s343 + $0x34] sm:$0xf]
        %v366 = vld [vmem:[%s343 + $0x38] sm:$0xf]
        %v367 = vld [vmem:[%s343 + $0x3c] sm:$0xf]
        %v368 = vld [vmem:[%s1] sm:$0xff]
        %v369 = vld [vmem:[%s1 + $0x8] sm:$0xff]
        %v370 = vld [vmem:[%s1 + $0x10] sm:$0xff]
        %v371 = vld [vmem:[%s1 + $0x18] sm:$0xff]
        %v372 = vld [vmem:[%s2] sm:$0x3]
        %v374 = vlaneseq
        %v375 = vshrl.u32 %v374, 7
        %v376 = vsub.s32 0, %v375
        %v377 = vrot.slane %v372, %v376
        %v378 = vlaneseq
        %v379 = vshrl.u32 %v378, 7
        %v380 = vsub.s32 1, %v379
        %v381 = vrot.slane %v372, %v380
        %v392 = vunpack.c.l.b16 %v352
        %v393 = vunpack.c.l.b16 %v353
        %v394 = vunpack.c.l.b16 %v354
        %v395 = vunpack.c.l.b16 %v355
        %v396 = vunpack.c.l.b16 %v356
        %v397 = vunpack.c.l.b16 %v357
        %v398 = vunpack.c.l.b16 %v358
        %v399 = vunpack.c.l.b16 %v359
        %v400 = vpack.c.b16 %v393, %v392
        %v401 = vpack.c.b16 %v395, %v394
        %v402 = vpack.c.b16 %v397, %v396
        %v403 = vpack.c.b16 %v399, %v398
        %v408 = vunpack.c.l.b16 %v368
        %v409 = vunpack.c.h.b16 %v368
        %v410 = vunpack.c.l.b16 %v369
        %v411 = vunpack.c.h.b16 %v369
        %v412 = vunpack.c.l.b16 %v370
        %v413 = vunpack.c.h.b16 %v370
        %v414 = vunpack.c.l.b16 %v371
        %v415 = vunpack.c.h.b16 %v371
        %v416 = vpack.c.b16 %v410, %v408
        %v417 = vpack.c.b16 %v411, %v409
        %v418 = vpack.c.b16 %v414, %v412
        %v419 = vpack.c.b16 %v415, %v413
        %vm424 = vcmask 261120
        %v426 = vsel %vm424, %v400, 0
        %v429 = vsel %vm424, %v401, 0
        %v432 = vsel %vm424, %v402, 0
        %v435 = vsel %vm424, %v403, 0
        %437 = vmatprep.subr.bf16.mxu0 0
        %438 = vmatpush1.bf16.msra.mxu0 0
        %439 = vmatprep.subr.bf16.mxu0 0
        %440 = vmatpush1.bf16.msra.mxu0 0
        %441 = vmatprep.subr.bf16.mxu0 0
        %442 = vmatpush1.bf16.msra.mxu0 0
        %443 = vmatprep.subr.bf16.mxu0 0
        %444 = vmatpush1.bf16.msra.mxu0 0
        %445 = vmatprep.subr.bf16.mxu0 0
        %446 = vmatpush1.bf16.msra.mxu0 0
        %447 = vmatprep.subr.bf16.mxu0 0
        %448 = vmatpush1.bf16.msra.mxu0 0
        %449 = vmatprep.subr.bf16.mxu0 %v419
        %450 = vmatpush1.bf16.msra.mxu0 %v418
        %451 = vmatprep.subr.bf16.mxu0 %v417
        %452 = vmatpush1.bf16.msra.mxu0 %v416
        %453 = vmatprep.subr.bf16.mxu0 0
        %454 = vmatpush2.bf16.msra.mxu0 0
        %455 = vmatprep.subr.bf16.mxu0 0
        %456 = vmatpush2.bf16.msra.mxu0 0
        %457 = vmatprep.subr.bf16.mxu0 0
        %458 = vmatpush2.bf16.msra.mxu0 0
        %459 = vmatprep.subr.bf16.mxu0 0
        %460 = vmatpush2.bf16.msra.mxu0 0
        %461 = vmatprep.subr.bf16.mxu0 0
        %462 = vmatpush2.bf16.msra.mxu0 0
        %463 = vmatprep.subr.bf16.mxu0 0
        %464 = vmatpush2.bf16.msra.mxu0 0
        %465 = vmatprep.subr.bf16.mxu0 0
        %466 = vmatpush2.bf16.msra.mxu0 0
        %467 = vmatprep.subr.bf16.mxu0 0
        %468 = vmatpush2.bf16.msra.mxu0 0
        %469 = vmatprep.mubr.bf16.mxu0 0
        %470 = vmatmul.mubr.bf16.gmra.mxu0 %v426
        %v471 = vpop.f32.mrf.mxu0
        %v472 = vadd.f32 %v377, %v471
        %v473 = vpop.f32.mrf.mxu0
        %v474 = vadd.f32 %v381, %v473
        %v475 = vpop.f32.mrf.mxu0
        %v476 = vadd.f32 %v377, %v475
        %v477 = vpop.f32.mrf.mxu0
        %v478 = vadd.f32 %v381, %v477
        %479 = vmatprep.mubr.bf16.mxu0 0
        %480 = vmatmul.mubr.bf16.gmra.mxu0 %v429
        %v481 = vpop.f32.mrf.mxu0
        %v482 = vadd.f32 %v377, %v481
        %v483 = vpop.f32.mrf.mxu0
        %v484 = vadd.f32 %v381, %v483
        %v485 = vpop.f32.mrf.mxu0
        %v486 = vadd.f32 %v377, %v485
        %v487 = vpop.f32.mrf.mxu0
        %v488 = vadd.f32 %v381, %v487
        %489 = vmatprep.mubr.bf16.mxu0 0
        %490 = vmatmul.mubr.bf16.gmra.mxu0 %v432
        %v491 = vpop.f32.mrf.mxu0
        %v492 = vadd.f32 %v377, %v491
        %v493 = vpop.f32.mrf.mxu0
        %v494 = vadd.f32 %v381, %v493
        %v495 = vpop.f32.mrf.mxu0
        %v496 = vadd.f32 %v377, %v495
        %v497 = vpop.f32.mrf.mxu0
        %v498 = vadd.f32 %v381, %v497
        %499 = vmatprep.mubr.bf16.mxu0 0
        %500 = vmatmul.mubr.bf16.gmra.mxu0 %v435
        %v501 = vpop.f32.mrf.mxu0
        %v502 = vadd.f32 %v377, %v501
        %v503 = vpop.f32.mrf.mxu0
        %v504 = vadd.f32 %v381, %v503
        %v505 = vpop.f32.mrf.mxu0
        %v506 = vadd.f32 %v377, %v505
        %v507 = vpop.f32.mrf.mxu0
        %v508 = vadd.f32 %v381, %v507
        %509 = vdwg.mxu0
        %v518 = vunpack.c.l.b16 %v360
        %v519 = vunpack.c.l.b16 %v361
        %v520 = vunpack.c.l.b16 %v362
        %v521 = vunpack.c.l.b16 %v363
        %v522 = vunpack.c.l.b16 %v364
        %v523 = vunpack.c.l.b16 %v365
        %v524 = vunpack.c.l.b16 %v366
        %v525 = vunpack.c.l.b16 %v367
        %v526 = vpack.c.b16 %v519, %v518
        %v527 = vpack.c.b16 %v521, %v520
        %v528 = vpack.c.b16 %v523, %v522
        %v529 = vpack.c.b16 %v525, %v524
        %v531 = vsel %vm424, %v526, 0
        %v534 = vsel %vm424, %v527, 0
        %v537 = vsel %vm424, %v528, 0
        %v540 = vsel %vm424, %v529, 0
        %542 = vmatprep.subr.bf16.mxu0 0
        %543 = vmatpush1.bf16.msra.mxu0 0
        %544 = vmatprep.subr.bf16.mxu0 0
        %545 = vmatpush1.bf16.msra.mxu0 0
        %546 = vmatprep.subr.bf16.mxu0 0
        %547 = vmatpush1.bf16.msra.mxu0 0
        %548 = vmatprep.subr.bf16.mxu0 0
        %549 = vmatpush1.bf16.msra.mxu0 0
        %550 = vmatprep.subr.bf16.mxu0 0
        %551 = vmatpush1.bf16.msra.mxu0 0
        %552 = vmatprep.subr.bf16.mxu0 0
        %553 = vmatpush1.bf16.msra.mxu0 0
        %554 = vmatprep.subr.bf16.mxu0 %v419
        %555 = vmatpush1.bf16.msra.mxu0 %v418
        %556 = vmatprep.subr.bf16.mxu0 %v417
        %557 = vmatpush1.bf16.msra.mxu0 %v416
        %558 = vmatprep.subr.bf16.mxu0 0
        %559 = vmatpush2.bf16.msra.mxu0 0
        %560 = vmatprep.subr.bf16.mxu0 0
        %561 = vmatpush2.bf16.msra.mxu0 0
        %562 = vmatprep.subr.bf16.mxu0 0
        %563 = vmatpush2.bf16.msra.mxu0 0
        %564 = vmatprep.subr.bf16.mxu0 0
        %565 = vmatpush2.bf16.msra.mxu0 0
        %566 = vmatprep.subr.bf16.mxu0 0
        %567 = vmatpush2.bf16.msra.mxu0 0
        %568 = vmatprep.subr.bf16.mxu0 0
        %569 = vmatpush2.bf16.msra.mxu0 0
        %570 = vmatprep.subr.bf16.mxu0 0
        %571 = vmatpush2.bf16.msra.mxu0 0
        %572 = vmatprep.subr.bf16.mxu0 0
        %573 = vmatpush2.bf16.msra.mxu0 0
        %574 = vmatprep.mubr.bf16.mxu0 0
        %575 = vmatmul.mubr.bf16.gmra.mxu0 %v531
        %v576 = vpop.f32.mrf.mxu0
        %v577 = vadd.f32 %v377, %v576
        %v578 = vpop.f32.mrf.mxu0
        %v579 = vadd.f32 %v381, %v578
        %v580 = vpop.f32.mrf.mxu0
        %v581 = vadd.f32 %v377, %v580
        %v582 = vpop.f32.mrf.mxu0
        %v583 = vadd.f32 %v381, %v582
        %584 = vmatprep.mubr.bf16.mxu0 0
        %585 = vmatmul.mubr.bf16.gmra.mxu0 %v534
        %v586 = vpop.f32.mrf.mxu0
        %v587 = vadd.f32 %v377, %v586
        %v588 = vpop.f32.mrf.mxu0
        %v589 = vadd.f32 %v381, %v588
        %v590 = vpop.f32.mrf.mxu0
        %v591 = vadd.f32 %v377, %v590
        %v592 = vpop.f32.mrf.mxu0
        %v593 = vadd.f32 %v381, %v592
        %594 = vmatprep.mubr.bf16.mxu0 0
        %595 = vmatmul.mubr.bf16.gmra.mxu0 %v537
        %v596 = vpop.f32.mrf.mxu0
        %v597 = vadd.f32 %v377, %v596
        %v598 = vpop.f32.mrf.mxu0
        %v599 = vadd.f32 %v381, %v598
        %v600 = vpop.f32.mrf.mxu0
        %v601 = vadd.f32 %v377, %v600
        %v602 = vpop.f32.mrf.mxu0
        %v603 = vadd.f32 %v381, %v602
        %604 = vmatprep.mubr.bf16.mxu0 0
        %605 = vmatmul.mubr.bf16.gmra.mxu0 %v540
        %v606 = vpop.f32.mrf.mxu0
        %v607 = vadd.f32 %v377, %v606
        %v608 = vpop.f32.mrf.mxu0
        %v609 = vadd.f32 %v381, %v608
        %v610 = vpop.f32.mrf.mxu0
        %v611 = vadd.f32 %v377, %v610
        %v612 = vpop.f32.mrf.mxu0
        %v613 = vadd.f32 %v381, %v612
        %614 = vdwg.mxu0
        %v615 = vpack.c.bf16 %v476, %v472
        %v616 = vpack.c.bf16 %v478, %v474
        %v617 = vpack.c.bf16 %v486, %v482
        %v618 = vpack.c.bf16 %v488, %v484
        %v619 = vpack.c.bf16 %v496, %v492
        %v620 = vpack.c.bf16 %v498, %v494
        %v621 = vpack.c.bf16 %v506, %v502
        %v622 = vpack.c.bf16 %v508, %v504
        %v623 = vpack.c.bf16 %v581, %v577
        %v624 = vpack.c.bf16 %v583, %v579
        %v625 = vpack.c.bf16 %v591, %v587
        %v626 = vpack.c.bf16 %v593, %v589
        %v627 = vpack.c.bf16 %v601, %v597
        %v628 = vpack.c.bf16 %v603, %v599
        %v629 = vpack.c.bf16 %v611, %v607
        %v630 = vpack.c.bf16 %v613, %v609
        %v631 = vld [vmem:[#allocation2] sm:$0xff]
        %v632 = vld [vmem:[#allocation2 + $0x8] sm:$0xff]
        %v633 = vld [vmem:[#allocation2 + $0x10] sm:$0xff]
        %v634 = vld [vmem:[#allocation2 + $0x18] sm:$0xff]
        %v635 = vld [vmem:[#allocation2 + $0x20] sm:$0xff]
        %v636 = vld [vmem:[#allocation2 + $0x28] sm:$0xff]
        %v637 = vld [vmem:[#allocation2 + $0x30] sm:$0xff]
        %v638 = vld [vmem:[#allocation2 + $0x38] sm:$0xff]
        %v639 = vld [vmem:[#allocation2 + $0x40] sm:$0xff]
        %v640 = vld [vmem:[#allocation2 + $0x48] sm:$0xff]
        %v641 = vld [vmem:[#allocation2 + $0x50] sm:$0xff]
        %v642 = vld [vmem:[#allocation2 + $0x58] sm:$0xff]
        %v643 = vld [vmem:[#allocation2 + $0x60] sm:$0xff]
        %v644 = vld [vmem:[#allocation2 + $0x68] sm:$0xff]
        %v645 = vld [vmem:[#allocation2 + $0x70] sm:$0xff]
        %v646 = vld [vmem:[#allocation2 + $0x78] sm:$0xff]
        %v647 = vld [vmem:[#allocation2 + $0x80] sm:$0xff]
        %v648 = vld [vmem:[#allocation2 + $0x88] sm:$0xff]
        %v649 = vld [vmem:[#allocation2 + $0x90] sm:$0xff]
        %v650 = vld [vmem:[#allocation2 + $0x98] sm:$0xff]
        %v651 = vld [vmem:[#allocation2 + $0xa0] sm:$0xff]
        %v652 = vld [vmem:[#allocation2 + $0xa8] sm:$0xff]
        %v653 = vld [vmem:[#allocation2 + $0xb0] sm:$0xff]
        %v654 = vld [vmem:[#allocation2 + $0xb8] sm:$0xff]
        %v655 = vld [vmem:[#allocation2 + $0xc0] sm:$0xff]
        %v656 = vld [vmem:[#allocation2 + $0xc8] sm:$0xff]
        %v657 = vld [vmem:[#allocation2 + $0xd0] sm:$0xff]
        %v658 = vld [vmem:[#allocation2 + $0xd8] sm:$0xff]
        %v659 = vld [vmem:[#allocation2 + $0xe0] sm:$0xff]
        %v660 = vld [vmem:[#allocation2 + $0xe8] sm:$0xff]
        %v661 = vld [vmem:[#allocation2 + $0xf0] sm:$0xff]
        %v662 = vld [vmem:[#allocation2 + $0xf8] sm:$0xff]
        %v663 = vld [vmem:[%s4] sm:$0x3]
        %v665 = vlaneseq
        %v666 = vshrl.u32 %v665, 7
        %v667 = vsub.s32 0, %v666
        %v668 = vrot.slane %v663, %v667
        %v669 = vlaneseq
        %v670 = vshrl.u32 %v669, 7
        %v671 = vsub.s32 1, %v670
        %v672 = vrot.slane %v663, %v671
        %v707 = vunpack.c.l.b16 %v631
        %v708 = vunpack.c.h.b16 %v631
        %v709 = vunpack.c.l.b16 %v632
        %v710 = vunpack.c.h.b16 %v632
        %v711 = vunpack.c.l.b16 %v633
        %v712 = vunpack.c.h.b16 %v633
        %v713 = vunpack.c.l.b16 %v634
        %v714 = vunpack.c.h.b16 %v634
        %v715 = vunpack.c.l.b16 %v635
        %v716 = vunpack.c.h.b16 %v635
        %v717 = vunpack.c.l.b16 %v636
        %v718 = vunpack.c.h.b16 %v636
        %v719 = vunpack.c.l.b16 %v637
        %v720 = vunpack.c.h.b16 %v637
        %v721 = vunpack.c.l.b16 %v638
        %v722 = vunpack.c.h.b16 %v638
        %v723 = vunpack.c.l.b16 %v639
        %v724 = vunpack.c.h.b16 %v639
        %v725 = vunpack.c.l.b16 %v640
        %v726 = vunpack.c.h.b16 %v640
        %v727 = vunpack.c.l.b16 %v641
        %v728 = vunpack.c.h.b16 %v641
        %v729 = vunpack.c.l.b16 %v642
        %v730 = vunpack.c.h.b16 %v642
        %v731 = vunpack.c.l.b16 %v643
        %v732 = vunpack.c.h.b16 %v643
        %v733 = vunpack.c.l.b16 %v644
        %v734 = vunpack.c.h.b16 %v644
        %v735 = vunpack.c.l.b16 %v645
        %v736 = vunpack.c.h.b16 %v645
        %v737 = vunpack.c.l.b16 %v646
        %v738 = vunpack.c.h.b16 %v646
        %v739 = vunpack.c.l.b16 %v647
        %v740 = vunpack.c.h.b16 %v647
        %v741 = vunpack.c.l.b16 %v648
        %v742 = vunpack.c.h.b16 %v648
        %v743 = vunpack.c.l.b16 %v649
        %v744 = vunpack.c.h.b16 %v649
        %v745 = vunpack.c.l.b16 %v650
        %v746 = vunpack.c.h.b16 %v650
        %v747 = vunpack.c.l.b16 %v651
        %v748 = vunpack.c.h.b16 %v651
        %v749 = vunpack.c.l.b16 %v652
        %v750 = vunpack.c.h.b16 %v652
        %v751 = vunpack.c.l.b16 %v653
        %v752 = vunpack.c.h.b16 %v653
        %v753 = vunpack.c.l.b16 %v654
        %v754 = vunpack.c.h.b16 %v654
        %v755 = vunpack.c.l.b16 %v655
        %v756 = vunpack.c.h.b16 %v655
        %v757 = vunpack.c.l.b16 %v656
        %v758 = vunpack.c.h.b16 %v656
        %v759 = vunpack.c.l.b16 %v657
        %v760 = vunpack.c.h.b16 %v657
        %v761 = vunpack.c.l.b16 %v658
        %v762 = vunpack.c.h.b16 %v658
        %v763 = vunpack.c.l.b16 %v659
        %v764 = vunpack.c.h.b16 %v659
        %v765 = vunpack.c.l.b16 %v660
        %v766 = vunpack.c.h.b16 %v660
        %v767 = vunpack.c.l.b16 %v661
        %v768 = vunpack.c.h.b16 %v661
        %v769 = vunpack.c.l.b16 %v662
        %v770 = vunpack.c.h.b16 %v662
        %v771 = vpack.c.b16 %v709, %v707
        %v772 = vpack.c.b16 %v710, %v708
        %v773 = vpack.c.b16 %v713, %v711
        %v774 = vpack.c.b16 %v714, %v712
        %v775 = vpack.c.b16 %v717, %v715
        %v776 = vpack.c.b16 %v718, %v716
        %v777 = vpack.c.b16 %v721, %v719
        %v778 = vpack.c.b16 %v722, %v720
        %v779 = vpack.c.b16 %v725, %v723
        %v780 = vpack.c.b16 %v726, %v724
        %v781 = vpack.c.b16 %v729, %v727
        %v782 = vpack.c.b16 %v730, %v728
        %v783 = vpack.c.b16 %v733, %v731
        %v784 = vpack.c.b16 %v734, %v732
        %v785 = vpack.c.b16 %v737, %v735
        %v786 = vpack.c.b16 %v738, %v736
        %v787 = vpack.c.b16 %v741, %v739
        %v788 = vpack.c.b16 %v742, %v740
        %v789 = vpack.c.b16 %v745, %v743
        %v790 = vpack.c.b16 %v746, %v744
        %v791 = vpack.c.b16 %v749, %v747
        %v792 = vpack.c.b16 %v750, %v748
        %v793 = vpack.c.b16 %v753, %v751
        %v794 = vpack.c.b16 %v754, %v752
        %v795 = vpack.c.b16 %v757, %v755
        %v796 = vpack.c.b16 %v758, %v756
        %v797 = vpack.c.b16 %v761, %v759
        %v798 = vpack.c.b16 %v762, %v760
        %v799 = vpack.c.b16 %v765, %v763
        %v800 = vpack.c.b16 %v766, %v764
        %v801 = vpack.c.b16 %v769, %v767
        %v802 = vpack.c.b16 %v770, %v768
        %835 = vmatprep.subr.bf16.mxu0 %v786
        %836 = vmatpush1.bf16.msra.mxu0 %v785
        %837 = vmatprep.subr.bf16.mxu0 %v784
        %838 = vmatpush1.bf16.msra.mxu0 %v783
        %839 = vmatprep.subr.bf16.mxu0 %v782
        %840 = vmatpush1.bf16.msra.mxu0 %v781
        %841 = vmatprep.subr.bf16.mxu0 %v780
        %842 = vmatpush1.bf16.msra.mxu0 %v779
        %843 = vmatprep.subr.bf16.mxu0 %v778
        %844 = vmatpush1.bf16.msra.mxu0 %v777
        %845 = vmatprep.subr.bf16.mxu0 %v776
        %846 = vmatpush1.bf16.msra.mxu0 %v775
        %847 = vmatprep.subr.bf16.mxu0 %v774
        %848 = vmatpush1.bf16.msra.mxu0 %v773
        %849 = vmatprep.subr.bf16.mxu0 %v772
        %850 = vmatpush1.bf16.msra.mxu0 %v771
        %851 = vmatprep.subr.bf16.mxu0 %v802
        %852 = vmatpush2.bf16.msra.mxu0 %v801
        %853 = vmatprep.subr.bf16.mxu0 %v800
        %854 = vmatpush2.bf16.msra.mxu0 %v799
        %855 = vmatprep.subr.bf16.mxu0 %v798
        %856 = vmatpush2.bf16.msra.mxu0 %v797
        %857 = vmatprep.subr.bf16.mxu0 %v796
        %858 = vmatpush2.bf16.msra.mxu0 %v795
        %859 = vmatprep.subr.bf16.mxu0 %v794
        %860 = vmatpush2.bf16.msra.mxu0 %v793
        %861 = vmatprep.subr.bf16.mxu0 %v792
        %862 = vmatpush2.bf16.msra.mxu0 %v791
        %863 = vmatprep.subr.bf16.mxu0 %v790
        %864 = vmatpush2.bf16.msra.mxu0 %v789
        %865 = vmatprep.subr.bf16.mxu0 %v788
        %866 = vmatpush2.bf16.msra.mxu0 %v787
        %867 = vmatprep.mubr.bf16.mxu0 %v616
        %868 = vmatmul.mubr.bf16.gmra.mxu0 %v615
        %v869 = vpop.f32.mrf.mxu0
        %v870 = vadd.f32 %v668, %v869
        %v871 = vpop.f32.mrf.mxu0
        %v872 = vadd.f32 %v672, %v871
        %v873 = vpop.f32.mrf.mxu0
        %v874 = vadd.f32 %v668, %v873
        %v875 = vpop.f32.mrf.mxu0
        %v876 = vadd.f32 %v672, %v875
        %877 = vmatprep.mubr.bf16.mxu0 %v618
        %878 = vmatmul.mubr.bf16.gmra.mxu0 %v617
        %v879 = vpop.f32.mrf.mxu0
        %v880 = vadd.f32 %v668, %v879
        %v881 = vpop.f32.mrf.mxu0
        %v882 = vadd.f32 %v672, %v881
        %v883 = vpop.f32.mrf.mxu0
        %v884 = vadd.f32 %v668, %v883
        %v885 = vpop.f32.mrf.mxu0
        %v886 = vadd.f32 %v672, %v885
        %887 = vmatprep.mubr.bf16.mxu0 %v620
        %888 = vmatmul.mubr.bf16.gmra.mxu0 %v619
        %v889 = vpop.f32.mrf.mxu0
        %v890 = vadd.f32 %v668, %v889
        %v891 = vpop.f32.mrf.mxu0
        %v892 = vadd.f32 %v672, %v891
        %v893 = vpop.f32.mrf.mxu0
        %v894 = vadd.f32 %v668, %v893
        %v895 = vpop.f32.mrf.mxu0
        %v896 = vadd.f32 %v672, %v895
        %897 = vmatprep.mubr.bf16.mxu0 %v622
        %898 = vmatmul.mubr.bf16.gmra.mxu0 %v621
        %v899 = vpop.f32.mrf.mxu0
        %v900 = vadd.f32 %v668, %v899
        %v901 = vpop.f32.mrf.mxu0
        %v902 = vadd.f32 %v672, %v901
        %v903 = vpop.f32.mrf.mxu0
        %v904 = vadd.f32 %v668, %v903
        %v905 = vpop.f32.mrf.mxu0
        %v906 = vadd.f32 %v672, %v905
        %907 = vdwg.mxu0
        %908 = vmatprep.subr.bf16.mxu0 %v786
        %909 = vmatpush1.bf16.msra.mxu0 %v785
        %910 = vmatprep.subr.bf16.mxu0 %v784
        %911 = vmatpush1.bf16.msra.mxu0 %v783
        %912 = vmatprep.subr.bf16.mxu0 %v782
        %913 = vmatpush1.bf16.msra.mxu0 %v781
        %914 = vmatprep.subr.bf16.mxu0 %v780
        %915 = vmatpush1.bf16.msra.mxu0 %v779
        %916 = vmatprep.subr.bf16.mxu0 %v778
        %917 = vmatpush1.bf16.msra.mxu0 %v777
        %918 = vmatprep.subr.bf16.mxu0 %v776
        %919 = vmatpush1.bf16.msra.mxu0 %v775
        %920 = vmatprep.subr.bf16.mxu0 %v774
        %921 = vmatpush1.bf16.msra.mxu0 %v773
        %922 = vmatprep.subr.bf16.mxu0 %v772
        %923 = vmatpush1.bf16.msra.mxu0 %v771
        %924 = vmatprep.subr.bf16.mxu0 %v802
        %925 = vmatpush2.bf16.msra.mxu0 %v801
        %926 = vmatprep.subr.bf16.mxu0 %v800
        %927 = vmatpush2.bf16.msra.mxu0 %v799
        %928 = vmatprep.subr.bf16.mxu0 %v798
        %929 = vmatpush2.bf16.msra.mxu0 %v797
        %930 = vmatprep.subr.bf16.mxu0 %v796
        %931 = vmatpush2.bf16.msra.mxu0 %v795
        %932 = vmatprep.subr.bf16.mxu0 %v794
        %933 = vmatpush2.bf16.msra.mxu0 %v793
        %934 = vmatprep.subr.bf16.mxu0 %v792
        %935 = vmatpush2.bf16.msra.mxu0 %v791
        %936 = vmatprep.subr.bf16.mxu0 %v790
        %937 = vmatpush2.bf16.msra.mxu0 %v789
        %938 = vmatprep.subr.bf16.mxu0 %v788
        %939 = vmatpush2.bf16.msra.mxu0 %v787
        %940 = vmatprep.mubr.bf16.mxu0 %v624
        %941 = vmatmul.mubr.bf16.gmra.mxu0 %v623
        %v942 = vpop.f32.mrf.mxu0
        %v943 = vadd.f32 %v668, %v942
        %v944 = vpop.f32.mrf.mxu0
        %v945 = vadd.f32 %v672, %v944
        %v946 = vpop.f32.mrf.mxu0
        %v947 = vadd.f32 %v668, %v946
        %v948 = vpop.f32.mrf.mxu0
        %v949 = vadd.f32 %v672, %v948
        %950 = vmatprep.mubr.bf16.mxu0 %v626
        %951 = vmatmul.mubr.bf16.gmra.mxu0 %v625
        %v952 = vpop.f32.mrf.mxu0
        %v953 = vadd.f32 %v668, %v952
        %v954 = vpop.f32.mrf.mxu0
        %v955 = vadd.f32 %v672, %v954
        %v956 = vpop.f32.mrf.mxu0
        %v957 = vadd.f32 %v668, %v956
        %v958 = vpop.f32.mrf.mxu0
        %v959 = vadd.f32 %v672, %v958
        %960 = vmatprep.mubr.bf16.mxu0 %v628
        %961 = vmatmul.mubr.bf16.gmra.mxu0 %v627
        %v962 = vpop.f32.mrf.mxu0
        %v963 = vadd.f32 %v668, %v962
        %v964 = vpop.f32.mrf.mxu0
        %v965 = vadd.f32 %v672, %v964
        %v966 = vpop.f32.mrf.mxu0
        %v967 = vadd.f32 %v668, %v966
        %v968 = vpop.f32.mrf.mxu0
        %v969 = vadd.f32 %v672, %v968
        %970 = vmatprep.mubr.bf16.mxu0 %v630
        %971 = vmatmul.mubr.bf16.gmra.mxu0 %v629
        %v972 = vpop.f32.mrf.mxu0
        %v973 = vadd.f32 %v668, %v972
        %v974 = vpop.f32.mrf.mxu0
        %v975 = vadd.f32 %v672, %v974
        %v976 = vpop.f32.mrf.mxu0
        %v977 = vadd.f32 %v668, %v976
        %v978 = vpop.f32.mrf.mxu0
        %v979 = vadd.f32 %v672, %v978
        %980 = vdwg.mxu0
        %v981 = vmax.f32 %v870, 0.0
        %v982 = vmax.f32 %v872, 0.0
        %v983 = vmax.f32 %v874, 0.0
        %v984 = vmax.f32 %v876, 0.0
        %v985 = vmax.f32 %v880, 0.0
        %v986 = vmax.f32 %v882, 0.0
        %v987 = vmax.f32 %v884, 0.0
        %v988 = vmax.f32 %v886, 0.0
        %v989 = vmax.f32 %v890, 0.0
        %v990 = vmax.f32 %v892, 0.0
        %v991 = vmax.f32 %v894, 0.0
        %v992 = vmax.f32 %v896, 0.0
        %v993 = vmax.f32 %v900, 0.0
        %v994 = vmax.f32 %v902, 0.0
        %v995 = vmax.f32 %v904, 0.0
        %v996 = vmax.f32 %v906, 0.0
        %v997 = vpack.c.bf16 %v983, %v981
        %v998 = vpack.c.bf16 %v984, %v982
        %v999 = vpack.c.bf16 %v987, %v985
        %v1000 = vpack.c.bf16 %v988, %v986
        %v1001 = vpack.c.bf16 %v991, %v989
        %v1002 = vpack.c.bf16 %v992, %v990
        %v1003 = vpack.c.bf16 %v995, %v993
        %v1004 = vpack.c.bf16 %v996, %v994
        %v1005 = vmax.f32 %v943, 0.0
        %v1006 = vmax.f32 %v945, 0.0
        %v1007 = vmax.f32 %v947, 0.0
        %v1008 = vmax.f32 %v949, 0.0
        %v1009 = vmax.f32 %v953, 0.0
        %v1010 = vmax.f32 %v955, 0.0
        %v1011 = vmax.f32 %v957, 0.0
        %v1012 = vmax.f32 %v959, 0.0
        %v1013 = vmax.f32 %v963, 0.0
        %v1014 = vmax.f32 %v965, 0.0
        %v1015 = vmax.f32 %v967, 0.0
        %v1016 = vmax.f32 %v969, 0.0
        %v1017 = vmax.f32 %v973, 0.0
        %v1018 = vmax.f32 %v975, 0.0
        %v1019 = vmax.f32 %v977, 0.0
        %v1020 = vmax.f32 %v979, 0.0
        %v1021 = vpack.c.bf16 %v1007, %v1005
        %v1022 = vpack.c.bf16 %v1008, %v1006
        %v1023 = vpack.c.bf16 %v1011, %v1009
        %v1024 = vpack.c.bf16 %v1012, %v1010
        %v1025 = vpack.c.bf16 %v1015, %v1013
        %v1026 = vpack.c.bf16 %v1016, %v1014
        %v1027 = vpack.c.bf16 %v1019, %v1017
        %v1028 = vpack.c.bf16 %v1020, %v1018
        %s1029 = scalar_lea.vmem [#allocation2], 256
        %v1030 = vld [vmem:[%s1029] sm:$0xff]
        %v1031 = vld [vmem:[%s1029 + $0x8] sm:$0xff]
        %v1032 = vld [vmem:[%s1029 + $0x10] sm:$0xff]
        %v1033 = vld [vmem:[%s1029 + $0x18] sm:$0xff]
        %v1034 = vld [vmem:[%s1029 + $0x20] sm:$0xff]
        %v1035 = vld [vmem:[%s1029 + $0x28] sm:$0xff]
        %v1036 = vld [vmem:[%s1029 + $0x30] sm:$0xff]
        %v1037 = vld [vmem:[%s1029 + $0x38] sm:$0xff]
        %v1038 = vld [vmem:[%s1029 + $0x40] sm:$0xff]
        %v1039 = vld [vmem:[%s1029 + $0x48] sm:$0xff]
        %v1040 = vld [vmem:[%s1029 + $0x50] sm:$0xff]
        %v1041 = vld [vmem:[%s1029 + $0x58] sm:$0xff]
        %v1042 = vld [vmem:[%s1029 + $0x60] sm:$0xff]
        %v1043 = vld [vmem:[%s1029 + $0x68] sm:$0xff]
        %v1044 = vld [vmem:[%s1029 + $0x70] sm:$0xff]
        %v1045 = vld [vmem:[%s1029 + $0x78] sm:$0xff]
        %v1046 = vld [vmem:[%s1029 + $0x80] sm:$0xff]
        %v1047 = vld [vmem:[%s1029 + $0x88] sm:$0xff]
        %v1048 = vld [vmem:[%s1029 + $0x90] sm:$0xff]
        %v1049 = vld [vmem:[%s1029 + $0x98] sm:$0xff]
        %v1050 = vld [vmem:[%s1029 + $0xa0] sm:$0xff]
        %v1051 = vld [vmem:[%s1029 + $0xa8] sm:$0xff]
        %v1052 = vld [vmem:[%s1029 + $0xb0] sm:$0xff]
        %v1053 = vld [vmem:[%s1029 + $0xb8] sm:$0xff]
        %v1054 = vld [vmem:[%s1029 + $0xc0] sm:$0xff]
        %v1055 = vld [vmem:[%s1029 + $0xc8] sm:$0xff]
        %v1056 = vld [vmem:[%s1029 + $0xd0] sm:$0xff]
        %v1057 = vld [vmem:[%s1029 + $0xd8] sm:$0xff]
        %v1058 = vld [vmem:[%s1029 + $0xe0] sm:$0xff]
        %v1059 = vld [vmem:[%s1029 + $0xe8] sm:$0xff]
        %v1060 = vld [vmem:[%s1029 + $0xf0] sm:$0xff]
        %v1061 = vld [vmem:[%s1029 + $0xf8] sm:$0xff]
        %s1062 = scalar_lea.vmem %s4, 2
        %v1063 = vld [vmem:[%s1062] sm:$0x3]
        %v1065 = vlaneseq
        %v1066 = vshrl.u32 %v1065, 7
        %v1067 = vsub.s32 0, %v1066
        %v1068 = vrot.slane %v1063, %v1067
        %v1069 = vlaneseq
        %v1070 = vshrl.u32 %v1069, 7
        %v1071 = vsub.s32 1, %v1070
        %v1072 = vrot.slane %v1063, %v1071
        %v1107 = vunpack.c.l.b16 %v1030
        %v1108 = vunpack.c.h.b16 %v1030
        %v1109 = vunpack.c.l.b16 %v1031
        %v1110 = vunpack.c.h.b16 %v1031
        %v1111 = vunpack.c.l.b16 %v1032
        %v1112 = vunpack.c.h.b16 %v1032
        %v1113 = vunpack.c.l.b16 %v1033
        %v1114 = vunpack.c.h.b16 %v1033
        %v1115 = vunpack.c.l.b16 %v1034
        %v1116 = vunpack.c.h.b16 %v1034
        %v1117 = vunpack.c.l.b16 %v1035
        %v1118 = vunpack.c.h.b16 %v1035
        %v1119 = vunpack.c.l.b16 %v1036
        %v1120 = vunpack.c.h.b16 %v1036
        %v1121 = vunpack.c.l.b16 %v1037
        %v1122 = vunpack.c.h.b16 %v1037
        %v1123 = vunpack.c.l.b16 %v1038
        %v1124 = vunpack.c.h.b16 %v1038
        %v1125 = vunpack.c.l.b16 %v1039
        %v1126 = vunpack.c.h.b16 %v1039
        %v1127 = vunpack.c.l.b16 %v1040
        %v1128 = vunpack.c.h.b16 %v1040
        %v1129 = vunpack.c.l.b16 %v1041
        %v1130 = vunpack.c.h.b16 %v1041
        %v1131 = vunpack.c.l.b16 %v1042
        %v1132 = vunpack.c.h.b16 %v1042
        %v1133 = vunpack.c.l.b16 %v1043
        %v1134 = vunpack.c.h.b16 %v1043
        %v1135 = vunpack.c.l.b16 %v1044
        %v1136 = vunpack.c.h.b16 %v1044
        %v1137 = vunpack.c.l.b16 %v1045
        %v1138 = vunpack.c.h.b16 %v1045
        %v1139 = vunpack.c.l.b16 %v1046
        %v1140 = vunpack.c.h.b16 %v1046
        %v1141 = vunpack.c.l.b16 %v1047
        %v1142 = vunpack.c.h.b16 %v1047
        %v1143 = vunpack.c.l.b16 %v1048
        %v1144 = vunpack.c.h.b16 %v1048
        %v1145 = vunpack.c.l.b16 %v1049
        %v1146 = vunpack.c.h.b16 %v1049
        %v1147 = vunpack.c.l.b16 %v1050
        %v1148 = vunpack.c.h.b16 %v1050
        %v1149 = vunpack.c.l.b16 %v1051
        %v1150 = vunpack.c.h.b16 %v1051
        %v1151 = vunpack.c.l.b16 %v1052
        %v1152 = vunpack.c.h.b16 %v1052
        %v1153 = vunpack.c.l.b16 %v1053
        %v1154 = vunpack.c.h.b16 %v1053
        %v1155 = vunpack.c.l.b16 %v1054
        %v1156 = vunpack.c.h.b16 %v1054
        %v1157 = vunpack.c.l.b16 %v1055
        %v1158 = vunpack.c.h.b16 %v1055
        %v1159 = vunpack.c.l.b16 %v1056
        %v1160 = vunpack.c.h.b16 %v1056
        %v1161 = vunpack.c.l.b16 %v1057
        %v1162 = vunpack.c.h.b16 %v1057
        %v1163 = vunpack.c.l.b16 %v1058
        %v1164 = vunpack.c.h.b16 %v1058
        %v1165 = vunpack.c.l.b16 %v1059
        %v1166 = vunpack.c.h.b16 %v1059
        %v1167 = vunpack.c.l.b16 %v1060
        %v1168 = vunpack.c.h.b16 %v1060
        %v1169 = vunpack.c.l.b16 %v1061
        %v1170 = vunpack.c.h.b16 %v1061
        %v1171 = vpack.c.b16 %v1109, %v1107
        %v1172 = vpack.c.b16 %v1110, %v1108
        %v1173 = vpack.c.b16 %v1113, %v1111
        %v1174 = vpack.c.b16 %v1114, %v1112
        %v1175 = vpack.c.b16 %v1117, %v1115
        %v1176 = vpack.c.b16 %v1118, %v1116
        %v1177 = vpack.c.b16 %v1121, %v1119
        %v1178 = vpack.c.b16 %v1122, %v1120
        %v1179 = vpack.c.b16 %v1125, %v1123
        %v1180 = vpack.c.b16 %v1126, %v1124
        %v1181 = vpack.c.b16 %v1129, %v1127
        %v1182 = vpack.c.b16 %v1130, %v1128
        %v1183 = vpack.c.b16 %v1133, %v1131
        %v1184 = vpack.c.b16 %v1134, %v1132
        %v1185 = vpack.c.b16 %v1137, %v1135
        %v1186 = vpack.c.b16 %v1138, %v1136
        %v1187 = vpack.c.b16 %v1141, %v1139
        %v1188 = vpack.c.b16 %v1142, %v1140
        %v1189 = vpack.c.b16 %v1145, %v1143
        %v1190 = vpack.c.b16 %v1146, %v1144
        %v1191 = vpack.c.b16 %v1149, %v1147
        %v1192 = vpack.c.b16 %v1150, %v1148
        %v1193 = vpack.c.b16 %v1153, %v1151
        %v1194 = vpack.c.b16 %v1154, %v1152
        %v1195 = vpack.c.b16 %v1157, %v1155
        %v1196 = vpack.c.b16 %v1158, %v1156
        %v1197 = vpack.c.b16 %v1161, %v1159
        %v1198 = vpack.c.b16 %v1162, %v1160
        %v1199 = vpack.c.b16 %v1165, %v1163
        %v1200 = vpack.c.b16 %v1166, %v1164
        %v1201 = vpack.c.b16 %v1169, %v1167
        %v1202 = vpack.c.b16 %v1170, %v1168
        %1235 = vmatprep.subr.bf16.mxu0 %v1186
        %1236 = vmatpush1.bf16.msra.mxu0 %v1185
        %1237 = vmatprep.subr.bf16.mxu0 %v1184
        %1238 = vmatpush1.bf16.msra.mxu0 %v1183
        %1239 = vmatprep.subr.bf16.mxu0 %v1182
        %1240 = vmatpush1.bf16.msra.mxu0 %v1181
        %1241 = vmatprep.subr.bf16.mxu0 %v1180
        %1242 = vmatpush1.bf16.msra.mxu0 %v1179
        %1243 = vmatprep.subr.bf16.mxu0 %v1178
        %1244 = vmatpush1.bf16.msra.mxu0 %v1177
        %1245 = vmatprep.subr.bf16.mxu0 %v1176
        %1246 = vmatpush1.bf16.msra.mxu0 %v1175
        %1247 = vmatprep.subr.bf16.mxu0 %v1174
        %1248 = vmatpush1.bf16.msra.mxu0 %v1173
        %1249 = vmatprep.subr.bf16.mxu0 %v1172
        %1250 = vmatpush1.bf16.msra.mxu0 %v1171
        %1251 = vmatprep.subr.bf16.mxu0 %v1202
        %1252 = vmatpush2.bf16.msra.mxu0 %v1201
        %1253 = vmatprep.subr.bf16.mxu0 %v1200
        %1254 = vmatpush2.bf16.msra.mxu0 %v1199
        %1255 = vmatprep.subr.bf16.mxu0 %v1198
        %1256 = vmatpush2.bf16.msra.mxu0 %v1197
        %1257 = vmatprep.subr.bf16.mxu0 %v1196
        %1258 = vmatpush2.bf16.msra.mxu0 %v1195
        %1259 = vmatprep.subr.bf16.mxu0 %v1194
        %1260 = vmatpush2.bf16.msra.mxu0 %v1193
        %1261 = vmatprep.subr.bf16.mxu0 %v1192
        %1262 = vmatpush2.bf16.msra.mxu0 %v1191
        %1263 = vmatprep.subr.bf16.mxu0 %v1190
        %1264 = vmatpush2.bf16.msra.mxu0 %v1189
        %1265 = vmatprep.subr.bf16.mxu0 %v1188
        %1266 = vmatpush2.bf16.msra.mxu0 %v1187
        %1267 = vmatprep.mubr.bf16.mxu0 %v998
        %1268 = vmatmul.mubr.bf16.gmra.mxu0 %v997
        %v1269 = vpop.f32.mrf.mxu0
        %v1270 = vadd.f32 %v1068, %v1269
        %v1271 = vpop.f32.mrf.mxu0
        %v1272 = vadd.f32 %v1072, %v1271
        %v1273 = vpop.f32.mrf.mxu0
        %v1274 = vadd.f32 %v1068, %v1273
        %v1275 = vpop.f32.mrf.mxu0
        %v1276 = vadd.f32 %v1072, %v1275
        %1277 = vmatprep.mubr.bf16.mxu0 %v1000
        %1278 = vmatmul.mubr.bf16.gmra.mxu0 %v999
        %v1279 = vpop.f32.mrf.mxu0
        %v1280 = vadd.f32 %v1068, %v1279
        %v1281 = vpop.f32.mrf.mxu0
        %v1282 = vadd.f32 %v1072, %v1281
        %v1283 = vpop.f32.mrf.mxu0
        %v1284 = vadd.f32 %v1068, %v1283
        %v1285 = vpop.f32.mrf.mxu0
        %v1286 = vadd.f32 %v1072, %v1285
        %1287 = vmatprep.mubr.bf16.mxu0 %v1002
        %1288 = vmatmul.mubr.bf16.gmra.mxu0 %v1001
        %v1289 = vpop.f32.mrf.mxu0
        %v1290 = vadd.f32 %v1068, %v1289
        %v1291 = vpop.f32.mrf.mxu0
        %v1292 = vadd.f32 %v1072, %v1291
        %v1293 = vpop.f32.mrf.mxu0
        %v1294 = vadd.f32 %v1068, %v1293
        %v1295 = vpop.f32.mrf.mxu0
        %v1296 = vadd.f32 %v1072, %v1295
        %1297 = vmatprep.mubr.bf16.mxu0 %v1004
        %1298 = vmatmul.mubr.bf16.gmra.mxu0 %v1003
        %v1299 = vpop.f32.mrf.mxu0
        %v1300 = vadd.f32 %v1068, %v1299
        %v1301 = vpop.f32.mrf.mxu0
        %v1302 = vadd.f32 %v1072, %v1301
        %v1303 = vpop.f32.mrf.mxu0
        %v1304 = vadd.f32 %v1068, %v1303
        %v1305 = vpop.f32.mrf.mxu0
        %v1306 = vadd.f32 %v1072, %v1305
        %1307 = vdwg.mxu0
        %1308 = vmatprep.subr.bf16.mxu0 %v1186
        %1309 = vmatpush1.bf16.msra.mxu0 %v1185
        %1310 = vmatprep.subr.bf16.mxu0 %v1184
        %1311 = vmatpush1.bf16.msra.mxu0 %v1183
        %1312 = vmatprep.subr.bf16.mxu0 %v1182
        %1313 = vmatpush1.bf16.msra.mxu0 %v1181
        %1314 = vmatprep.subr.bf16.mxu0 %v1180
        %1315 = vmatpush1.bf16.msra.mxu0 %v1179
        %1316 = vmatprep.subr.bf16.mxu0 %v1178
        %1317 = vmatpush1.bf16.msra.mxu0 %v1177
        %1318 = vmatprep.subr.bf16.mxu0 %v1176
        %1319 = vmatpush1.bf16.msra.mxu0 %v1175
        %1320 = vmatprep.subr.bf16.mxu0 %v1174
        %1321 = vmatpush1.bf16.msra.mxu0 %v1173
        %1322 = vmatprep.subr.bf16.mxu0 %v1172
        %1323 = vmatpush1.bf16.msra.mxu0 %v1171
        %1324 = vmatprep.subr.bf16.mxu0 %v1202
        %1325 = vmatpush2.bf16.msra.mxu0 %v1201
        %1326 = vmatprep.subr.bf16.mxu0 %v1200
        %1327 = vmatpush2.bf16.msra.mxu0 %v1199
        %1328 = vmatprep.subr.bf16.mxu0 %v1198
        %1329 = vmatpush2.bf16.msra.mxu0 %v1197
        %1330 = vmatprep.subr.bf16.mxu0 %v1196
        %1331 = vmatpush2.bf16.msra.mxu0 %v1195
        %1332 = vmatprep.subr.bf16.mxu0 %v1194
        %1333 = vmatpush2.bf16.msra.mxu0 %v1193
        %1334 = vmatprep.subr.bf16.mxu0 %v1192
        %1335 = vmatpush2.bf16.msra.mxu0 %v1191
        %1336 = vmatprep.subr.bf16.mxu0 %v1190
        %1337 = vmatpush2.bf16.msra.mxu0 %v1189
        %1338 = vmatprep.subr.bf16.mxu0 %v1188
        %1339 = vmatpush2.bf16.msra.mxu0 %v1187
        %1340 = vmatprep.mubr.bf16.mxu0 %v1022
        %1341 = vmatmul.mubr.bf16.gmra.mxu0 %v1021
        %v1342 = vpop.f32.mrf.mxu0
        %v1343 = vadd.f32 %v1068, %v1342
        %v1344 = vpop.f32.mrf.mxu0
        %v1345 = vadd.f32 %v1072, %v1344
        %v1346 = vpop.f32.mrf.mxu0
        %v1347 = vadd.f32 %v1068, %v1346
        %v1348 = vpop.f32.mrf.mxu0
        %v1349 = vadd.f32 %v1072, %v1348
        %1350 = vmatprep.mubr.bf16.mxu0 %v1024
        %1351 = vmatmul.mubr.bf16.gmra.mxu0 %v1023
        %v1352 = vpop.f32.mrf.mxu0
        %v1353 = vadd.f32 %v1068, %v1352
        %v1354 = vpop.f32.mrf.mxu0
        %v1355 = vadd.f32 %v1072, %v1354
        %v1356 = vpop.f32.mrf.mxu0
        %v1357 = vadd.f32 %v1068, %v1356
        %v1358 = vpop.f32.mrf.mxu0
        %v1359 = vadd.f32 %v1072, %v1358
        %1360 = vmatprep.mubr.bf16.mxu0 %v1026
        %1361 = vmatmul.mubr.bf16.gmra.mxu0 %v1025
        %v1362 = vpop.f32.mrf.mxu0
        %v1363 = vadd.f32 %v1068, %v1362
        %v1364 = vpop.f32.mrf.mxu0
        %v1365 = vadd.f32 %v1072, %v1364
        %v1366 = vpop.f32.mrf.mxu0
        %v1367 = vadd.f32 %v1068, %v1366
        %v1368 = vpop.f32.mrf.mxu0
        %v1369 = vadd.f32 %v1072, %v1368
        %1370 = vmatprep.mubr.bf16.mxu0 %v1028
        %1371 = vmatmul.mubr.bf16.gmra.mxu0 %v1027
        %v1372 = vpop.f32.mrf.mxu0
        %v1373 = vadd.f32 %v1068, %v1372
        %v1374 = vpop.f32.mrf.mxu0
        %v1375 = vadd.f32 %v1072, %v1374
        %v1376 = vpop.f32.mrf.mxu0
        %v1377 = vadd.f32 %v1068, %v1376
        %v1378 = vpop.f32.mrf.mxu0
        %v1379 = vadd.f32 %v1072, %v1378
        %1380 = vdwg.mxu0
        %v1381 = vunpack.c.l.bf16 %v615
        %v1382 = vunpack.c.l.bf16 %v616
        %v1383 = vunpack.c.h.bf16 %v615
        %v1384 = vunpack.c.h.bf16 %v616
        %v1385 = vunpack.c.l.bf16 %v617
        %v1386 = vunpack.c.l.bf16 %v618
        %v1387 = vunpack.c.h.bf16 %v617
        %v1388 = vunpack.c.h.bf16 %v618
        %v1389 = vunpack.c.l.bf16 %v619
        %v1390 = vunpack.c.l.bf16 %v620
        %v1391 = vunpack.c.h.bf16 %v619
        %v1392 = vunpack.c.h.bf16 %v620
        %v1393 = vunpack.c.l.bf16 %v621
        %v1394 = vunpack.c.l.bf16 %v622
        %v1395 = vunpack.c.h.bf16 %v621
        %v1396 = vunpack.c.h.bf16 %v622
        %v1397 = vadd.f32 %v1270, %v1381
        %v1398 = vadd.f32 %v1272, %v1382
        %v1399 = vadd.f32 %v1274, %v1383
        %v1400 = vadd.f32 %v1276, %v1384
        %v1401 = vadd.f32 %v1280, %v1385
        %v1402 = vadd.f32 %v1282, %v1386
        %v1403 = vadd.f32 %v1284, %v1387
        %v1404 = vadd.f32 %v1286, %v1388
        %v1405 = vadd.f32 %v1290, %v1389
        %v1406 = vadd.f32 %v1292, %v1390
        %v1407 = vadd.f32 %v1294, %v1391
        %v1408 = vadd.f32 %v1296, %v1392
        %v1409 = vadd.f32 %v1300, %v1393
        %v1410 = vadd.f32 %v1302, %v1394
        %v1411 = vadd.f32 %v1304, %v1395
        %v1412 = vadd.f32 %v1306, %v1396
        %v1413 = vmax.f32 %v1397, 0.0
        %v1414 = vmax.f32 %v1398, 0.0
        %v1415 = vmax.f32 %v1399, 0.0
        %v1416 = vmax.f32 %v1400, 0.0
        %v1417 = vmax.f32 %v1401, 0.0
        %v1418 = vmax.f32 %v1402, 0.0
        %v1419 = vmax.f32 %v1403, 0.0
        %v1420 = vmax.f32 %v1404, 0.0
        %v1421 = vmax.f32 %v1405, 0.0
        %v1422 = vmax.f32 %v1406, 0.0
        %v1423 = vmax.f32 %v1407, 0.0
        %v1424 = vmax.f32 %v1408, 0.0
        %v1425 = vmax.f32 %v1409, 0.0
        %v1426 = vmax.f32 %v1410, 0.0
        %v1427 = vmax.f32 %v1411, 0.0
        %v1428 = vmax.f32 %v1412, 0.0
        %v1429 = vunpack.c.l.bf16 %v623
        %v1430 = vunpack.c.l.bf16 %v624
        %v1431 = vunpack.c.h.bf16 %v623
        %v1432 = vunpack.c.h.bf16 %v624
        %v1433 = vunpack.c.l.bf16 %v625
        %v1434 = vunpack.c.l.bf16 %v626
        %v1435 = vunpack.c.h.bf16 %v625
        %v1436 = vunpack.c.h.bf16 %v626
        %v1437 = vunpack.c.l.bf16 %v627
        %v1438 = vunpack.c.l.bf16 %v628
        %v1439 = vunpack.c.h.bf16 %v627
        %v1440 = vunpack.c.h.bf16 %v628
        %v1441 = vunpack.c.l.bf16 %v629
        %v1442 = vunpack.c.l.bf16 %v630
        %v1443 = vunpack.c.h.bf16 %v629
        %v1444 = vunpack.c.h.bf16 %v630
        %v1445 = vadd.f32 %v1343, %v1429
        %v1446 = vadd.f32 %v1345, %v1430
        %v1447 = vadd.f32 %v1347, %v1431
        %v1448 = vadd.f32 %v1349, %v1432
        %v1449 = vadd.f32 %v1353, %v1433
        %v1450 = vadd.f32 %v1355, %v1434
        %v1451 = vadd.f32 %v1357, %v1435
        %v1452 = vadd.f32 %v1359, %v1436
        %v1453 = vadd.f32 %v1363, %v1437
        %v1454 = vadd.f32 %v1365, %v1438
        %v1455 = vadd.f32 %v1367, %v1439
        %v1456 = vadd.f32 %v1369, %v1440
        %v1457 = vadd.f32 %v1373, %v1441
        %v1458 = vadd.f32 %v1375, %v1442
        %v1459 = vadd.f32 %v1377, %v1443
        %v1460 = vadd.f32 %v1379, %v1444
        %v1461 = vmax.f32 %v1445, 0.0
        %v1462 = vmax.f32 %v1446, 0.0
        %v1463 = vmax.f32 %v1447, 0.0
        %v1464 = vmax.f32 %v1448, 0.0
        %v1465 = vmax.f32 %v1449, 0.0
        %v1466 = vmax.f32 %v1450, 0.0
        %v1467 = vmax.f32 %v1451, 0.0
        %v1468 = vmax.f32 %v1452, 0.0
        %v1469 = vmax.f32 %v1453, 0.0
        %v1470 = vmax.f32 %v1454, 0.0
        %v1471 = vmax.f32 %v1455, 0.0
        %v1472 = vmax.f32 %v1456, 0.0
        %v1473 = vmax.f32 %v1457, 0.0
        %v1474 = vmax.f32 %v1458, 0.0
        %v1475 = vmax.f32 %v1459, 0.0
        %v1476 = vmax.f32 %v1460, 0.0
        %v1477 = vpack.c.bf16 %v1415, %v1413
        %v1478 = vpack.c.bf16 %v1416, %v1414
        %v1479 = vpack.c.bf16 %v1419, %v1417
        %v1480 = vpack.c.bf16 %v1420, %v1418
        %v1481 = vpack.c.bf16 %v1423, %v1421
        %v1482 = vpack.c.bf16 %v1424, %v1422
        %v1483 = vpack.c.bf16 %v1427, %v1425
        %v1484 = vpack.c.bf16 %v1428, %v1426
        %v1485 = vpack.c.bf16 %v1463, %v1461
        %v1486 = vpack.c.bf16 %v1464, %v1462
        %v1487 = vpack.c.bf16 %v1467, %v1465
        %v1488 = vpack.c.bf16 %v1468, %v1466
        %v1489 = vpack.c.bf16 %v1471, %v1469
        %v1490 = vpack.c.bf16 %v1472, %v1470
        %v1491 = vpack.c.bf16 %v1475, %v1473
        %v1492 = vpack.c.bf16 %v1476, %v1474
        %s1493 = scalar_lea.vmem [#allocation2], 512
        %v1494 = vld [vmem:[%s1493] sm:$0xff]
        %v1495 = vld [vmem:[%s1493 + $0x8] sm:$0xff]
        %v1496 = vld [vmem:[%s1493 + $0x10] sm:$0xff]
        %v1497 = vld [vmem:[%s1493 + $0x18] sm:$0xff]
        %v1498 = vld [vmem:[%s1493 + $0x20] sm:$0xff]
        %v1499 = vld [vmem:[%s1493 + $0x28] sm:$0xff]
        %v1500 = vld [vmem:[%s1493 + $0x30] sm:$0xff]
        %v1501 = vld [vmem:[%s1493 + $0x38] sm:$0xff]
        %v1502 = vld [vmem:[%s1493 + $0x40] sm:$0xff]
        %v1503 = vld [vmem:[%s1493 + $0x48] sm:$0xff]
        %v1504 = vld [vmem:[%s1493 + $0x50] sm:$0xff]
        %v1505 = vld [vmem:[%s1493 + $0x58] sm:$0xff]
        %v1506 = vld [vmem:[%s1493 + $0x60] sm:$0xff]
        %v1507 = vld [vmem:[%s1493 + $0x68] sm:$0xff]
        %v1508 = vld [vmem:[%s1493 + $0x70] sm:$0xff]
        %v1509 = vld [vmem:[%s1493 + $0x78] sm:$0xff]
        %v1510 = vld [vmem:[%s1493 + $0x80] sm:$0xff]
        %v1511 = vld [vmem:[%s1493 + $0x88] sm:$0xff]
        %v1512 = vld [vmem:[%s1493 + $0x90] sm:$0xff]
        %v1513 = vld [vmem:[%s1493 + $0x98] sm:$0xff]
        %v1514 = vld [vmem:[%s1493 + $0xa0] sm:$0xff]
        %v1515 = vld [vmem:[%s1493 + $0xa8] sm:$0xff]
        %v1516 = vld [vmem:[%s1493 + $0xb0] sm:$0xff]
        %v1517 = vld [vmem:[%s1493 + $0xb8] sm:$0xff]
        %v1518 = vld [vmem:[%s1493 + $0xc0] sm:$0xff]
        %v1519 = vld [vmem:[%s1493 + $0xc8] sm:$0xff]
        %v1520 = vld [vmem:[%s1493 + $0xd0] sm:$0xff]
        %v1521 = vld [vmem:[%s1493 + $0xd8] sm:$0xff]
        %v1522 = vld [vmem:[%s1493 + $0xe0] sm:$0xff]
        %v1523 = vld [vmem:[%s1493 + $0xe8] sm:$0xff]
        %v1524 = vld [vmem:[%s1493 + $0xf0] sm:$0xff]
        %v1525 = vld [vmem:[%s1493 + $0xf8] sm:$0xff]
        %s1526 = scalar_lea.vmem %s4, 4
        %v1527 = vld [vmem:[%s1526] sm:$0x3]
        %v1529 = vlaneseq
        %v1530 = vshrl.u32 %v1529, 7
        %v1531 = vsub.s32 0, %v1530
        %v1532 = vrot.slane %v1527, %v1531
        %v1533 = vlaneseq
        %v1534 = vshrl.u32 %v1533, 7
        %v1535 = vsub.s32 1, %v1534
        %v1536 = vrot.slane %v1527, %v1535
        %v1571 = vunpack.c.l.b16 %v1494
        %v1572 = vunpack.c.h.b16 %v1494
        %v1573 = vunpack.c.l.b16 %v1495
        %v1574 = vunpack.c.h.b16 %v1495
        %v1575 = vunpack.c.l.b16 %v1496
        %v1576 = vunpack.c.h.b16 %v1496
        %v1577 = vunpack.c.l.b16 %v1497
        %v1578 = vunpack.c.h.b16 %v1497
        %v1579 = vunpack.c.l.b16 %v1498
        %v1580 = vunpack.c.h.b16 %v1498
        %v1581 = vunpack.c.l.b16 %v1499
        %v1582 = vunpack.c.h.b16 %v1499
        %v1583 = vunpack.c.l.b16 %v1500
        %v1584 = vunpack.c.h.b16 %v1500
        %v1585 = vunpack.c.l.b16 %v1501
        %v1586 = vunpack.c.h.b16 %v1501
        %v1587 = vunpack.c.l.b16 %v1502
        %v1588 = vunpack.c.h.b16 %v1502
        %v1589 = vunpack.c.l.b16 %v1503
        %v1590 = vunpack.c.h.b16 %v1503
        %v1591 = vunpack.c.l.b16 %v1504
        %v1592 = vunpack.c.h.b16 %v1504
        %v1593 = vunpack.c.l.b16 %v1505
        %v1594 = vunpack.c.h.b16 %v1505
        %v1595 = vunpack.c.l.b16 %v1506
        %v1596 = vunpack.c.h.b16 %v1506
        %v1597 = vunpack.c.l.b16 %v1507
        %v1598 = vunpack.c.h.b16 %v1507
        %v1599 = vunpack.c.l.b16 %v1508
        %v1600 = vunpack.c.h.b16 %v1508
        %v1601 = vunpack.c.l.b16 %v1509
        %v1602 = vunpack.c.h.b16 %v1509
        %v1603 = vunpack.c.l.b16 %v1510
        %v1604 = vunpack.c.h.b16 %v1510
        %v1605 = vunpack.c.l.b16 %v1511
        %v1606 = vunpack.c.h.b16 %v1511
        %v1607 = vunpack.c.l.b16 %v1512
        %v1608 = vunpack.c.h.b16 %v1512
        %v1609 = vunpack.c.l.b16 %v1513
        %v1610 = vunpack.c.h.b16 %v1513
        %v1611 = vunpack.c.l.b16 %v1514
        %v1612 = vunpack.c.h.b16 %v1514
        %v1613 = vunpack.c.l.b16 %v1515
        %v1614 = vunpack.c.h.b16 %v1515
        %v1615 = vunpack.c.l.b16 %v1516
        %v1616 = vunpack.c.h.b16 %v1516
        %v1617 = vunpack.c.l.b16 %v1517
        %v1618 = vunpack.c.h.b16 %v1517
        %v1619 = vunpack.c.l.b16 %v1518
        %v1620 = vunpack.c.h.b16 %v1518
        %v1621 = vunpack.c.l.b16 %v1519
        %v1622 = vunpack.c.h.b16 %v1519
        %v1623 = vunpack.c.l.b16 %v1520
        %v1624 = vunpack.c.h.b16 %v1520
        %v1625 = vunpack.c.l.b16 %v1521
        %v1626 = vunpack.c.h.b16 %v1521
        %v1627 = vunpack.c.l.b16 %v1522
        %v1628 = vunpack.c.h.b16 %v1522
        %v1629 = vunpack.c.l.b16 %v1523
        %v1630 = vunpack.c.h.b16 %v1523
        %v1631 = vunpack.c.l.b16 %v1524
        %v1632 = vunpack.c.h.b16 %v1524
        %v1633 = vunpack.c.l.b16 %v1525
        %v1634 = vunpack.c.h.b16 %v1525
        %v1635 = vpack.c.b16 %v1573, %v1571
        %v1636 = vpack.c.b16 %v1574, %v1572
        %v1637 = vpack.c.b16 %v1577, %v1575
        %v1638 = vpack.c.b16 %v1578, %v1576
        %v1639 = vpack.c.b16 %v1581, %v1579
        %v1640 = vpack.c.b16 %v1582, %v1580
        %v1641 = vpack.c.b16 %v1585, %v1583
        %v1642 = vpack.c.b16 %v1586, %v1584
        %v1643 = vpack.c.b16 %v1589, %v1587
        %v1644 = vpack.c.b16 %v1590, %v1588
        %v1645 = vpack.c.b16 %v1593, %v1591
        %v1646 = vpack.c.b16 %v1594, %v1592
        %v1647 = vpack.c.b16 %v1597, %v1595
        %v1648 = vpack.c.b16 %v1598, %v1596
        %v1649 = vpack.c.b16 %v1601, %v1599
        %v1650 = vpack.c.b16 %v1602, %v1600
        %v1651 = vpack.c.b16 %v1605, %v1603
        %v1652 = vpack.c.b16 %v1606, %v1604
        %v1653 = vpack.c.b16 %v1609, %v1607
        %v1654 = vpack.c.b16 %v1610, %v1608
        %v1655 = vpack.c.b16 %v1613, %v1611
        %v1656 = vpack.c.b16 %v1614, %v1612
        %v1657 = vpack.c.b16 %v1617, %v1615
        %v1658 = vpack.c.b16 %v1618, %v1616
        %v1659 = vpack.c.b16 %v1621, %v1619
        %v1660 = vpack.c.b16 %v1622, %v1620
        %v1661 = vpack.c.b16 %v1625, %v1623
        %v1662 = vpack.c.b16 %v1626, %v1624
        %v1663 = vpack.c.b16 %v1629, %v1627
        %v1664 = vpack.c.b16 %v1630, %v1628
        %v1665 = vpack.c.b16 %v1633, %v1631
        %v1666 = vpack.c.b16 %v1634, %v1632
        %1699 = vmatprep.subr.bf16.mxu0 %v1650
        %1700 = vmatpush1.bf16.msra.mxu0 %v1649
        %1701 = vmatprep.subr.bf16.mxu0 %v1648
        %1702 = vmatpush1.bf16.msra.mxu0 %v1647
        %1703 = vmatprep.subr.bf16.mxu0 %v1646
        %1704 = vmatpush1.bf16.msra.mxu0 %v1645
        %1705 = vmatprep.subr.bf16.mxu0 %v1644
        %1706 = vmatpush1.bf16.msra.mxu0 %v1643
        %1707 = vmatprep.subr.bf16.mxu0 %v1642
        %1708 = vmatpush1.bf16.msra.mxu0 %v1641
        %1709 = vmatprep.subr.bf16.mxu0 %v1640
        %1710 = vmatpush1.bf16.msra.mxu0 %v1639
        %1711 = vmatprep.subr.bf16.mxu0 %v1638
        %1712 = vmatpush1.bf16.msra.mxu0 %v1637
        %1713 = vmatprep.subr.bf16.mxu0 %v1636
        %1714 = vmatpush1.bf16.msra.mxu0 %v1635
        %1715 = vmatprep.subr.bf16.mxu0 %v1666
        %1716 = vmatpush2.bf16.msra.mxu0 %v1665
        %1717 = vmatprep.subr.bf16.mxu0 %v1664
        %1718 = vmatpush2.bf16.msra.mxu0 %v1663
        %1719 = vmatprep.subr.bf16.mxu0 %v1662
        %1720 = vmatpush2.bf16.msra.mxu0 %v1661
        %1721 = vmatprep.subr.bf16.mxu0 %v1660
        %1722 = vmatpush2.bf16.msra.mxu0 %v1659
        %1723 = vmatprep.subr.bf16.mxu0 %v1658
        %1724 = vmatpush2.bf16.msra.mxu0 %v1657
        %1725 = vmatprep.subr.bf16.mxu0 %v1656
        %1726 = vmatpush2.bf16.msra.mxu0 %v1655
        %1727 = vmatprep.subr.bf16.mxu0 %v1654
        %1728 = vmatpush2.bf16.msra.mxu0 %v1653
        %1729 = vmatprep.subr.bf16.mxu0 %v1652
        %1730 = vmatpush2.bf16.msra.mxu0 %v1651
        %1731 = vmatprep.mubr.bf16.mxu0 %v1478
        %1732 = vmatmul.mubr.bf16.gmra.mxu0 %v1477
        %v1733 = vpop.f32.mrf.mxu0
        %v1734 = vadd.f32 %v1532, %v1733
        %v1735 = vpop.f32.mrf.mxu0
        %v1736 = vadd.f32 %v1536, %v1735
        %v1737 = vpop.f32.mrf.mxu0
        %v1738 = vadd.f32 %v1532, %v1737
        %v1739 = vpop.f32.mrf.mxu0
        %v1740 = vadd.f32 %v1536, %v1739
        %1741 = vmatprep.mubr.bf16.mxu0 %v1480
        %1742 = vmatmul.mubr.bf16.gmra.mxu0 %v1479
        %v1743 = vpop.f32.mrf.mxu0
        %v1744 = vadd.f32 %v1532, %v1743
        %v1745 = vpop.f32.mrf.mxu0
        %v1746 = vadd.f32 %v1536, %v1745
        %v1747 = vpop.f32.mrf.mxu0
        %v1748 = vadd.f32 %v1532, %v1747
        %v1749 = vpop.f32.mrf.mxu0
        %v1750 = vadd.f32 %v1536, %v1749
        %1751 = vmatprep.mubr.bf16.mxu0 %v1482
        %1752 = vmatmul.mubr.bf16.gmra.mxu0 %v1481
        %v1753 = vpop.f32.mrf.mxu0
        %v1754 = vadd.f32 %v1532, %v1753
        %v1755 = vpop.f32.mrf.mxu0
        %v1756 = vadd.f32 %v1536, %v1755
        %v1757 = vpop.f32.mrf.mxu0
        %v1758 = vadd.f32 %v1532, %v1757
        %v1759 = vpop.f32.mrf.mxu0
        %v1760 = vadd.f32 %v1536, %v1759
        %1761 = vmatprep.mubr.bf16.mxu0 %v1484
        %1762 = vmatmul.mubr.bf16.gmra.mxu0 %v1483
        %v1763 = vpop.f32.mrf.mxu0
        %v1764 = vadd.f32 %v1532, %v1763
        %v1765 = vpop.f32.mrf.mxu0
        %v1766 = vadd.f32 %v1536, %v1765
        %v1767 = vpop.f32.mrf.mxu0
        %v1768 = vadd.f32 %v1532, %v1767
        %v1769 = vpop.f32.mrf.mxu0
        %v1770 = vadd.f32 %v1536, %v1769
        %1771 = vdwg.mxu0
        %1772 = vmatprep.subr.bf16.mxu0 %v1650
        %1773 = vmatpush1.bf16.msra.mxu0 %v1649
        %1774 = vmatprep.subr.bf16.mxu0 %v1648
        %1775 = vmatpush1.bf16.msra.mxu0 %v1647
        %1776 = vmatprep.subr.bf16.mxu0 %v1646
        %1777 = vmatpush1.bf16.msra.mxu0 %v1645
        %1778 = vmatprep.subr.bf16.mxu0 %v1644
        %1779 = vmatpush1.bf16.msra.mxu0 %v1643
        %1780 = vmatprep.subr.bf16.mxu0 %v1642
        %1781 = vmatpush1.bf16.msra.mxu0 %v1641
        %1782 = vmatprep.subr.bf16.mxu0 %v1640
        %1783 = vmatpush1.bf16.msra.mxu0 %v1639
        %1784 = vmatprep.subr.bf16.mxu0 %v1638
        %1785 = vmatpush1.bf16.msra.mxu0 %v1637
        %1786 = vmatprep.subr.bf16.mxu0 %v1636
        %1787 = vmatpush1.bf16.msra.mxu0 %v1635
        %1788 = vmatprep.subr.bf16.mxu0 %v1666
        %1789 = vmatpush2.bf16.msra.mxu0 %v1665
        %1790 = vmatprep.subr.bf16.mxu0 %v1664
        %1791 = vmatpush2.bf16.msra.mxu0 %v1663
        %1792 = vmatprep.subr.bf16.mxu0 %v1662
        %1793 = vmatpush2.bf16.msra.mxu0 %v1661
        %1794 = vmatprep.subr.bf16.mxu0 %v1660
        %1795 = vmatpush2.bf16.msra.mxu0 %v1659
        %1796 = vmatprep.subr.bf16.mxu0 %v1658
        %1797 = vmatpush2.bf16.msra.mxu0 %v1657
        %1798 = vmatprep.subr.bf16.mxu0 %v1656
        %1799 = vmatpush2.bf16.msra.mxu0 %v1655
        %1800 = vmatprep.subr.bf16.mxu0 %v1654
        %1801 = vmatpush2.bf16.msra.mxu0 %v1653
        %1802 = vmatprep.subr.bf16.mxu0 %v1652
        %1803 = vmatpush2.bf16.msra.mxu0 %v1651
        %1804 = vmatprep.mubr.bf16.mxu0 %v1486
        %1805 = vmatmul.mubr.bf16.gmra.mxu0 %v1485
        %v1806 = vpop.f32.mrf.mxu0
        %v1807 = vadd.f32 %v1532, %v1806
        %v1808 = vpop.f32.mrf.mxu0
        %v1809 = vadd.f32 %v1536, %v1808
        %v1810 = vpop.f32.mrf.mxu0
        %v1811 = vadd.f32 %v1532, %v1810
        %v1812 = vpop.f32.mrf.mxu0
        %v1813 = vadd.f32 %v1536, %v1812
        %1814 = vmatprep.mubr.bf16.mxu0 %v1488
        %1815 = vmatmul.mubr.bf16.gmra.mxu0 %v1487
        %v1816 = vpop.f32.mrf.mxu0
        %v1817 = vadd.f32 %v1532, %v1816
        %v1818 = vpop.f32.mrf.mxu0
        %v1819 = vadd.f32 %v1536, %v1818
        %v1820 = vpop.f32.mrf.mxu0
        %v1821 = vadd.f32 %v1532, %v1820
        %v1822 = vpop.f32.mrf.mxu0
        %v1823 = vadd.f32 %v1536, %v1822
        %1824 = vmatprep.mubr.bf16.mxu0 %v1490
        %1825 = vmatmul.mubr.bf16.gmra.mxu0 %v1489
        %v1826 = vpop.f32.mrf.mxu0
        %v1827 = vadd.f32 %v1532, %v1826
        %v1828 = vpop.f32.mrf.mxu0
        %v1829 = vadd.f32 %v1536, %v1828
        %v1830 = vpop.f32.mrf.mxu0
        %v1831 = vadd.f32 %v1532, %v1830
        %v1832 = vpop.f32.mrf.mxu0
        %v1833 = vadd.f32 %v1536, %v1832
        %1834 = vmatprep.mubr.bf16.mxu0 %v1492
        %1835 = vmatmul.mubr.bf16.gmra.mxu0 %v1491
        %v1836 = vpop.f32.mrf.mxu0
        %v1837 = vadd.f32 %v1532, %v1836
        %v1838 = vpop.f32.mrf.mxu0
        %v1839 = vadd.f32 %v1536, %v1838
        %v1840 = vpop.f32.mrf.mxu0
        %v1841 = vadd.f32 %v1532, %v1840
        %v1842 = vpop.f32.mrf.mxu0
        %v1843 = vadd.f32 %v1536, %v1842
        %1844 = vdwg.mxu0
        %v1845 = vmax.f32 %v1734, 0.0
        %v1846 = vmax.f32 %v1736, 0.0
        %v1847 = vmax.f32 %v1738, 0.0
        %v1848 = vmax.f32 %v1740, 0.0
        %v1849 = vmax.f32 %v1744, 0.0
        %v1850 = vmax.f32 %v1746, 0.0
        %v1851 = vmax.f32 %v1748, 0.0
        %v1852 = vmax.f32 %v1750, 0.0
        %v1853 = vmax.f32 %v1754, 0.0
        %v1854 = vmax.f32 %v1756, 0.0
        %v1855 = vmax.f32 %v1758, 0.0
        %v1856 = vmax.f32 %v1760, 0.0
        %v1857 = vmax.f32 %v1764, 0.0
        %v1858 = vmax.f32 %v1766, 0.0
        %v1859 = vmax.f32 %v1768, 0.0
        %v1860 = vmax.f32 %v1770, 0.0
        %v1861 = vpack.c.bf16 %v1847, %v1845
        %v1862 = vpack.c.bf16 %v1848, %v1846
        %v1863 = vpack.c.bf16 %v1851, %v1849
        %v1864 = vpack.c.bf16 %v1852, %v1850
        %v1865 = vpack.c.bf16 %v1855, %v1853
        %v1866 = vpack.c.bf16 %v1856, %v1854
        %v1867 = vpack.c.bf16 %v1859, %v1857
        %v1868 = vpack.c.bf16 %v1860, %v1858
        %v1869 = vmax.f32 %v1807, 0.0
        %v1870 = vmax.f32 %v1809, 0.0
        %v1871 = vmax.f32 %v1811, 0.0
        %v1872 = vmax.f32 %v1813, 0.0
        %v1873 = vmax.f32 %v1817, 0.0
        %v1874 = vmax.f32 %v1819, 0.0
        %v1875 = vmax.f32 %v1821, 0.0
        %v1876 = vmax.f32 %v1823, 0.0
        %v1877 = vmax.f32 %v1827, 0.0
        %v1878 = vmax.f32 %v1829, 0.0
        %v1879 = vmax.f32 %v1831, 0.0
        %v1880 = vmax.f32 %v1833, 0.0
        %v1881 = vmax.f32 %v1837, 0.0
        %v1882 = vmax.f32 %v1839, 0.0
        %v1883 = vmax.f32 %v1841, 0.0
        %v1884 = vmax.f32 %v1843, 0.0
        %v1885 = vpack.c.bf16 %v1871, %v1869
        %v1886 = vpack.c.bf16 %v1872, %v1870
        %v1887 = vpack.c.bf16 %v1875, %v1873
        %v1888 = vpack.c.bf16 %v1876, %v1874
        %v1889 = vpack.c.bf16 %v1879, %v1877
        %v1890 = vpack.c.bf16 %v1880, %v1878
        %v1891 = vpack.c.bf16 %v1883, %v1881
        %v1892 = vpack.c.bf16 %v1884, %v1882
        %s1893 = scalar_lea.vmem [#allocation2], 768
        %v1894 = vld [vmem:[%s1893] sm:$0xff]
        %v1895 = vld [vmem:[%s1893 + $0x8] sm:$0xff]
        %v1896 = vld [vmem:[%s1893 + $0x10] sm:$0xff]
        %v1897 = vld [vmem:[%s1893 + $0x18] sm:$0xff]
        %v1898 = vld [vmem:[%s1893 + $0x20] sm:$0xff]
        %v1899 = vld [vmem:[%s1893 + $0x28] sm:$0xff]
        %v1900 = vld [vmem:[%s1893 + $0x30] sm:$0xff]
        %v1901 = vld [vmem:[%s1893 + $0x38] sm:$0xff]
        %v1902 = vld [vmem:[%s1893 + $0x40] sm:$0xff]
        %v1903 = vld [vmem:[%s1893 + $0x48] sm:$0xff]
        %v1904 = vld [vmem:[%s1893 + $0x50] sm:$0xff]
        %v1905 = vld [vmem:[%s1893 + $0x58] sm:$0xff]
        %v1906 = vld [vmem:[%s1893 + $0x60] sm:$0xff]
        %v1907 = vld [vmem:[%s1893 + $0x68] sm:$0xff]
        %v1908 = vld [vmem:[%s1893 + $0x70] sm:$0xff]
        %v1909 = vld [vmem:[%s1893 + $0x78] sm:$0xff]
        %v1910 = vld [vmem:[%s1893 + $0x80] sm:$0xff]
        %v1911 = vld [vmem:[%s1893 + $0x88] sm:$0xff]
        %v1912 = vld [vmem:[%s1893 + $0x90] sm:$0xff]
        %v1913 = vld [vmem:[%s1893 + $0x98] sm:$0xff]
        %v1914 = vld [vmem:[%s1893 + $0xa0] sm:$0xff]
        %v1915 = vld [vmem:[%s1893 + $0xa8] sm:$0xff]
        %v1916 = vld [vmem:[%s1893 + $0xb0] sm:$0xff]
        %v1917 = vld [vmem:[%s1893 + $0xb8] sm:$0xff]
        %v1918 = vld [vmem:[%s1893 + $0xc0] sm:$0xff]
        %v1919 = vld [vmem:[%s1893 + $0xc8] sm:$0xff]
        %v1920 = vld [vmem:[%s1893 + $0xd0] sm:$0xff]
        %v1921 = vld [vmem:[%s1893 + $0xd8] sm:$0xff]
        %v1922 = vld [vmem:[%s1893 + $0xe0] sm:$0xff]
        %v1923 = vld [vmem:[%s1893 + $0xe8] sm:$0xff]
        %v1924 = vld [vmem:[%s1893 + $0xf0] sm:$0xff]
        %v1925 = vld [vmem:[%s1893 + $0xf8] sm:$0xff]
        %s1926 = scalar_lea.vmem %s4, 6
        %v1927 = vld [vmem:[%s1926] sm:$0x3]
        %v1929 = vlaneseq
        %v1930 = vshrl.u32 %v1929, 7
        %v1931 = vsub.s32 0, %v1930
        %v1932 = vrot.slane %v1927, %v1931
        %v1933 = vlaneseq
        %v1934 = vshrl.u32 %v1933, 7
        %v1935 = vsub.s32 1, %v1934
        %v1936 = vrot.slane %v1927, %v1935
        %v1971 = vunpack.c.l.b16 %v1894
        %v1972 = vunpack.c.h.b16 %v1894
        %v1973 = vunpack.c.l.b16 %v1895
        %v1974 = vunpack.c.h.b16 %v1895
        %v1975 = vunpack.c.l.b16 %v1896
        %v1976 = vunpack.c.h.b16 %v1896
        %v1977 = vunpack.c.l.b16 %v1897
        %v1978 = vunpack.c.h.b16 %v1897
        %v1979 = vunpack.c.l.b16 %v1898
        %v1980 = vunpack.c.h.b16 %v1898
        %v1981 = vunpack.c.l.b16 %v1899
        %v1982 = vunpack.c.h.b16 %v1899
        %v1983 = vunpack.c.l.b16 %v1900
        %v1984 = vunpack.c.h.b16 %v1900
        %v1985 = vunpack.c.l.b16 %v1901
        %v1986 = vunpack.c.h.b16 %v1901
        %v1987 = vunpack.c.l.b16 %v1902
        %v1988 = vunpack.c.h.b16 %v1902
        %v1989 = vunpack.c.l.b16 %v1903
        %v1990 = vunpack.c.h.b16 %v1903
        %v1991 = vunpack.c.l.b16 %v1904
        %v1992 = vunpack.c.h.b16 %v1904
        %v1993 = vunpack.c.l.b16 %v1905
        %v1994 = vunpack.c.h.b16 %v1905
        %v1995 = vunpack.c.l.b16 %v1906
        %v1996 = vunpack.c.h.b16 %v1906
        %v1997 = vunpack.c.l.b16 %v1907
        %v1998 = vunpack.c.h.b16 %v1907
        %v1999 = vunpack.c.l.b16 %v1908
        %v2000 = vunpack.c.h.b16 %v1908
        %v2001 = vunpack.c.l.b16 %v1909
        %v2002 = vunpack.c.h.b16 %v1909
        %v2003 = vunpack.c.l.b16 %v1910
        %v2004 = vunpack.c.h.b16 %v1910
        %v2005 = vunpack.c.l.b16 %v1911
        %v2006 = vunpack.c.h.b16 %v1911
        %v2007 = vunpack.c.l.b16 %v1912
        %v2008 = vunpack.c.h.b16 %v1912
        %v2009 = vunpack.c.l.b16 %v1913
        %v2010 = vunpack.c.h.b16 %v1913
        %v2011 = vunpack.c.l.b16 %v1914
        %v2012 = vunpack.c.h.b16 %v1914
        %v2013 = vunpack.c.l.b16 %v1915
        %v2014 = vunpack.c.h.b16 %v1915
        %v2015 = vunpack.c.l.b16 %v1916
        %v2016 = vunpack.c.h.b16 %v1916
        %v2017 = vunpack.c.l.b16 %v1917
        %v2018 = vunpack.c.h.b16 %v1917
        %v2019 = vunpack.c.l.b16 %v1918
        %v2020 = vunpack.c.h.b16 %v1918
        %v2021 = vunpack.c.l.b16 %v1919
        %v2022 = vunpack.c.h.b16 %v1919
        %v2023 = vunpack.c.l.b16 %v1920
        %v2024 = vunpack.c.h.b16 %v1920
        %v2025 = vunpack.c.l.b16 %v1921
        %v2026 = vunpack.c.h.b16 %v1921
        %v2027 = vunpack.c.l.b16 %v1922
        %v2028 = vunpack.c.h.b16 %v1922
        %v2029 = vunpack.c.l.b16 %v1923
        %v2030 = vunpack.c.h.b16 %v1923
        %v2031 = vunpack.c.l.b16 %v1924
        %v2032 = vunpack.c.h.b16 %v1924
        %v2033 = vunpack.c.l.b16 %v1925
        %v2034 = vunpack.c.h.b16 %v1925
        %v2035 = vpack.c.b16 %v1973, %v1971
        %v2036 = vpack.c.b16 %v1974, %v1972
        %v2037 = vpack.c.b16 %v1977, %v1975
        %v2038 = vpack.c.b16 %v1978, %v1976
        %v2039 = vpack.c.b16 %v1981, %v1979
        %v2040 = vpack.c.b16 %v1982, %v1980
        %v2041 = vpack.c.b16 %v1985, %v1983
        %v2042 = vpack.c.b16 %v1986, %v1984
        %v2043 = vpack.c.b16 %v1989, %v1987
        %v2044 = vpack.c.b16 %v1990, %v1988
        %v2045 = vpack.c.b16 %v1993, %v1991
        %v2046 = vpack.c.b16 %v1994, %v1992
        %v2047 = vpack.c.b16 %v1997, %v1995
        %v2048 = vpack.c.b16 %v1998, %v1996
        %v2049 = vpack.c.b16 %v2001, %v1999
        %v2050 = vpack.c.b16 %v2002, %v2000
        %v2051 = vpack.c.b16 %v2005, %v2003
        %v2052 = vpack.c.b16 %v2006, %v2004
        %v2053 = vpack.c.b16 %v2009, %v2007
        %v2054 = vpack.c.b16 %v2010, %v2008
        %v2055 = vpack.c.b16 %v2013, %v2011
        %v2056 = vpack.c.b16 %v2014, %v2012
        %v2057 = vpack.c.b16 %v2017, %v2015
        %v2058 = vpack.c.b16 %v2018, %v2016
        %v2059 = vpack.c.b16 %v2021, %v2019
        %v2060 = vpack.c.b16 %v2022, %v2020
        %v2061 = vpack.c.b16 %v2025, %v2023
        %v2062 = vpack.c.b16 %v2026, %v2024
        %v2063 = vpack.c.b16 %v2029, %v2027
        %v2064 = vpack.c.b16 %v2030, %v2028
        %v2065 = vpack.c.b16 %v2033, %v2031
        %v2066 = vpack.c.b16 %v2034, %v2032
        %2099 = vmatprep.subr.bf16.mxu0 %v2050
        %2100 = vmatpush1.bf16.msra.mxu0 %v2049
        %2101 = vmatprep.subr.bf16.mxu0 %v2048
        %2102 = vmatpush1.bf16.msra.mxu0 %v2047
        %2103 = vmatprep.subr.bf16.mxu0 %v2046
        %2104 = vmatpush1.bf16.msra.mxu0 %v2045
        %2105 = vmatprep.subr.bf16.mxu0 %v2044
        %2106 = vmatpush1.bf16.msra.mxu0 %v2043
        %2107 = vmatprep.subr.bf16.mxu0 %v2042
        %2108 = vmatpush1.bf16.msra.mxu0 %v2041
        %2109 = vmatprep.subr.bf16.mxu0 %v2040
        %2110 = vmatpush1.bf16.msra.mxu0 %v2039
        %2111 = vmatprep.subr.bf16.mxu0 %v2038
        %2112 = vmatpush1.bf16.msra.mxu0 %v2037
        %2113 = vmatprep.subr.bf16.mxu0 %v2036
        %2114 = vmatpush1.bf16.msra.mxu0 %v2035
        %2115 = vmatprep.subr.bf16.mxu0 %v2066
        %2116 = vmatpush2.bf16.msra.mxu0 %v2065
        %2117 = vmatprep.subr.bf16.mxu0 %v2064
        %2118 = vmatpush2.bf16.msra.mxu0 %v2063
        %2119 = vmatprep.subr.bf16.mxu0 %v2062
        %2120 = vmatpush2.bf16.msra.mxu0 %v2061
        %2121 = vmatprep.subr.bf16.mxu0 %v2060
        %2122 = vmatpush2.bf16.msra.mxu0 %v2059
        %2123 = vmatprep.subr.bf16.mxu0 %v2058
        %2124 = vmatpush2.bf16.msra.mxu0 %v2057
        %2125 = vmatprep.subr.bf16.mxu0 %v2056
        %2126 = vmatpush2.bf16.msra.mxu0 %v2055
        %2127 = vmatprep.subr.bf16.mxu0 %v2054
        %2128 = vmatpush2.bf16.msra.mxu0 %v2053
        %2129 = vmatprep.subr.bf16.mxu0 %v2052
        %2130 = vmatpush2.bf16.msra.mxu0 %v2051
        %2131 = vmatprep.mubr.bf16.mxu0 %v1862
        %2132 = vmatmul.mubr.bf16.gmra.mxu0 %v1861
        %v2133 = vpop.f32.mrf.mxu0
        %v2134 = vadd.f32 %v1932, %v2133
        %v2135 = vpop.f32.mrf.mxu0
        %v2136 = vadd.f32 %v1936, %v2135
        %v2137 = vpop.f32.mrf.mxu0
        %v2138 = vadd.f32 %v1932, %v2137
        %v2139 = vpop.f32.mrf.mxu0
        %v2140 = vadd.f32 %v1936, %v2139
        %2141 = vmatprep.mubr.bf16.mxu0 %v1864
        %2142 = vmatmul.mubr.bf16.gmra.mxu0 %v1863
        %v2143 = vpop.f32.mrf.mxu0
        %v2144 = vadd.f32 %v1932, %v2143
        %v2145 = vpop.f32.mrf.mxu0
        %v2146 = vadd.f32 %v1936, %v2145
        %v2147 = vpop.f32.mrf.mxu0
        %v2148 = vadd.f32 %v1932, %v2147
        %v2149 = vpop.f32.mrf.mxu0
        %v2150 = vadd.f32 %v1936, %v2149
        %2151 = vmatprep.mubr.bf16.mxu0 %v1866
        %2152 = vmatmul.mubr.bf16.gmra.mxu0 %v1865
        %v2153 = vpop.f32.mrf.mxu0
        %v2154 = vadd.f32 %v1932, %v2153
        %v2155 = vpop.f32.mrf.mxu0
        %v2156 = vadd.f32 %v1936, %v2155
        %v2157 = vpop.f32.mrf.mxu0
        %v2158 = vadd.f32 %v1932, %v2157
        %v2159 = vpop.f32.mrf.mxu0
        %v2160 = vadd.f32 %v1936, %v2159
        %2161 = vmatprep.mubr.bf16.mxu0 %v1868
        %2162 = vmatmul.mubr.bf16.gmra.mxu0 %v1867
        %v2163 = vpop.f32.mrf.mxu0
        %v2164 = vadd.f32 %v1932, %v2163
        %v2165 = vpop.f32.mrf.mxu0
        %v2166 = vadd.f32 %v1936, %v2165
        %v2167 = vpop.f32.mrf.mxu0
        %v2168 = vadd.f32 %v1932, %v2167
        %v2169 = vpop.f32.mrf.mxu0
        %v2170 = vadd.f32 %v1936, %v2169
        %2171 = vdwg.mxu0
        %2172 = vmatprep.subr.bf16.mxu0 %v2050
        %2173 = vmatpush1.bf16.msra.mxu0 %v2049
        %2174 = vmatprep.subr.bf16.mxu0 %v2048
        %2175 = vmatpush1.bf16.msra.mxu0 %v2047
        %2176 = vmatprep.subr.bf16.mxu0 %v2046
        %2177 = vmatpush1.bf16.msra.mxu0 %v2045
        %2178 = vmatprep.subr.bf16.mxu0 %v2044
        %2179 = vmatpush1.bf16.msra.mxu0 %v2043
        %2180 = vmatprep.subr.bf16.mxu0 %v2042
        %2181 = vmatpush1.bf16.msra.mxu0 %v2041
        %2182 = vmatprep.subr.bf16.mxu0 %v2040
        %2183 = vmatpush1.bf16.msra.mxu0 %v2039
        %2184 = vmatprep.subr.bf16.mxu0 %v2038
        %2185 = vmatpush1.bf16.msra.mxu0 %v2037
        %2186 = vmatprep.subr.bf16.mxu0 %v2036
        %2187 = vmatpush1.bf16.msra.mxu0 %v2035
        %2188 = vmatprep.subr.bf16.mxu0 %v2066
        %2189 = vmatpush2.bf16.msra.mxu0 %v2065
        %2190 = vmatprep.subr.bf16.mxu0 %v2064
        %2191 = vmatpush2.bf16.msra.mxu0 %v2063
        %2192 = vmatprep.subr.bf16.mxu0 %v2062
        %2193 = vmatpush2.bf16.msra.mxu0 %v2061
        %2194 = vmatprep.subr.bf16.mxu0 %v2060
        %2195 = vmatpush2.bf16.msra.mxu0 %v2059
        %2196 = vmatprep.subr.bf16.mxu0 %v2058
        %2197 = vmatpush2.bf16.msra.mxu0 %v2057
        %2198 = vmatprep.subr.bf16.mxu0 %v2056
        %2199 = vmatpush2.bf16.msra.mxu0 %v2055
        %2200 = vmatprep.subr.bf16.mxu0 %v2054
        %2201 = vmatpush2.bf16.msra.mxu0 %v2053
        %2202 = vmatprep.subr.bf16.mxu0 %v2052
        %2203 = vmatpush2.bf16.msra.mxu0 %v2051
        %2204 = vmatprep.mubr.bf16.mxu0 %v1886
        %2205 = vmatmul.mubr.bf16.gmra.mxu0 %v1885
        %v2206 = vpop.f32.mrf.mxu0
        %v2207 = vadd.f32 %v1932, %v2206
        %v2208 = vpop.f32.mrf.mxu0
        %v2209 = vadd.f32 %v1936, %v2208
        %v2210 = vpop.f32.mrf.mxu0
        %v2211 = vadd.f32 %v1932, %v2210
        %v2212 = vpop.f32.mrf.mxu0
        %v2213 = vadd.f32 %v1936, %v2212
        %2214 = vmatprep.mubr.bf16.mxu0 %v1888
        %2215 = vmatmul.mubr.bf16.gmra.mxu0 %v1887
        %v2216 = vpop.f32.mrf.mxu0
        %v2217 = vadd.f32 %v1932, %v2216
        %v2218 = vpop.f32.mrf.mxu0
        %v2219 = vadd.f32 %v1936, %v2218
        %v2220 = vpop.f32.mrf.mxu0
        %v2221 = vadd.f32 %v1932, %v2220
        %v2222 = vpop.f32.mrf.mxu0
        %v2223 = vadd.f32 %v1936, %v2222
        %2224 = vmatprep.mubr.bf16.mxu0 %v1890
        %2225 = vmatmul.mubr.bf16.gmra.mxu0 %v1889
        %v2226 = vpop.f32.mrf.mxu0
        %v2227 = vadd.f32 %v1932, %v2226
        %v2228 = vpop.f32.mrf.mxu0
        %v2229 = vadd.f32 %v1936, %v2228
        %v2230 = vpop.f32.mrf.mxu0
        %v2231 = vadd.f32 %v1932, %v2230
        %v2232 = vpop.f32.mrf.mxu0
        %v2233 = vadd.f32 %v1936, %v2232
        %2234 = vmatprep.mubr.bf16.mxu0 %v1892
        %2235 = vmatmul.mubr.bf16.gmra.mxu0 %v1891
        %v2236 = vpop.f32.mrf.mxu0
        %v2237 = vadd.f32 %v1932, %v2236
        %v2238 = vpop.f32.mrf.mxu0
        %v2239 = vadd.f32 %v1936, %v2238
        %v2240 = vpop.f32.mrf.mxu0
        %v2241 = vadd.f32 %v1932, %v2240
        %v2242 = vpop.f32.mrf.mxu0
        %v2243 = vadd.f32 %v1936, %v2242
        %2244 = vdwg.mxu0
        %v2245 = vunpack.c.l.bf16 %v1477
        %v2246 = vunpack.c.l.bf16 %v1478
        %v2247 = vunpack.c.h.bf16 %v1477
        %v2248 = vunpack.c.h.bf16 %v1478
        %v2249 = vunpack.c.l.bf16 %v1479
        %v2250 = vunpack.c.l.bf16 %v1480
        %v2251 = vunpack.c.h.bf16 %v1479
        %v2252 = vunpack.c.h.bf16 %v1480
        %v2253 = vunpack.c.l.bf16 %v1481
        %v2254 = vunpack.c.l.bf16 %v1482
        %v2255 = vunpack.c.h.bf16 %v1481
        %v2256 = vunpack.c.h.bf16 %v1482
        %v2257 = vunpack.c.l.bf16 %v1483
        %v2258 = vunpack.c.l.bf16 %v1484
        %v2259 = vunpack.c.h.bf16 %v1483
        %v2260 = vunpack.c.h.bf16 %v1484
        %v2261 = vadd.f32 %v2134, %v2245
        %v2262 = vadd.f32 %v2136, %v2246
        %v2263 = vadd.f32 %v2138, %v2247
        %v2264 = vadd.f32 %v2140, %v2248
        %v2265 = vadd.f32 %v2144, %v2249
        %v2266 = vadd.f32 %v2146, %v2250
        %v2267 = vadd.f32 %v2148, %v2251
        %v2268 = vadd.f32 %v2150, %v2252
        %v2269 = vadd.f32 %v2154, %v2253
        %v2270 = vadd.f32 %v2156, %v2254
        %v2271 = vadd.f32 %v2158, %v2255
        %v2272 = vadd.f32 %v2160, %v2256
        %v2273 = vadd.f32 %v2164, %v2257
        %v2274 = vadd.f32 %v2166, %v2258
        %v2275 = vadd.f32 %v2168, %v2259
        %v2276 = vadd.f32 %v2170, %v2260
        %v2277 = vmax.f32 %v2261, 0.0
        %v2278 = vmax.f32 %v2262, 0.0
        %v2279 = vmax.f32 %v2263, 0.0
        %v2280 = vmax.f32 %v2264, 0.0
        %v2281 = vmax.f32 %v2265, 0.0
        %v2282 = vmax.f32 %v2266, 0.0
        %v2283 = vmax.f32 %v2267, 0.0
        %v2284 = vmax.f32 %v2268, 0.0
        %v2285 = vmax.f32 %v2269, 0.0
        %v2286 = vmax.f32 %v2270, 0.0
        %v2287 = vmax.f32 %v2271, 0.0
        %v2288 = vmax.f32 %v2272, 0.0
        %v2289 = vmax.f32 %v2273, 0.0
        %v2290 = vmax.f32 %v2274, 0.0
        %v2291 = vmax.f32 %v2275, 0.0
        %v2292 = vmax.f32 %v2276, 0.0
        %v2293 = vunpack.c.l.bf16 %v1485
        %v2294 = vunpack.c.l.bf16 %v1486
        %v2295 = vunpack.c.h.bf16 %v1485
        %v2296 = vunpack.c.h.bf16 %v1486
        %v2297 = vunpack.c.l.bf16 %v1487
        %v2298 = vunpack.c.l.bf16 %v1488
        %v2299 = vunpack.c.h.bf16 %v1487
        %v2300 = vunpack.c.h.bf16 %v1488
        %v2301 = vunpack.c.l.bf16 %v1489
        %v2302 = vunpack.c.l.bf16 %v1490
        %v2303 = vunpack.c.h.bf16 %v1489
        %v2304 = vunpack.c.h.bf16 %v1490
        %v2305 = vunpack.c.l.bf16 %v1491
        %v2306 = vunpack.c.l.bf16 %v1492
        %v2307 = vunpack.c.h.bf16 %v1491
        %v2308 = vunpack.c.h.bf16 %v1492
        %v2309 = vadd.f32 %v2207, %v2293
        %v2310 = vadd.f32 %v2209, %v2294
        %v2311 = vadd.f32 %v2211, %v2295
        %v2312 = vadd.f32 %v2213, %v2296
        %v2313 = vadd.f32 %v2217, %v2297
        %v2314 = vadd.f32 %v2219, %v2298
        %v2315 = vadd.f32 %v2221, %v2299
        %v2316 = vadd.f32 %v2223, %v2300
        %v2317 = vadd.f32 %v2227, %v2301
        %v2318 = vadd.f32 %v2229, %v2302
        %v2319 = vadd.f32 %v2231, %v2303
        %v2320 = vadd.f32 %v2233, %v2304
        %v2321 = vadd.f32 %v2237, %v2305
        %v2322 = vadd.f32 %v2239, %v2306
        %v2323 = vadd.f32 %v2241, %v2307
        %v2324 = vadd.f32 %v2243, %v2308
        %v2325 = vmax.f32 %v2309, 0.0
        %v2326 = vmax.f32 %v2310, 0.0
        %v2327 = vmax.f32 %v2311, 0.0
        %v2328 = vmax.f32 %v2312, 0.0
        %v2329 = vmax.f32 %v2313, 0.0
        %v2330 = vmax.f32 %v2314, 0.0
        %v2331 = vmax.f32 %v2315, 0.0
        %v2332 = vmax.f32 %v2316, 0.0
        %v2333 = vmax.f32 %v2317, 0.0
        %v2334 = vmax.f32 %v2318, 0.0
        %v2335 = vmax.f32 %v2319, 0.0
        %v2336 = vmax.f32 %v2320, 0.0
        %v2337 = vmax.f32 %v2321, 0.0
        %v2338 = vmax.f32 %v2322, 0.0
        %v2339 = vmax.f32 %v2323, 0.0
        %v2340 = vmax.f32 %v2324, 0.0
        %v2341 = vpack.c.bf16 %v2279, %v2277
        %v2342 = vpack.c.bf16 %v2280, %v2278
        %v2343 = vpack.c.bf16 %v2283, %v2281
        %v2344 = vpack.c.bf16 %v2284, %v2282
        %v2345 = vpack.c.bf16 %v2287, %v2285
        %v2346 = vpack.c.bf16 %v2288, %v2286
        %v2347 = vpack.c.bf16 %v2291, %v2289
        %v2348 = vpack.c.bf16 %v2292, %v2290
        %v2349 = vpack.c.bf16 %v2327, %v2325
        %v2350 = vpack.c.bf16 %v2328, %v2326
        %v2351 = vpack.c.bf16 %v2331, %v2329
        %v2352 = vpack.c.bf16 %v2332, %v2330
        %v2353 = vpack.c.bf16 %v2335, %v2333
        %v2354 = vpack.c.bf16 %v2336, %v2334
        %v2355 = vpack.c.bf16 %v2339, %v2337
        %v2356 = vpack.c.bf16 %v2340, %v2338
        %s2357 = scalar_lea.vmem [#allocation2], 1024
        %v2358 = vld [vmem:[%s2357] sm:$0xff]
        %v2359 = vld [vmem:[%s2357 + $0x8] sm:$0xff]
        %v2360 = vld [vmem:[%s2357 + $0x10] sm:$0xff]
        %v2361 = vld [vmem:[%s2357 + $0x18] sm:$0xff]
        %v2362 = vld [vmem:[%s2357 + $0x20] sm:$0xff]
        %v2363 = vld [vmem:[%s2357 + $0x28] sm:$0xff]
        %v2364 = vld [vmem:[%s2357 + $0x30] sm:$0xff]
        %v2365 = vld [vmem:[%s2357 + $0x38] sm:$0xff]
        %v2366 = vld [vmem:[%s2357 + $0x40] sm:$0xff]
        %v2367 = vld [vmem:[%s2357 + $0x48] sm:$0xff]
        %v2368 = vld [vmem:[%s2357 + $0x50] sm:$0xff]
        %v2369 = vld [vmem:[%s2357 + $0x58] sm:$0xff]
        %v2370 = vld [vmem:[%s2357 + $0x60] sm:$0xff]
        %v2371 = vld [vmem:[%s2357 + $0x68] sm:$0xff]
        %v2372 = vld [vmem:[%s2357 + $0x70] sm:$0xff]
        %v2373 = vld [vmem:[%s2357 + $0x78] sm:$0xff]
        %v2374 = vld [vmem:[%s2357 + $0x80] sm:$0xff]
        %v2375 = vld [vmem:[%s2357 + $0x88] sm:$0xff]
        %v2376 = vld [vmem:[%s2357 + $0x90] sm:$0xff]
        %v2377 = vld [vmem:[%s2357 + $0x98] sm:$0xff]
        %v2378 = vld [vmem:[%s2357 + $0xa0] sm:$0xff]
        %v2379 = vld [vmem:[%s2357 + $0xa8] sm:$0xff]
        %v2380 = vld [vmem:[%s2357 + $0xb0] sm:$0xff]
        %v2381 = vld [vmem:[%s2357 + $0xb8] sm:$0xff]
        %v2382 = vld [vmem:[%s2357 + $0xc0] sm:$0xff]
        %v2383 = vld [vmem:[%s2357 + $0xc8] sm:$0xff]
        %v2384 = vld [vmem:[%s2357 + $0xd0] sm:$0xff]
        %v2385 = vld [vmem:[%s2357 + $0xd8] sm:$0xff]
        %v2386 = vld [vmem:[%s2357 + $0xe0] sm:$0xff]
        %v2387 = vld [vmem:[%s2357 + $0xe8] sm:$0xff]
        %v2388 = vld [vmem:[%s2357 + $0xf0] sm:$0xff]
        %v2389 = vld [vmem:[%s2357 + $0xf8] sm:$0xff]
        %s2390 = scalar_lea.vmem %s4, 8
        %v2391 = vld [vmem:[%s2390] sm:$0x3]
        %v2393 = vlaneseq
        %v2394 = vshrl.u32 %v2393, 7
        %v2395 = vsub.s32 0, %v2394
        %v2396 = vrot.slane %v2391, %v2395
        %v2397 = vlaneseq
        %v2398 = vshrl.u32 %v2397, 7
        %v2399 = vsub.s32 1, %v2398
        %v2400 = vrot.slane %v2391, %v2399
        %v2435 = vunpack.c.l.b16 %v2358
        %v2436 = vunpack.c.h.b16 %v2358
        %v2437 = vunpack.c.l.b16 %v2359
        %v2438 = vunpack.c.h.b16 %v2359
        %v2439 = vunpack.c.l.b16 %v2360
        %v2440 = vunpack.c.h.b16 %v2360
        %v2441 = vunpack.c.l.b16 %v2361
        %v2442 = vunpack.c.h.b16 %v2361
        %v2443 = vunpack.c.l.b16 %v2362
        %v2444 = vunpack.c.h.b16 %v2362
        %v2445 = vunpack.c.l.b16 %v2363
        %v2446 = vunpack.c.h.b16 %v2363
        %v2447 = vunpack.c.l.b16 %v2364
        %v2448 = vunpack.c.h.b16 %v2364
        %v2449 = vunpack.c.l.b16 %v2365
        %v2450 = vunpack.c.h.b16 %v2365
        %v2451 = vunpack.c.l.b16 %v2366
        %v2452 = vunpack.c.h.b16 %v2366
        %v2453 = vunpack.c.l.b16 %v2367
        %v2454 = vunpack.c.h.b16 %v2367
        %v2455 = vunpack.c.l.b16 %v2368
        %v2456 = vunpack.c.h.b16 %v2368
        %v2457 = vunpack.c.l.b16 %v2369
        %v2458 = vunpack.c.h.b16 %v2369
        %v2459 = vunpack.c.l.b16 %v2370
        %v2460 = vunpack.c.h.b16 %v2370
        %v2461 = vunpack.c.l.b16 %v2371
        %v2462 = vunpack.c.h.b16 %v2371
        %v2463 = vunpack.c.l.b16 %v2372
        %v2464 = vunpack.c.h.b16 %v2372
        %v2465 = vunpack.c.l.b16 %v2373
        %v2466 = vunpack.c.h.b16 %v2373
        %v2467 = vunpack.c.l.b16 %v2374
        %v2468 = vunpack.c.h.b16 %v2374
        %v2469 = vunpack.c.l.b16 %v2375
        %v2470 = vunpack.c.h.b16 %v2375
        %v2471 = vunpack.c.l.b16 %v2376
        %v2472 = vunpack.c.h.b16 %v2376
        %v2473 = vunpack.c.l.b16 %v2377
        %v2474 = vunpack.c.h.b16 %v2377
        %v2475 = vunpack.c.l.b16 %v2378
        %v2476 = vunpack.c.h.b16 %v2378
        %v2477 = vunpack.c.l.b16 %v2379
        %v2478 = vunpack.c.h.b16 %v2379
        %v2479 = vunpack.c.l.b16 %v2380
        %v2480 = vunpack.c.h.b16 %v2380
        %v2481 = vunpack.c.l.b16 %v2381
        %v2482 = vunpack.c.h.b16 %v2381
        %v2483 = vunpack.c.l.b16 %v2382
        %v2484 = vunpack.c.h.b16 %v2382
        %v2485 = vunpack.c.l.b16 %v2383
        %v2486 = vunpack.c.h.b16 %v2383
        %v2487 = vunpack.c.l.b16 %v2384
        %v2488 = vunpack.c.h.b16 %v2384
        %v2489 = vunpack.c.l.b16 %v2385
        %v2490 = vunpack.c.h.b16 %v2385
        %v2491 = vunpack.c.l.b16 %v2386
        %v2492 = vunpack.c.h.b16 %v2386
        %v2493 = vunpack.c.l.b16 %v2387
        %v2494 = vunpack.c.h.b16 %v2387
        %v2495 = vunpack.c.l.b16 %v2388
        %v2496 = vunpack.c.h.b16 %v2388
        %v2497 = vunpack.c.l.b16 %v2389
        %v2498 = vunpack.c.h.b16 %v2389
        %v2499 = vpack.c.b16 %v2437, %v2435
        %v2500 = vpack.c.b16 %v2438, %v2436
        %v2501 = vpack.c.b16 %v2441, %v2439
        %v2502 = vpack.c.b16 %v2442, %v2440
        %v2503 = vpack.c.b16 %v2445, %v2443
        %v2504 = vpack.c.b16 %v2446, %v2444
        %v2505 = vpack.c.b16 %v2449, %v2447
        %v2506 = vpack.c.b16 %v2450, %v2448
        %v2507 = vpack.c.b16 %v2453, %v2451
        %v2508 = vpack.c.b16 %v2454, %v2452
        %v2509 = vpack.c.b16 %v2457, %v2455
        %v2510 = vpack.c.b16 %v2458, %v2456
        %v2511 = vpack.c.b16 %v2461, %v2459
        %v2512 = vpack.c.b16 %v2462, %v2460
        %v2513 = vpack.c.b16 %v2465, %v2463
        %v2514 = vpack.c.b16 %v2466, %v2464
        %v2515 = vpack.c.b16 %v2469, %v2467
        %v2516 = vpack.c.b16 %v2470, %v2468
        %v2517 = vpack.c.b16 %v2473, %v2471
        %v2518 = vpack.c.b16 %v2474, %v2472
        %v2519 = vpack.c.b16 %v2477, %v2475
        %v2520 = vpack.c.b16 %v2478, %v2476
        %v2521 = vpack.c.b16 %v2481, %v2479
        %v2522 = vpack.c.b16 %v2482, %v2480
        %v2523 = vpack.c.b16 %v2485, %v2483
        %v2524 = vpack.c.b16 %v2486, %v2484
        %v2525 = vpack.c.b16 %v2489, %v2487
        %v2526 = vpack.c.b16 %v2490, %v2488
        %v2527 = vpack.c.b16 %v2493, %v2491
        %v2528 = vpack.c.b16 %v2494, %v2492
        %v2529 = vpack.c.b16 %v2497, %v2495
        %v2530 = vpack.c.b16 %v2498, %v2496
        %2563 = vmatprep.subr.bf16.mxu0 %v2514
        %2564 = vmatpush1.bf16.msra.mxu0 %v2513
        %2565 = vmatprep.subr.bf16.mxu0 %v2512
        %2566 = vmatpush1.bf16.msra.mxu0 %v2511
        %2567 = vmatprep.subr.bf16.mxu0 %v2510
        %2568 = vmatpush1.bf16.msra.mxu0 %v2509
        %2569 = vmatprep.subr.bf16.mxu0 %v2508
        %2570 = vmatpush1.bf16.msra.mxu0 %v2507
        %2571 = vmatprep.subr.bf16.mxu0 %v2506
        %2572 = vmatpush1.bf16.msra.mxu0 %v2505
        %2573 = vmatprep.subr.bf16.mxu0 %v2504
        %2574 = vmatpush1.bf16.msra.mxu0 %v2503
        %2575 = vmatprep.subr.bf16.mxu0 %v2502
        %2576 = vmatpush1.bf16.msra.mxu0 %v2501
        %2577 = vmatprep.subr.bf16.mxu0 %v2500
        %2578 = vmatpush1.bf16.msra.mxu0 %v2499
        %2579 = vmatprep.subr.bf16.mxu0 %v2530
        %2580 = vmatpush2.bf16.msra.mxu0 %v2529
        %2581 = vmatprep.subr.bf16.mxu0 %v2528
        %2582 = vmatpush2.bf16.msra.mxu0 %v2527
        %2583 = vmatprep.subr.bf16.mxu0 %v2526
        %2584 = vmatpush2.bf16.msra.mxu0 %v2525
        %2585 = vmatprep.subr.bf16.mxu0 %v2524
        %2586 = vmatpush2.bf16.msra.mxu0 %v2523
        %2587 = vmatprep.subr.bf16.mxu0 %v2522
        %2588 = vmatpush2.bf16.msra.mxu0 %v2521
        %2589 = vmatprep.subr.bf16.mxu0 %v2520
        %2590 = vmatpush2.bf16.msra.mxu0 %v2519
        %2591 = vmatprep.subr.bf16.mxu0 %v2518
        %2592 = vmatpush2.bf16.msra.mxu0 %v2517
        %2593 = vmatprep.subr.bf16.mxu0 %v2516
        %2594 = vmatpush2.bf16.msra.mxu0 %v2515
        %2595 = vmatprep.mubr.bf16.mxu0 %v2342
        %2596 = vmatmul.mubr.bf16.gmra.mxu0 %v2341
        %v2597 = vpop.f32.mrf.mxu0
        %v2598 = vadd.f32 %v2396, %v2597
        %v2599 = vpop.f32.mrf.mxu0
        %v2600 = vadd.f32 %v2400, %v2599
        %v2601 = vpop.f32.mrf.mxu0
        %v2602 = vadd.f32 %v2396, %v2601
        %v2603 = vpop.f32.mrf.mxu0
        %v2604 = vadd.f32 %v2400, %v2603
        %2605 = vmatprep.mubr.bf16.mxu0 %v2344
        %2606 = vmatmul.mubr.bf16.gmra.mxu0 %v2343
        %v2607 = vpop.f32.mrf.mxu0
        %v2608 = vadd.f32 %v2396, %v2607
        %v2609 = vpop.f32.mrf.mxu0
        %v2610 = vadd.f32 %v2400, %v2609
        %v2611 = vpop.f32.mrf.mxu0
        %v2612 = vadd.f32 %v2396, %v2611
        %v2613 = vpop.f32.mrf.mxu0
        %v2614 = vadd.f32 %v2400, %v2613
        %2615 = vmatprep.mubr.bf16.mxu0 %v2346
        %2616 = vmatmul.mubr.bf16.gmra.mxu0 %v2345
        %v2617 = vpop.f32.mrf.mxu0
        %v2618 = vadd.f32 %v2396, %v2617
        %v2619 = vpop.f32.mrf.mxu0
        %v2620 = vadd.f32 %v2400, %v2619
        %v2621 = vpop.f32.mrf.mxu0
        %v2622 = vadd.f32 %v2396, %v2621
        %v2623 = vpop.f32.mrf.mxu0
        %v2624 = vadd.f32 %v2400, %v2623
        %2625 = vmatprep.mubr.bf16.mxu0 %v2348
        %2626 = vmatmul.mubr.bf16.gmra.mxu0 %v2347
        %v2627 = vpop.f32.mrf.mxu0
        %v2628 = vadd.f32 %v2396, %v2627
        %v2629 = vpop.f32.mrf.mxu0
        %v2630 = vadd.f32 %v2400, %v2629
        %v2631 = vpop.f32.mrf.mxu0
        %v2632 = vadd.f32 %v2396, %v2631
        %v2633 = vpop.f32.mrf.mxu0
        %v2634 = vadd.f32 %v2400, %v2633
        %2635 = vdwg.mxu0
        %2636 = vmatprep.subr.bf16.mxu0 %v2514
        %2637 = vmatpush1.bf16.msra.mxu0 %v2513
        %2638 = vmatprep.subr.bf16.mxu0 %v2512
        %2639 = vmatpush1.bf16.msra.mxu0 %v2511
        %2640 = vmatprep.subr.bf16.mxu0 %v2510
        %2641 = vmatpush1.bf16.msra.mxu0 %v2509
        %2642 = vmatprep.subr.bf16.mxu0 %v2508
        %2643 = vmatpush1.bf16.msra.mxu0 %v2507
        %2644 = vmatprep.subr.bf16.mxu0 %v2506
        %2645 = vmatpush1.bf16.msra.mxu0 %v2505
        %2646 = vmatprep.subr.bf16.mxu0 %v2504
        %2647 = vmatpush1.bf16.msra.mxu0 %v2503
        %2648 = vmatprep.subr.bf16.mxu0 %v2502
        %2649 = vmatpush1.bf16.msra.mxu0 %v2501
        %2650 = vmatprep.subr.bf16.mxu0 %v2500
        %2651 = vmatpush1.bf16.msra.mxu0 %v2499
        %2652 = vmatprep.subr.bf16.mxu0 %v2530
        %2653 = vmatpush2.bf16.msra.mxu0 %v2529
        %2654 = vmatprep.subr.bf16.mxu0 %v2528
        %2655 = vmatpush2.bf16.msra.mxu0 %v2527
        %2656 = vmatprep.subr.bf16.mxu0 %v2526
        %2657 = vmatpush2.bf16.msra.mxu0 %v2525
        %2658 = vmatprep.subr.bf16.mxu0 %v2524
        %2659 = vmatpush2.bf16.msra.mxu0 %v2523
        %2660 = vmatprep.subr.bf16.mxu0 %v2522
        %2661 = vmatpush2.bf16.msra.mxu0 %v2521
        %2662 = vmatprep.subr.bf16.mxu0 %v2520
        %2663 = vmatpush2.bf16.msra.mxu0 %v2519
        %2664 = vmatprep.subr.bf16.mxu0 %v2518
        %2665 = vmatpush2.bf16.msra.mxu0 %v2517
        %2666 = vmatprep.subr.bf16.mxu0 %v2516
        %2667 = vmatpush2.bf16.msra.mxu0 %v2515
        %2668 = vmatprep.mubr.bf16.mxu0 %v2350
        %2669 = vmatmul.mubr.bf16.gmra.mxu0 %v2349
        %v2670 = vpop.f32.mrf.mxu0
        %v2671 = vadd.f32 %v2396, %v2670
        %v2672 = vpop.f32.mrf.mxu0
        %v2673 = vadd.f32 %v2400, %v2672
        %v2674 = vpop.f32.mrf.mxu0
        %v2675 = vadd.f32 %v2396, %v2674
        %v2676 = vpop.f32.mrf.mxu0
        %v2677 = vadd.f32 %v2400, %v2676
        %2678 = vmatprep.mubr.bf16.mxu0 %v2352
        %2679 = vmatmul.mubr.bf16.gmra.mxu0 %v2351
        %v2680 = vpop.f32.mrf.mxu0
        %v2681 = vadd.f32 %v2396, %v2680
        %v2682 = vpop.f32.mrf.mxu0
        %v2683 = vadd.f32 %v2400, %v2682
        %v2684 = vpop.f32.mrf.mxu0
        %v2685 = vadd.f32 %v2396, %v2684
        %v2686 = vpop.f32.mrf.mxu0
        %v2687 = vadd.f32 %v2400, %v2686
        %2688 = vmatprep.mubr.bf16.mxu0 %v2354
        %2689 = vmatmul.mubr.bf16.gmra.mxu0 %v2353
        %v2690 = vpop.f32.mrf.mxu0
        %v2691 = vadd.f32 %v2396, %v2690
        %v2692 = vpop.f32.mrf.mxu0
        %v2693 = vadd.f32 %v2400, %v2692
        %v2694 = vpop.f32.mrf.mxu0
        %v2695 = vadd.f32 %v2396, %v2694
        %v2696 = vpop.f32.mrf.mxu0
        %v2697 = vadd.f32 %v2400, %v2696
        %2698 = vmatprep.mubr.bf16.mxu0 %v2356
        %2699 = vmatmul.mubr.bf16.gmra.mxu0 %v2355
        %v2700 = vpop.f32.mrf.mxu0
        %v2701 = vadd.f32 %v2396, %v2700
        %v2702 = vpop.f32.mrf.mxu0
        %v2703 = vadd.f32 %v2400, %v2702
        %v2704 = vpop.f32.mrf.mxu0
        %v2705 = vadd.f32 %v2396, %v2704
        %v2706 = vpop.f32.mrf.mxu0
        %v2707 = vadd.f32 %v2400, %v2706
        %2708 = vdwg.mxu0
        %v2709 = vmax.f32 %v2598, 0.0
        %v2710 = vmax.f32 %v2600, 0.0
        %v2711 = vmax.f32 %v2602, 0.0
        %v2712 = vmax.f32 %v2604, 0.0
        %v2713 = vmax.f32 %v2608, 0.0
        %v2714 = vmax.f32 %v2610, 0.0
        %v2715 = vmax.f32 %v2612, 0.0
        %v2716 = vmax.f32 %v2614, 0.0
        %v2717 = vmax.f32 %v2618, 0.0
        %v2718 = vmax.f32 %v2620, 0.0
        %v2719 = vmax.f32 %v2622, 0.0
        %v2720 = vmax.f32 %v2624, 0.0
        %v2721 = vmax.f32 %v2628, 0.0
        %v2722 = vmax.f32 %v2630, 0.0
        %v2723 = vmax.f32 %v2632, 0.0
        %v2724 = vmax.f32 %v2634, 0.0
        %v2725 = vpack.c.bf16 %v2711, %v2709
        %v2726 = vpack.c.bf16 %v2712, %v2710
        %v2727 = vpack.c.bf16 %v2715, %v2713
        %v2728 = vpack.c.bf16 %v2716, %v2714
        %v2729 = vpack.c.bf16 %v2719, %v2717
        %v2730 = vpack.c.bf16 %v2720, %v2718
        %v2731 = vpack.c.bf16 %v2723, %v2721
        %v2732 = vpack.c.bf16 %v2724, %v2722
        %v2733 = vmax.f32 %v2671, 0.0
        %v2734 = vmax.f32 %v2673, 0.0
        %v2735 = vmax.f32 %v2675, 0.0
        %v2736 = vmax.f32 %v2677, 0.0
        %v2737 = vmax.f32 %v2681, 0.0
        %v2738 = vmax.f32 %v2683, 0.0
        %v2739 = vmax.f32 %v2685, 0.0
        %v2740 = vmax.f32 %v2687, 0.0
        %v2741 = vmax.f32 %v2691, 0.0
        %v2742 = vmax.f32 %v2693, 0.0
        %v2743 = vmax.f32 %v2695, 0.0
        %v2744 = vmax.f32 %v2697, 0.0
        %v2745 = vmax.f32 %v2701, 0.0
        %v2746 = vmax.f32 %v2703, 0.0
        %v2747 = vmax.f32 %v2705, 0.0
        %v2748 = vmax.f32 %v2707, 0.0
        %v2749 = vpack.c.bf16 %v2735, %v2733
        %v2750 = vpack.c.bf16 %v2736, %v2734
        %v2751 = vpack.c.bf16 %v2739, %v2737
        %v2752 = vpack.c.bf16 %v2740, %v2738
        %v2753 = vpack.c.bf16 %v2743, %v2741
        %v2754 = vpack.c.bf16 %v2744, %v2742
        %v2755 = vpack.c.bf16 %v2747, %v2745
        %v2756 = vpack.c.bf16 %v2748, %v2746
        %s2757 = scalar_lea.vmem [#allocation2], 1280
        %v2758 = vld [vmem:[%s2757] sm:$0xff]
        %v2759 = vld [vmem:[%s2757 + $0x8] sm:$0xff]
        %v2760 = vld [vmem:[%s2757 + $0x10] sm:$0xff]
        %v2761 = vld [vmem:[%s2757 + $0x18] sm:$0xff]
        %v2762 = vld [vmem:[%s2757 + $0x20] sm:$0xff]
        %v2763 = vld [vmem:[%s2757 + $0x28] sm:$0xff]
        %v2764 = vld [vmem:[%s2757 + $0x30] sm:$0xff]
        %v2765 = vld [vmem:[%s2757 + $0x38] sm:$0xff]
        %v2766 = vld [vmem:[%s2757 + $0x40] sm:$0xff]
        %v2767 = vld [vmem:[%s2757 + $0x48] sm:$0xff]
        %v2768 = vld [vmem:[%s2757 + $0x50] sm:$0xff]
        %v2769 = vld [vmem:[%s2757 + $0x58] sm:$0xff]
        %v2770 = vld [vmem:[%s2757 + $0x60] sm:$0xff]
        %v2771 = vld [vmem:[%s2757 + $0x68] sm:$0xff]
        %v2772 = vld [vmem:[%s2757 + $0x70] sm:$0xff]
        %v2773 = vld [vmem:[%s2757 + $0x78] sm:$0xff]
        %v2774 = vld [vmem:[%s2757 + $0x80] sm:$0xff]
        %v2775 = vld [vmem:[%s2757 + $0x88] sm:$0xff]
        %v2776 = vld [vmem:[%s2757 + $0x90] sm:$0xff]
        %v2777 = vld [vmem:[%s2757 + $0x98] sm:$0xff]
        %v2778 = vld [vmem:[%s2757 + $0xa0] sm:$0xff]
        %v2779 = vld [vmem:[%s2757 + $0xa8] sm:$0xff]
        %v2780 = vld [vmem:[%s2757 + $0xb0] sm:$0xff]
        %v2781 = vld [vmem:[%s2757 + $0xb8] sm:$0xff]
        %v2782 = vld [vmem:[%s2757 + $0xc0] sm:$0xff]
        %v2783 = vld [vmem:[%s2757 + $0xc8] sm:$0xff]
        %v2784 = vld [vmem:[%s2757 + $0xd0] sm:$0xff]
        %v2785 = vld [vmem:[%s2757 + $0xd8] sm:$0xff]
        %v2786 = vld [vmem:[%s2757 + $0xe0] sm:$0xff]
        %v2787 = vld [vmem:[%s2757 + $0xe8] sm:$0xff]
        %v2788 = vld [vmem:[%s2757 + $0xf0] sm:$0xff]
        %v2789 = vld [vmem:[%s2757 + $0xf8] sm:$0xff]
        %s2790 = scalar_lea.vmem %s4, 10
        %v2791 = vld [vmem:[%s2790] sm:$0x3]
        %v2793 = vlaneseq
        %v2794 = vshrl.u32 %v2793, 7
        %v2795 = vsub.s32 0, %v2794
        %v2796 = vrot.slane %v2791, %v2795
        %v2797 = vlaneseq
        %v2798 = vshrl.u32 %v2797, 7
        %v2799 = vsub.s32 1, %v2798
        %v2800 = vrot.slane %v2791, %v2799
        %v2835 = vunpack.c.l.b16 %v2758
        %v2836 = vunpack.c.h.b16 %v2758
        %v2837 = vunpack.c.l.b16 %v2759
        %v2838 = vunpack.c.h.b16 %v2759
        %v2839 = vunpack.c.l.b16 %v2760
        %v2840 = vunpack.c.h.b16 %v2760
        %v2841 = vunpack.c.l.b16 %v2761
        %v2842 = vunpack.c.h.b16 %v2761
        %v2843 = vunpack.c.l.b16 %v2762
        %v2844 = vunpack.c.h.b16 %v2762
        %v2845 = vunpack.c.l.b16 %v2763
        %v2846 = vunpack.c.h.b16 %v2763
        %v2847 = vunpack.c.l.b16 %v2764
        %v2848 = vunpack.c.h.b16 %v2764
        %v2849 = vunpack.c.l.b16 %v2765
        %v2850 = vunpack.c.h.b16 %v2765
        %v2851 = vunpack.c.l.b16 %v2766
        %v2852 = vunpack.c.h.b16 %v2766
        %v2853 = vunpack.c.l.b16 %v2767
        %v2854 = vunpack.c.h.b16 %v2767
        %v2855 = vunpack.c.l.b16 %v2768
        %v2856 = vunpack.c.h.b16 %v2768
        %v2857 = vunpack.c.l.b16 %v2769
        %v2858 = vunpack.c.h.b16 %v2769
        %v2859 = vunpack.c.l.b16 %v2770
        %v2860 = vunpack.c.h.b16 %v2770
        %v2861 = vunpack.c.l.b16 %v2771
        %v2862 = vunpack.c.h.b16 %v2771
        %v2863 = vunpack.c.l.b16 %v2772
        %v2864 = vunpack.c.h.b16 %v2772
        %v2865 = vunpack.c.l.b16 %v2773
        %v2866 = vunpack.c.h.b16 %v2773
        %v2867 = vunpack.c.l.b16 %v2774
        %v2868 = vunpack.c.h.b16 %v2774
        %v2869 = vunpack.c.l.b16 %v2775
        %v2870 = vunpack.c.h.b16 %v2775
        %v2871 = vunpack.c.l.b16 %v2776
        %v2872 = vunpack.c.h.b16 %v2776
        %v2873 = vunpack.c.l.b16 %v2777
        %v2874 = vunpack.c.h.b16 %v2777
        %v2875 = vunpack.c.l.b16 %v2778
        %v2876 = vunpack.c.h.b16 %v2778
        %v2877 = vunpack.c.l.b16 %v2779
        %v2878 = vunpack.c.h.b16 %v2779
        %v2879 = vunpack.c.l.b16 %v2780
        %v2880 = vunpack.c.h.b16 %v2780
        %v2881 = vunpack.c.l.b16 %v2781
        %v2882 = vunpack.c.h.b16 %v2781
        %v2883 = vunpack.c.l.b16 %v2782
        %v2884 = vunpack.c.h.b16 %v2782
        %v2885 = vunpack.c.l.b16 %v2783
        %v2886 = vunpack.c.h.b16 %v2783
        %v2887 = vunpack.c.l.b16 %v2784
        %v2888 = vunpack.c.h.b16 %v2784
        %v2889 = vunpack.c.l.b16 %v2785
        %v2890 = vunpack.c.h.b16 %v2785
        %v2891 = vunpack.c.l.b16 %v2786
        %v2892 = vunpack.c.h.b16 %v2786
        %v2893 = vunpack.c.l.b16 %v2787
        %v2894 = vunpack.c.h.b16 %v2787
        %v2895 = vunpack.c.l.b16 %v2788
        %v2896 = vunpack.c.h.b16 %v2788
        %v2897 = vunpack.c.l.b16 %v2789
        %v2898 = vunpack.c.h.b16 %v2789
        %v2899 = vpack.c.b16 %v2837, %v2835
        %v2900 = vpack.c.b16 %v2838, %v2836
        %v2901 = vpack.c.b16 %v2841, %v2839
        %v2902 = vpack.c.b16 %v2842, %v2840
        %v2903 = vpack.c.b16 %v2845, %v2843
        %v2904 = vpack.c.b16 %v2846, %v2844
        %v2905 = vpack.c.b16 %v2849, %v2847
        %v2906 = vpack.c.b16 %v2850, %v2848
        %v2907 = vpack.c.b16 %v2853, %v2851
        %v2908 = vpack.c.b16 %v2854, %v2852
        %v2909 = vpack.c.b16 %v2857, %v2855
        %v2910 = vpack.c.b16 %v2858, %v2856
        %v2911 = vpack.c.b16 %v2861, %v2859
        %v2912 = vpack.c.b16 %v2862, %v2860
        %v2913 = vpack.c.b16 %v2865, %v2863
        %v2914 = vpack.c.b16 %v2866, %v2864
        %v2915 = vpack.c.b16 %v2869, %v2867
        %v2916 = vpack.c.b16 %v2870, %v2868
        %v2917 = vpack.c.b16 %v2873, %v2871
        %v2918 = vpack.c.b16 %v2874, %v2872
        %v2919 = vpack.c.b16 %v2877, %v2875
        %v2920 = vpack.c.b16 %v2878, %v2876
        %v2921 = vpack.c.b16 %v2881, %v2879
        %v2922 = vpack.c.b16 %v2882, %v2880
        %v2923 = vpack.c.b16 %v2885, %v2883
        %v2924 = vpack.c.b16 %v2886, %v2884
        %v2925 = vpack.c.b16 %v2889, %v2887
        %v2926 = vpack.c.b16 %v2890, %v2888
        %v2927 = vpack.c.b16 %v2893, %v2891
        %v2928 = vpack.c.b16 %v2894, %v2892
        %v2929 = vpack.c.b16 %v2897, %v2895
        %v2930 = vpack.c.b16 %v2898, %v2896
        %2963 = vmatprep.subr.bf16.mxu0 %v2914
        %2964 = vmatpush1.bf16.msra.mxu0 %v2913
        %2965 = vmatprep.subr.bf16.mxu0 %v2912
        %2966 = vmatpush1.bf16.msra.mxu0 %v2911
        %2967 = vmatprep.subr.bf16.mxu0 %v2910
        %2968 = vmatpush1.bf16.msra.mxu0 %v2909
        %2969 = vmatprep.subr.bf16.mxu0 %v2908
        %2970 = vmatpush1.bf16.msra.mxu0 %v2907
        %2971 = vmatprep.subr.bf16.mxu0 %v2906
        %2972 = vmatpush1.bf16.msra.mxu0 %v2905
        %2973 = vmatprep.subr.bf16.mxu0 %v2904
        %2974 = vmatpush1.bf16.msra.mxu0 %v2903
        %2975 = vmatprep.subr.bf16.mxu0 %v2902
        %2976 = vmatpush1.bf16.msra.mxu0 %v2901
        %2977 = vmatprep.subr.bf16.mxu0 %v2900
        %2978 = vmatpush1.bf16.msra.mxu0 %v2899
        %2979 = vmatprep.subr.bf16.mxu0 %v2930
        %2980 = vmatpush2.bf16.msra.mxu0 %v2929
        %2981 = vmatprep.subr.bf16.mxu0 %v2928
        %2982 = vmatpush2.bf16.msra.mxu0 %v2927
        %2983 = vmatprep.subr.bf16.mxu0 %v2926
        %2984 = vmatpush2.bf16.msra.mxu0 %v2925
        %2985 = vmatprep.subr.bf16.mxu0 %v2924
        %2986 = vmatpush2.bf16.msra.mxu0 %v2923
        %2987 = vmatprep.subr.bf16.mxu0 %v2922
        %2988 = vmatpush2.bf16.msra.mxu0 %v2921
        %2989 = vmatprep.subr.bf16.mxu0 %v2920
        %2990 = vmatpush2.bf16.msra.mxu0 %v2919
        %2991 = vmatprep.subr.bf16.mxu0 %v2918
        %2992 = vmatpush2.bf16.msra.mxu0 %v2917
        %2993 = vmatprep.subr.bf16.mxu0 %v2916
        %2994 = vmatpush2.bf16.msra.mxu0 %v2915
        %2995 = vmatprep.mubr.bf16.mxu0 %v2726
        %2996 = vmatmul.mubr.bf16.gmra.mxu0 %v2725
        %v2997 = vpop.f32.mrf.mxu0
        %v2998 = vadd.f32 %v2796, %v2997
        %v2999 = vpop.f32.mrf.mxu0
        %v3000 = vadd.f32 %v2800, %v2999
        %v3001 = vpop.f32.mrf.mxu0
        %v3002 = vadd.f32 %v2796, %v3001
        %v3003 = vpop.f32.mrf.mxu0
        %v3004 = vadd.f32 %v2800, %v3003
        %3005 = vmatprep.mubr.bf16.mxu0 %v2728
        %3006 = vmatmul.mubr.bf16.gmra.mxu0 %v2727
        %v3007 = vpop.f32.mrf.mxu0
        %v3008 = vadd.f32 %v2796, %v3007
        %v3009 = vpop.f32.mrf.mxu0
        %v3010 = vadd.f32 %v2800, %v3009
        %v3011 = vpop.f32.mrf.mxu0
        %v3012 = vadd.f32 %v2796, %v3011
        %v3013 = vpop.f32.mrf.mxu0
        %v3014 = vadd.f32 %v2800, %v3013
        %3015 = vmatprep.mubr.bf16.mxu0 %v2730
        %3016 = vmatmul.mubr.bf16.gmra.mxu0 %v2729
        %v3017 = vpop.f32.mrf.mxu0
        %v3018 = vadd.f32 %v2796, %v3017
        %v3019 = vpop.f32.mrf.mxu0
        %v3020 = vadd.f32 %v2800, %v3019
        %v3021 = vpop.f32.mrf.mxu0
        %v3022 = vadd.f32 %v2796, %v3021
        %v3023 = vpop.f32.mrf.mxu0
        %v3024 = vadd.f32 %v2800, %v3023
        %3025 = vmatprep.mubr.bf16.mxu0 %v2732
        %3026 = vmatmul.mubr.bf16.gmra.mxu0 %v2731
        %v3027 = vpop.f32.mrf.mxu0
        %v3028 = vadd.f32 %v2796, %v3027
        %v3029 = vpop.f32.mrf.mxu0
        %v3030 = vadd.f32 %v2800, %v3029
        %v3031 = vpop.f32.mrf.mxu0
        %v3032 = vadd.f32 %v2796, %v3031
        %v3033 = vpop.f32.mrf.mxu0
        %v3034 = vadd.f32 %v2800, %v3033
        %3035 = vdwg.mxu0
        %3036 = vmatprep.subr.bf16.mxu0 %v2914
        %3037 = vmatpush1.bf16.msra.mxu0 %v2913
        %3038 = vmatprep.subr.bf16.mxu0 %v2912
        %3039 = vmatpush1.bf16.msra.mxu0 %v2911
        %3040 = vmatprep.subr.bf16.mxu0 %v2910
        %3041 = vmatpush1.bf16.msra.mxu0 %v2909
        %3042 = vmatprep.subr.bf16.mxu0 %v2908
        %3043 = vmatpush1.bf16.msra.mxu0 %v2907
        %3044 = vmatprep.subr.bf16.mxu0 %v2906
        %3045 = vmatpush1.bf16.msra.mxu0 %v2905
        %3046 = vmatprep.subr.bf16.mxu0 %v2904
        %3047 = vmatpush1.bf16.msra.mxu0 %v2903
        %3048 = vmatprep.subr.bf16.mxu0 %v2902
        %3049 = vmatpush1.bf16.msra.mxu0 %v2901
        %3050 = vmatprep.subr.bf16.mxu0 %v2900
        %3051 = vmatpush1.bf16.msra.mxu0 %v2899
        %3052 = vmatprep.subr.bf16.mxu0 %v2930
        %3053 = vmatpush2.bf16.msra.mxu0 %v2929
        %3054 = vmatprep.subr.bf16.mxu0 %v2928
        %3055 = vmatpush2.bf16.msra.mxu0 %v2927
        %3056 = vmatprep.subr.bf16.mxu0 %v2926
        %3057 = vmatpush2.bf16.msra.mxu0 %v2925
        %3058 = vmatprep.subr.bf16.mxu0 %v2924
        %3059 = vmatpush2.bf16.msra.mxu0 %v2923
        %3060 = vmatprep.subr.bf16.mxu0 %v2922
        %3061 = vmatpush2.bf16.msra.mxu0 %v2921
        %3062 = vmatprep.subr.bf16.mxu0 %v2920
        %3063 = vmatpush2.bf16.msra.mxu0 %v2919
        %3064 = vmatprep.subr.bf16.mxu0 %v2918
        %3065 = vmatpush2.bf16.msra.mxu0 %v2917
        %3066 = vmatprep.subr.bf16.mxu0 %v2916
        %3067 = vmatpush2.bf16.msra.mxu0 %v2915
        %3068 = vmatprep.mubr.bf16.mxu0 %v2750
        %3069 = vmatmul.mubr.bf16.gmra.mxu0 %v2749
        %v3070 = vpop.f32.mrf.mxu0
        %v3071 = vadd.f32 %v2796, %v3070
        %v3072 = vpop.f32.mrf.mxu0
        %v3073 = vadd.f32 %v2800, %v3072
        %v3074 = vpop.f32.mrf.mxu0
        %v3075 = vadd.f32 %v2796, %v3074
        %v3076 = vpop.f32.mrf.mxu0
        %v3077 = vadd.f32 %v2800, %v3076
        %3078 = vmatprep.mubr.bf16.mxu0 %v2752
        %3079 = vmatmul.mubr.bf16.gmra.mxu0 %v2751
        %v3080 = vpop.f32.mrf.mxu0
        %v3081 = vadd.f32 %v2796, %v3080
        %v3082 = vpop.f32.mrf.mxu0
        %v3083 = vadd.f32 %v2800, %v3082
        %v3084 = vpop.f32.mrf.mxu0
        %v3085 = vadd.f32 %v2796, %v3084
        %v3086 = vpop.f32.mrf.mxu0
        %v3087 = vadd.f32 %v2800, %v3086
        %3088 = vmatprep.mubr.bf16.mxu0 %v2754
        %3089 = vmatmul.mubr.bf16.gmra.mxu0 %v2753
        %v3090 = vpop.f32.mrf.mxu0
        %v3091 = vadd.f32 %v2796, %v3090
        %v3092 = vpop.f32.mrf.mxu0
        %v3093 = vadd.f32 %v2800, %v3092
        %v3094 = vpop.f32.mrf.mxu0
        %v3095 = vadd.f32 %v2796, %v3094
        %v3096 = vpop.f32.mrf.mxu0
        %v3097 = vadd.f32 %v2800, %v3096
        %3098 = vmatprep.mubr.bf16.mxu0 %v2756
        %3099 = vmatmul.mubr.bf16.gmra.mxu0 %v2755
        %v3100 = vpop.f32.mrf.mxu0
        %v3101 = vadd.f32 %v2796, %v3100
        %v3102 = vpop.f32.mrf.mxu0
        %v3103 = vadd.f32 %v2800, %v3102
        %v3104 = vpop.f32.mrf.mxu0
        %v3105 = vadd.f32 %v2796, %v3104
        %v3106 = vpop.f32.mrf.mxu0
        %v3107 = vadd.f32 %v2800, %v3106
        %3108 = vdwg.mxu0
        %v3109 = vunpack.c.l.bf16 %v2341
        %v3110 = vunpack.c.l.bf16 %v2342
        %v3111 = vunpack.c.h.bf16 %v2341
        %v3112 = vunpack.c.h.bf16 %v2342
        %v3113 = vunpack.c.l.bf16 %v2343
        %v3114 = vunpack.c.l.bf16 %v2344
        %v3115 = vunpack.c.h.bf16 %v2343
        %v3116 = vunpack.c.h.bf16 %v2344
        %v3117 = vunpack.c.l.bf16 %v2345
        %v3118 = vunpack.c.l.bf16 %v2346
        %v3119 = vunpack.c.h.bf16 %v2345
        %v3120 = vunpack.c.h.bf16 %v2346
        %v3121 = vunpack.c.l.bf16 %v2347
        %v3122 = vunpack.c.l.bf16 %v2348
        %v3123 = vunpack.c.h.bf16 %v2347
        %v3124 = vunpack.c.h.bf16 %v2348
        %v3125 = vadd.f32 %v2998, %v3109
        %v3126 = vadd.f32 %v3000, %v3110
        %v3127 = vadd.f32 %v3002, %v3111
        %v3128 = vadd.f32 %v3004, %v3112
        %v3129 = vadd.f32 %v3008, %v3113
        %v3130 = vadd.f32 %v3010, %v3114
        %v3131 = vadd.f32 %v3012, %v3115
        %v3132 = vadd.f32 %v3014, %v3116
        %v3133 = vadd.f32 %v3018, %v3117
        %v3134 = vadd.f32 %v3020, %v3118
        %v3135 = vadd.f32 %v3022, %v3119
        %v3136 = vadd.f32 %v3024, %v3120
        %v3137 = vadd.f32 %v3028, %v3121
        %v3138 = vadd.f32 %v3030, %v3122
        %v3139 = vadd.f32 %v3032, %v3123
        %v3140 = vadd.f32 %v3034, %v3124
        %v3141 = vmax.f32 %v3125, 0.0
        %v3142 = vmax.f32 %v3126, 0.0
        %v3143 = vmax.f32 %v3127, 0.0
        %v3144 = vmax.f32 %v3128, 0.0
        %v3145 = vmax.f32 %v3129, 0.0
        %v3146 = vmax.f32 %v3130, 0.0
        %v3147 = vmax.f32 %v3131, 0.0
        %v3148 = vmax.f32 %v3132, 0.0
        %v3149 = vmax.f32 %v3133, 0.0
        %v3150 = vmax.f32 %v3134, 0.0
        %v3151 = vmax.f32 %v3135, 0.0
        %v3152 = vmax.f32 %v3136, 0.0
        %v3153 = vmax.f32 %v3137, 0.0
        %v3154 = vmax.f32 %v3138, 0.0
        %v3155 = vmax.f32 %v3139, 0.0
        %v3156 = vmax.f32 %v3140, 0.0
        %v3157 = vunpack.c.l.bf16 %v2349
        %v3158 = vunpack.c.l.bf16 %v2350
        %v3159 = vunpack.c.h.bf16 %v2349
        %v3160 = vunpack.c.h.bf16 %v2350
        %v3161 = vunpack.c.l.bf16 %v2351
        %v3162 = vunpack.c.l.bf16 %v2352
        %v3163 = vunpack.c.h.bf16 %v2351
        %v3164 = vunpack.c.h.bf16 %v2352
        %v3165 = vunpack.c.l.bf16 %v2353
        %v3166 = vunpack.c.l.bf16 %v2354
        %v3167 = vunpack.c.h.bf16 %v2353
        %v3168 = vunpack.c.h.bf16 %v2354
        %v3169 = vunpack.c.l.bf16 %v2355
        %v3170 = vunpack.c.l.bf16 %v2356
        %v3171 = vunpack.c.h.bf16 %v2355
        %v3172 = vunpack.c.h.bf16 %v2356
        %v3173 = vadd.f32 %v3071, %v3157
        %v3174 = vadd.f32 %v3073, %v3158
        %v3175 = vadd.f32 %v3075, %v3159
        %v3176 = vadd.f32 %v3077, %v3160
        %v3177 = vadd.f32 %v3081, %v3161
        %v3178 = vadd.f32 %v3083, %v3162
        %v3179 = vadd.f32 %v3085, %v3163
        %v3180 = vadd.f32 %v3087, %v3164
        %v3181 = vadd.f32 %v3091, %v3165
        %v3182 = vadd.f32 %v3093, %v3166
        %v3183 = vadd.f32 %v3095, %v3167
        %v3184 = vadd.f32 %v3097, %v3168
        %v3185 = vadd.f32 %v3101, %v3169
        %v3186 = vadd.f32 %v3103, %v3170
        %v3187 = vadd.f32 %v3105, %v3171
        %v3188 = vadd.f32 %v3107, %v3172
        %v3189 = vmax.f32 %v3173, 0.0
        %v3190 = vmax.f32 %v3174, 0.0
        %v3191 = vmax.f32 %v3175, 0.0
        %v3192 = vmax.f32 %v3176, 0.0
        %v3193 = vmax.f32 %v3177, 0.0
        %v3194 = vmax.f32 %v3178, 0.0
        %v3195 = vmax.f32 %v3179, 0.0
        %v3196 = vmax.f32 %v3180, 0.0
        %v3197 = vmax.f32 %v3181, 0.0
        %v3198 = vmax.f32 %v3182, 0.0
        %v3199 = vmax.f32 %v3183, 0.0
        %v3200 = vmax.f32 %v3184, 0.0
        %v3201 = vmax.f32 %v3185, 0.0
        %v3202 = vmax.f32 %v3186, 0.0
        %v3203 = vmax.f32 %v3187, 0.0
        %v3204 = vmax.f32 %v3188, 0.0
        %v3205 = vpack.c.bf16 %v3143, %v3141
        %v3206 = vpack.c.bf16 %v3144, %v3142
        %v3207 = vpack.c.bf16 %v3147, %v3145
        %v3208 = vpack.c.bf16 %v3148, %v3146
        %v3209 = vpack.c.bf16 %v3151, %v3149
        %v3210 = vpack.c.bf16 %v3152, %v3150
        %v3211 = vpack.c.bf16 %v3155, %v3153
        %v3212 = vpack.c.bf16 %v3156, %v3154
        %v3213 = vld [vmem:[%s5] sm:$0xf]
        %v3214 = vld [vmem:[%s5 + $0x4] sm:$0xf]
        %v3215 = vld [vmem:[%s5 + $0x8] sm:$0xf]
        %v3216 = vld [vmem:[%s5 + $0xc] sm:$0xf]
        %v3217 = vld [vmem:[%s5 + $0x10] sm:$0xf]
        %v3218 = vld [vmem:[%s5 + $0x14] sm:$0xf]
        %v3219 = vld [vmem:[%s5 + $0x18] sm:$0xf]
        %v3220 = vld [vmem:[%s5 + $0x1c] sm:$0xf]
        %v3221 = vld [vmem:[%s5 + $0x20] sm:$0xf]
        %v3222 = vld [vmem:[%s5 + $0x24] sm:$0xf]
        %v3223 = vld [vmem:[%s5 + $0x28] sm:$0xf]
        %v3224 = vld [vmem:[%s5 + $0x2c] sm:$0xf]
        %v3225 = vld [vmem:[%s5 + $0x30] sm:$0xf]
        %v3226 = vld [vmem:[%s5 + $0x34] sm:$0xf]
        %v3227 = vld [vmem:[%s5 + $0x38] sm:$0xf]
        %v3228 = vld [vmem:[%s5 + $0x3c] sm:$0xf]
        %v3229 = vld [vmem:[%s5 + $0x40] sm:$0xf]
        %v3230 = vld [vmem:[%s5 + $0x44] sm:$0xf]
        %v3231 = vld [vmem:[%s5 + $0x48] sm:$0xf]
        %v3232 = vld [vmem:[%s5 + $0x4c] sm:$0xf]
        %v3233 = vld [vmem:[%s5 + $0x50] sm:$0xf]
        %v3234 = vld [vmem:[%s5 + $0x54] sm:$0xf]
        %v3235 = vld [vmem:[%s5 + $0x58] sm:$0xf]
        %v3236 = vld [vmem:[%s5 + $0x5c] sm:$0xf]
        %v3237 = vld [vmem:[%s5 + $0x60] sm:$0xf]
        %v3238 = vld [vmem:[%s5 + $0x64] sm:$0xf]
        %v3239 = vld [vmem:[%s5 + $0x68] sm:$0xf]
        %v3240 = vld [vmem:[%s5 + $0x6c] sm:$0xf]
        %v3241 = vld [vmem:[%s5 + $0x70] sm:$0xf]
        %v3242 = vld [vmem:[%s5 + $0x74] sm:$0xf]
        %v3243 = vld [vmem:[%s5 + $0x78] sm:$0xf]
        %v3244 = vld [vmem:[%s5 + $0x7c] sm:$0xf]
        %v3245 = vld [vmem:[%s6] sm:$0x1]
        %v3247 = vlaneseq
        %v3248 = vshrl.u32 %v3247, 7
        %v3249 = vsub.s32 0, %v3248
        %v3250 = vrot.slane %v3245, %v3249
        %v3284 = vunpack.c.l.b16 %v3213
        %v3285 = vunpack.c.l.b16 %v3214
        %v3286 = vunpack.c.l.b16 %v3215
        %v3287 = vunpack.c.l.b16 %v3216
        %v3288 = vunpack.c.l.b16 %v3217
        %v3289 = vunpack.c.l.b16 %v3218
        %v3290 = vunpack.c.l.b16 %v3219
        %v3291 = vunpack.c.l.b16 %v3220
        %v3292 = vunpack.c.l.b16 %v3221
        %v3293 = vunpack.c.l.b16 %v3222
        %v3294 = vunpack.c.l.b16 %v3223
        %v3295 = vunpack.c.l.b16 %v3224
        %v3296 = vunpack.c.l.b16 %v3225
        %v3297 = vunpack.c.l.b16 %v3226
        %v3298 = vunpack.c.l.b16 %v3227
        %v3299 = vunpack.c.l.b16 %v3228
        %v3300 = vunpack.c.l.b16 %v3229
        %v3301 = vunpack.c.l.b16 %v3230
        %v3302 = vunpack.c.l.b16 %v3231
        %v3303 = vunpack.c.l.b16 %v3232
        %v3304 = vunpack.c.l.b16 %v3233
        %v3305 = vunpack.c.l.b16 %v3234
        %v3306 = vunpack.c.l.b16 %v3235
        %v3307 = vunpack.c.l.b16 %v3236
        %v3308 = vunpack.c.l.b16 %v3237
        %v3309 = vunpack.c.l.b16 %v3238
        %v3310 = vunpack.c.l.b16 %v3239
        %v3311 = vunpack.c.l.b16 %v3240
        %v3312 = vunpack.c.l.b16 %v3241
        %v3313 = vunpack.c.l.b16 %v3242
        %v3314 = vunpack.c.l.b16 %v3243
        %v3315 = vunpack.c.l.b16 %v3244
        %v3316 = vpack.c.b16 %v3285, %v3284
        %v3317 = vpack.c.b16 %v3287, %v3286
        %v3318 = vpack.c.b16 %v3289, %v3288
        %v3319 = vpack.c.b16 %v3291, %v3290
        %v3320 = vpack.c.b16 %v3293, %v3292
        %v3321 = vpack.c.b16 %v3295, %v3294
        %v3322 = vpack.c.b16 %v3297, %v3296
        %v3323 = vpack.c.b16 %v3299, %v3298
        %v3324 = vpack.c.b16 %v3301, %v3300
        %v3325 = vpack.c.b16 %v3303, %v3302
        %v3326 = vpack.c.b16 %v3305, %v3304
        %v3327 = vpack.c.b16 %v3307, %v3306
        %v3328 = vpack.c.b16 %v3309, %v3308
        %v3329 = vpack.c.b16 %v3311, %v3310
        %v3330 = vpack.c.b16 %v3313, %v3312
        %v3331 = vpack.c.b16 %v3315, %v3314
        %3348 = vmatprep.subr.bf16.mxu0 0
        %3349 = vmatpush1.bf16.msra.mxu0 %v3323
        %3350 = vmatprep.subr.bf16.mxu0 0
        %3351 = vmatpush1.bf16.msra.mxu0 %v3322
        %3352 = vmatprep.subr.bf16.mxu0 0
        %3353 = vmatpush1.bf16.msra.mxu0 %v3321
        %3354 = vmatprep.subr.bf16.mxu0 0
        %3355 = vmatpush1.bf16.msra.mxu0 %v3320
        %3356 = vmatprep.subr.bf16.mxu0 0
        %3357 = vmatpush1.bf16.msra.mxu0 %v3319
        %3358 = vmatprep.subr.bf16.mxu0 0
        %3359 = vmatpush1.bf16.msra.mxu0 %v3318
        %3360 = vmatprep.subr.bf16.mxu0 0
        %3361 = vmatpush1.bf16.msra.mxu0 %v3317
        %3362 = vmatprep.subr.bf16.mxu0 0
        %3363 = vmatpush1.bf16.msra.mxu0 %v3316
        %3364 = vmatprep.subr.bf16.mxu0 0
        %3365 = vmatpush2.bf16.msra.mxu0 %v3331
        %3366 = vmatprep.subr.bf16.mxu0 0
        %3367 = vmatpush2.bf16.msra.mxu0 %v3330
        %3368 = vmatprep.subr.bf16.mxu0 0
        %3369 = vmatpush2.bf16.msra.mxu0 %v3329
        %3370 = vmatprep.subr.bf16.mxu0 0
        %3371 = vmatpush2.bf16.msra.mxu0 %v3328
        %3372 = vmatprep.subr.bf16.mxu0 0
        %3373 = vmatpush2.bf16.msra.mxu0 %v3327
        %3374 = vmatprep.subr.bf16.mxu0 0
        %3375 = vmatpush2.bf16.msra.mxu0 %v3326
        %3376 = vmatprep.subr.bf16.mxu0 0
        %3377 = vmatpush2.bf16.msra.mxu0 %v3325
        %3378 = vmatprep.subr.bf16.mxu0 0
        %3379 = vmatpush2.bf16.msra.mxu0 %v3324
        %3380 = vmatprep.mubr.bf16.mxu0 %v3206
        %3381 = vmatmul.mubr.bf16.gmra.mxu0 %v3205
        %v3382 = vpop.f32.mrf.mxu0
        %v3383 = vadd.f32 %v3250, %v3382
        %v3384 = vpop.f32.mrf.mxu0
        %v3385 = vpop.f32.mrf.mxu0
        %v3386 = vadd.f32 %v3250, %v3385
        %v3387 = vpop.f32.mrf.mxu0
        %3388 = vmatprep.mubr.bf16.mxu0 %v3208
        %3389 = vmatmul.mubr.bf16.gmra.mxu0 %v3207
        %v3390 = vpop.f32.mrf.mxu0
        %v3391 = vadd.f32 %v3250, %v3390
        %v3392 = vpop.f32.mrf.mxu0
        %v3393 = vpop.f32.mrf.mxu0
        %v3394 = vadd.f32 %v3250, %v3393
        %v3395 = vpop.f32.mrf.mxu0
        %3396 = vmatprep.mubr.bf16.mxu0 %v3210
        %3397 = vmatmul.mubr.bf16.gmra.mxu0 %v3209
        %v3398 = vpop.f32.mrf.mxu0
        %v3399 = vadd.f32 %v3250, %v3398
        %v3400 = vpop.f32.mrf.mxu0
        %v3401 = vpop.f32.mrf.mxu0
        %v3402 = vadd.f32 %v3250, %v3401
        %v3403 = vpop.f32.mrf.mxu0
        %3404 = vmatprep.mubr.bf16.mxu0 %v3212
        %3405 = vmatmul.mubr.bf16.gmra.mxu0 %v3211
        %v3406 = vpop.f32.mrf.mxu0
        %v3407 = vadd.f32 %v3250, %v3406
        %v3408 = vpop.f32.mrf.mxu0
        %v3409 = vpop.f32.mrf.mxu0
        %v3410 = vadd.f32 %v3250, %v3409
        %v3411 = vpop.f32.mrf.mxu0
        %3412 = vdwg.mxu0
        %v3413 = vmax.f32 %v3383, 0.0
        %v3414 = vmax.f32 %v3386, 0.0
        %v3415 = vmax.f32 %v3391, 0.0
        %v3416 = vmax.f32 %v3394, 0.0
        %v3417 = vmax.f32 %v3399, 0.0
        %v3418 = vmax.f32 %v3402, 0.0
        %v3419 = vmax.f32 %v3407, 0.0
        %v3420 = vmax.f32 %v3410, 0.0
        %v3421 = vpack.c.bf16 %v3191, %v3189
        %v3422 = vpack.c.bf16 %v3192, %v3190
        %v3423 = vpack.c.bf16 %v3195, %v3193
        %v3424 = vpack.c.bf16 %v3196, %v3194
        %v3425 = vpack.c.bf16 %v3199, %v3197
        %v3426 = vpack.c.bf16 %v3200, %v3198
        %v3427 = vpack.c.bf16 %v3203, %v3201
        %v3428 = vpack.c.bf16 %v3204, %v3202
        %3429 = vmatprep.subr.bf16.mxu0 0
        %3430 = vmatpush1.bf16.msra.mxu0 %v3323
        %3431 = vmatprep.subr.bf16.mxu0 0
        %3432 = vmatpush1.bf16.msra.mxu0 %v3322
        %3433 = vmatprep.subr.bf16.mxu0 0
        %3434 = vmatpush1.bf16.msra.mxu0 %v3321
        %3435 = vmatprep.subr.bf16.mxu0 0
        %3436 = vmatpush1.bf16.msra.mxu0 %v3320
        %3437 = vmatprep.subr.bf16.mxu0 0
        %3438 = vmatpush1.bf16.msra.mxu0 %v3319
        %3439 = vmatprep.subr.bf16.mxu0 0
        %3440 = vmatpush1.bf16.msra.mxu0 %v3318
        %3441 = vmatprep.subr.bf16.mxu0 0
        %3442 = vmatpush1.bf16.msra.mxu0 %v3317
        %3443 = vmatprep.subr.bf16.mxu0 0
        %3444 = vmatpush1.bf16.msra.mxu0 %v3316
        %3445 = vmatprep.subr.bf16.mxu0 0
        %3446 = vmatpush2.bf16.msra.mxu0 %v3331
        %3447 = vmatprep.subr.bf16.mxu0 0
        %3448 = vmatpush2.bf16.msra.mxu0 %v3330
        %3449 = vmatprep.subr.bf16.mxu0 0
        %3450 = vmatpush2.bf16.msra.mxu0 %v3329
        %3451 = vmatprep.subr.bf16.mxu0 0
        %3452 = vmatpush2.bf16.msra.mxu0 %v3328
        %3453 = vmatprep.subr.bf16.mxu0 0
        %3454 = vmatpush2.bf16.msra.mxu0 %v3327
        %3455 = vmatprep.subr.bf16.mxu0 0
        %3456 = vmatpush2.bf16.msra.mxu0 %v3326
        %3457 = vmatprep.subr.bf16.mxu0 0
        %3458 = vmatpush2.bf16.msra.mxu0 %v3325
        %3459 = vmatprep.subr.bf16.mxu0 0
        %3460 = vmatpush2.bf16.msra.mxu0 %v3324
        %3461 = vmatprep.mubr.bf16.mxu0 %v3422
        %3462 = vmatmul.mubr.bf16.gmra.mxu0 %v3421
        %v3463 = vpop.f32.mrf.mxu0
        %v3464 = vadd.f32 %v3250, %v3463
        %v3465 = vpop.f32.mrf.mxu0
        %v3466 = vpop.f32.mrf.mxu0
        %v3467 = vadd.f32 %v3250, %v3466
        %v3468 = vpop.f32.mrf.mxu0
        %3469 = vmatprep.mubr.bf16.mxu0 %v3424
        %3470 = vmatmul.mubr.bf16.gmra.mxu0 %v3423
        %v3471 = vpop.f32.mrf.mxu0
        %v3472 = vadd.f32 %v3250, %v3471
        %v3473 = vpop.f32.mrf.mxu0
        %v3474 = vpop.f32.mrf.mxu0
        %v3475 = vadd.f32 %v3250, %v3474
        %v3476 = vpop.f32.mrf.mxu0
        %3477 = vmatprep.mubr.bf16.mxu0 %v3426
        %3478 = vmatmul.mubr.bf16.gmra.mxu0 %v3425
        %v3479 = vpop.f32.mrf.mxu0
        %v3480 = vadd.f32 %v3250, %v3479
        %v3481 = vpop.f32.mrf.mxu0
        %v3482 = vpop.f32.mrf.mxu0
        %v3483 = vadd.f32 %v3250, %v3482
        %v3484 = vpop.f32.mrf.mxu0
        %3485 = vmatprep.mubr.bf16.mxu0 %v3428
        %3486 = vmatmul.mubr.bf16.gmra.mxu0 %v3427
        %v3487 = vpop.f32.mrf.mxu0
        %v3488 = vadd.f32 %v3250, %v3487
        %v3489 = vpop.f32.mrf.mxu0
        %v3490 = vpop.f32.mrf.mxu0
        %v3491 = vadd.f32 %v3250, %v3490
        %v3492 = vpop.f32.mrf.mxu0
        %3493 = vdwg.mxu0
        %v3494 = vmax.f32 %v3464, 0.0
        %v3495 = vmax.f32 %v3467, 0.0
        %v3496 = vmax.f32 %v3472, 0.0
        %v3497 = vmax.f32 %v3475, 0.0
        %v3498 = vmax.f32 %v3480, 0.0
        %v3499 = vmax.f32 %v3483, 0.0
        %v3500 = vmax.f32 %v3488, 0.0
        %v3501 = vmax.f32 %v3491, 0.0
        %v3502 = vpack.c.bf16 %v3414, %v3413
        %v3503 = vpack.c.bf16 %v3416, %v3415
        %v3504 = vpack.c.bf16 %v3418, %v3417
        %v3505 = vpack.c.bf16 %v3420, %v3419
        %v3506 = vld [vmem:[%s7] sm:$0xf]
        %v3507 = vld [vmem:[%s7 + $0x4] sm:$0xf]
        %v3508 = vld [vmem:[%s7 + $0x8] sm:$0xf]
        %v3509 = vld [vmem:[%s7 + $0xc] sm:$0xf]
        %v3510 = vld [vmem:[%s7 + $0x10] sm:$0xf]
        %v3511 = vld [vmem:[%s7 + $0x14] sm:$0xf]
        %v3512 = vld [vmem:[%s7 + $0x18] sm:$0xf]
        %v3513 = vld [vmem:[%s7 + $0x1c] sm:$0xf]
        %v3514 = vld [vmem:[%s7 + $0x20] sm:$0xf]
        %v3515 = vld [vmem:[%s7 + $0x24] sm:$0xf]
        %v3516 = vld [vmem:[%s7 + $0x28] sm:$0xf]
        %v3517 = vld [vmem:[%s7 + $0x2c] sm:$0xf]
        %v3518 = vld [vmem:[%s7 + $0x30] sm:$0xf]
        %v3519 = vld [vmem:[%s7 + $0x34] sm:$0xf]
        %v3520 = vld [vmem:[%s7 + $0x38] sm:$0xf]
        %v3521 = vld [vmem:[%s7 + $0x3c] sm:$0xf]
        %v3522 = vld [vmem:[%s8] sm:$0x1]
        %v3524 = vlaneseq
        %v3525 = vshrl.u32 %v3524, 7
        %v3526 = vsub.s32 0, %v3525
        %v3527 = vrot.slane %v3522, %v3526
        %v3545 = vunpack.c.l.b16 %v3506
        %v3546 = vunpack.c.l.b16 %v3507
        %v3547 = vunpack.c.l.b16 %v3508
        %v3548 = vunpack.c.l.b16 %v3509
        %v3549 = vunpack.c.l.b16 %v3510
        %v3550 = vunpack.c.l.b16 %v3511
        %v3551 = vunpack.c.l.b16 %v3512
        %v3552 = vunpack.c.l.b16 %v3513
        %v3553 = vunpack.c.l.b16 %v3514
        %v3554 = vunpack.c.l.b16 %v3515
        %v3555 = vunpack.c.l.b16 %v3516
        %v3556 = vunpack.c.l.b16 %v3517
        %v3557 = vunpack.c.l.b16 %v3518
        %v3558 = vunpack.c.l.b16 %v3519
        %v3559 = vunpack.c.l.b16 %v3520
        %v3560 = vunpack.c.l.b16 %v3521
        %v3561 = vpack.c.b16 %v3546, %v3545
        %v3562 = vpack.c.b16 %v3548, %v3547
        %v3563 = vpack.c.b16 %v3550, %v3549
        %v3564 = vpack.c.b16 %v3552, %v3551
        %v3565 = vpack.c.b16 %v3554, %v3553
        %v3566 = vpack.c.b16 %v3556, %v3555
        %v3567 = vpack.c.b16 %v3558, %v3557
        %v3568 = vpack.c.b16 %v3560, %v3559
        %3577 = vmatprep.subr.bf16.mxu0 0
        %3578 = vmatpush1.bf16.msra.mxu0 %v3568
        %3579 = vmatprep.subr.bf16.mxu0 0
        %3580 = vmatpush1.bf16.msra.mxu0 %v3567
        %3581 = vmatprep.subr.bf16.mxu0 0
        %3582 = vmatpush1.bf16.msra.mxu0 %v3566
        %3583 = vmatprep.subr.bf16.mxu0 0
        %3584 = vmatpush1.bf16.msra.mxu0 %v3565
        %3585 = vmatprep.subr.bf16.mxu0 0
        %3586 = vmatpush1.bf16.msra.mxu0 %v3564
        %3587 = vmatprep.subr.bf16.mxu0 0
        %3588 = vmatpush1.bf16.msra.mxu0 %v3563
        %3589 = vmatprep.subr.bf16.mxu0 0
        %3590 = vmatpush1.bf16.msra.mxu0 %v3562
        %3591 = vmatprep.subr.bf16.mxu0 0
        %3592 = vmatpush1.bf16.msra.mxu0 %v3561
        %3593 = vmatprep.subr.bf16.mxu0 0
        %3594 = vmatpush2.bf16.msra.mxu0 0
        %3595 = vmatprep.subr.bf16.mxu0 0
        %3596 = vmatpush2.bf16.msra.mxu0 0
        %3597 = vmatprep.subr.bf16.mxu0 0
        %3598 = vmatpush2.bf16.msra.mxu0 0
        %3599 = vmatprep.subr.bf16.mxu0 0
        %3600 = vmatpush2.bf16.msra.mxu0 0
        %3601 = vmatprep.subr.bf16.mxu0 0
        %3602 = vmatpush2.bf16.msra.mxu0 0
        %3603 = vmatprep.subr.bf16.mxu0 0
        %3604 = vmatpush2.bf16.msra.mxu0 0
        %3605 = vmatprep.subr.bf16.mxu0 0
        %3606 = vmatpush2.bf16.msra.mxu0 0
        %3607 = vmatprep.subr.bf16.mxu0 0
        %3608 = vmatpush2.bf16.msra.mxu0 0
        %3609 = vmatprep.mubr.bf16.mxu0 0
        %3610 = vmatmul.mubr.bf16.gmra.mxu0 %v3502
        %v3611 = vpop.f32.mrf.mxu0
        %v3612 = vadd.f32 %v3527, %v3611
        %v3613 = vpop.f32.mrf.mxu0
        %v3614 = vpop.f32.mrf.mxu0
        %v3615 = vadd.f32 %v3527, %v3614
        %v3616 = vpop.f32.mrf.mxu0
        %3617 = vmatprep.mubr.bf16.mxu0 0
        %3618 = vmatmul.mubr.bf16.gmra.mxu0 %v3503
        %v3619 = vpop.f32.mrf.mxu0
        %v3620 = vadd.f32 %v3527, %v3619
        %v3621 = vpop.f32.mrf.mxu0
        %v3622 = vpop.f32.mrf.mxu0
        %v3623 = vadd.f32 %v3527, %v3622
        %v3624 = vpop.f32.mrf.mxu0
        %3625 = vmatprep.mubr.bf16.mxu0 0
        %3626 = vmatmul.mubr.bf16.gmra.mxu0 %v3504
        %v3627 = vpop.f32.mrf.mxu0
        %v3628 = vadd.f32 %v3527, %v3627
        %v3629 = vpop.f32.mrf.mxu0
        %v3630 = vpop.f32.mrf.mxu0
        %v3631 = vadd.f32 %v3527, %v3630
        %v3632 = vpop.f32.mrf.mxu0
        %3633 = vmatprep.mubr.bf16.mxu0 0
        %3634 = vmatmul.mubr.bf16.gmra.mxu0 %v3505
        %v3635 = vpop.f32.mrf.mxu0
        %v3636 = vadd.f32 %v3527, %v3635
        %v3637 = vpop.f32.mrf.mxu0
        %v3638 = vpop.f32.mrf.mxu0
        %v3639 = vadd.f32 %v3527, %v3638
        %v3640 = vpop.f32.mrf.mxu0
        %3641 = vdwg.mxu0
        %v3642 = vlaneseq
        %v3643 = vand.u32 %v3642, 127
        %v3644 = vtanh.pop %v3612
        %v3645 = vtanh.pop %v3615
        %v3646 = vtanh.pop %v3620
        %v3647 = vtanh.pop %v3623
        %v3648 = vtanh.pop %v3628
        %v3649 = vtanh.pop %v3631
        %v3650 = vtanh.pop %v3636
        %v3651 = vtanh.pop %v3639
        %v3652 = vadd.f32 %v3644, 1.0
        %v3653 = vadd.f32 %v3645, 1.0
        %v3654 = vadd.f32 %v3646, 1.0
        %v3655 = vadd.f32 %v3647, 1.0
        %v3656 = vadd.f32 %v3648, 1.0
        %v3657 = vadd.f32 %v3649, 1.0
        %v3658 = vadd.f32 %v3650, 1.0
        %v3659 = vadd.f32 %v3651, 1.0
        %v3660 = vmul.f32 %v3652, 3.5
        %v3661 = vmul.f32 %v3653, 3.5
        %v3662 = vmul.f32 %v3654, 3.5
        %v3663 = vmul.f32 %v3655, 3.5
        %v3664 = vmul.f32 %v3656, 3.5
        %v3665 = vmul.f32 %v3657, 3.5
        %v3666 = vmul.f32 %v3658, 3.5
        %v3667 = vmul.f32 %v3659, 3.5
        %v3668 = vadd.f32 %v3660, -5.0
        %v3669 = vadd.f32 %v3661, -5.0
        %v3670 = vadd.f32 %v3662, -5.0
        %v3671 = vadd.f32 %v3663, -5.0
        %v3672 = vadd.f32 %v3664, -5.0
        %v3673 = vadd.f32 %v3665, -5.0
        %v3674 = vadd.f32 %v3666, -5.0
        %v3675 = vadd.f32 %v3667, -5.0
        %vm3676 = vcmp.ge.s32.totalorder %v3643, 4
        %v3677 = vsel %vm3676, %v3668, %v3612
        %v3678 = vsel %vm3676, %v3669, %v3615
        %v3679 = vsel %vm3676, %v3670, %v3620
        %v3680 = vsel %vm3676, %v3671, %v3623
        %v3681 = vsel %vm3676, %v3672, %v3628
        %v3682 = vsel %vm3676, %v3673, %v3631
        %v3683 = vsel %vm3676, %v3674, %v3636
        %v3684 = vsel %vm3676, %v3675, %v3639
        %vm3685 = vcmask 64512
        %3686 = vst.msk [vmem:[%s349] sm:$0xff] %vm3685, %v3677
        %3687 = vst.msk [vmem:[%s349 + $0x8] sm:$0xff] %vm3685, %v3678
        %3688 = vst.msk [vmem:[%s349 + $0x10] sm:$0xff] %vm3685, %v3679
        %3689 = vst.msk [vmem:[%s349 + $0x18] sm:$0xff] %vm3685, %v3680
        %3690 = vst.msk [vmem:[%s349 + $0x20] sm:$0xff] %vm3685, %v3681
        %3691 = vst.msk [vmem:[%s349 + $0x28] sm:$0xff] %vm3685, %v3682
        %3692 = vst.msk [vmem:[%s349 + $0x30] sm:$0xff] %vm3685, %v3683
        %3693 = vst.msk [vmem:[%s349 + $0x38] sm:$0xff] %vm3685, %v3684
        %v3694 = vpack.c.bf16 %v3495, %v3494
        %v3695 = vpack.c.bf16 %v3497, %v3496
        %v3696 = vpack.c.bf16 %v3499, %v3498
        %v3697 = vpack.c.bf16 %v3501, %v3500
        %v3698 = vld [vmem:[%s7] sm:$0xf]
        %v3699 = vld [vmem:[%s7 + $0x4] sm:$0xf]
        %v3700 = vld [vmem:[%s7 + $0x8] sm:$0xf]
        %v3701 = vld [vmem:[%s7 + $0xc] sm:$0xf]
        %v3702 = vld [vmem:[%s7 + $0x10] sm:$0xf]
        %v3703 = vld [vmem:[%s7 + $0x14] sm:$0xf]
        %v3704 = vld [vmem:[%s7 + $0x18] sm:$0xf]
        %v3705 = vld [vmem:[%s7 + $0x1c] sm:$0xf]
        %v3706 = vld [vmem:[%s7 + $0x20] sm:$0xf]
        %v3707 = vld [vmem:[%s7 + $0x24] sm:$0xf]
        %v3708 = vld [vmem:[%s7 + $0x28] sm:$0xf]
        %v3709 = vld [vmem:[%s7 + $0x2c] sm:$0xf]
        %v3710 = vld [vmem:[%s7 + $0x30] sm:$0xf]
        %v3711 = vld [vmem:[%s7 + $0x34] sm:$0xf]
        %v3712 = vld [vmem:[%s7 + $0x38] sm:$0xf]
        %v3713 = vld [vmem:[%s7 + $0x3c] sm:$0xf]
        %v3714 = vld [vmem:[%s8] sm:$0x1]
        %v3716 = vlaneseq
        %v3717 = vshrl.u32 %v3716, 7
        %v3718 = vsub.s32 0, %v3717
        %v3719 = vrot.slane %v3714, %v3718
        %v3737 = vunpack.c.l.b16 %v3698
        %v3738 = vunpack.c.l.b16 %v3699
        %v3739 = vunpack.c.l.b16 %v3700
        %v3740 = vunpack.c.l.b16 %v3701
        %v3741 = vunpack.c.l.b16 %v3702
        %v3742 = vunpack.c.l.b16 %v3703
        %v3743 = vunpack.c.l.b16 %v3704
        %v3744 = vunpack.c.l.b16 %v3705
        %v3745 = vunpack.c.l.b16 %v3706
        %v3746 = vunpack.c.l.b16 %v3707
        %v3747 = vunpack.c.l.b16 %v3708
        %v3748 = vunpack.c.l.b16 %v3709
        %v3749 = vunpack.c.l.b16 %v3710
        %v3750 = vunpack.c.l.b16 %v3711
        %v3751 = vunpack.c.l.b16 %v3712
        %v3752 = vunpack.c.l.b16 %v3713
        %v3753 = vpack.c.b16 %v3738, %v3737
        %v3754 = vpack.c.b16 %v3740, %v3739
        %v3755 = vpack.c.b16 %v3742, %v3741
        %v3756 = vpack.c.b16 %v3744, %v3743
        %v3757 = vpack.c.b16 %v3746, %v3745
        %v3758 = vpack.c.b16 %v3748, %v3747
        %v3759 = vpack.c.b16 %v3750, %v3749
        %v3760 = vpack.c.b16 %v3752, %v3751
        %3769 = vmatprep.subr.bf16.mxu0 0
        %3770 = vmatpush1.bf16.msra.mxu0 %v3760
        %3771 = vmatprep.subr.bf16.mxu0 0
        %3772 = vmatpush1.bf16.msra.mxu0 %v3759
        %3773 = vmatprep.subr.bf16.mxu0 0
        %3774 = vmatpush1.bf16.msra.mxu0 %v3758
        %3775 = vmatprep.subr.bf16.mxu0 0
        %3776 = vmatpush1.bf16.msra.mxu0 %v3757
        %3777 = vmatprep.subr.bf16.mxu0 0
        %3778 = vmatpush1.bf16.msra.mxu0 %v3756
        %3779 = vmatprep.subr.bf16.mxu0 0
        %3780 = vmatpush1.bf16.msra.mxu0 %v3755
        %3781 = vmatprep.subr.bf16.mxu0 0
        %3782 = vmatpush1.bf16.msra.mxu0 %v3754
        %3783 = vmatprep.subr.bf16.mxu0 0
        %3784 = vmatpush1.bf16.msra.mxu0 %v3753
        %3785 = vmatprep.subr.bf16.mxu0 0
        %3786 = vmatpush2.bf16.msra.mxu0 0
        %3787 = vmatprep.subr.bf16.mxu0 0
        %3788 = vmatpush2.bf16.msra.mxu0 0
        %3789 = vmatprep.subr.bf16.mxu0 0
        %3790 = vmatpush2.bf16.msra.mxu0 0
        %3791 = vmatprep.subr.bf16.mxu0 0
        %3792 = vmatpush2.bf16.msra.mxu0 0
        %3793 = vmatprep.subr.bf16.mxu0 0
        %3794 = vmatpush2.bf16.msra.mxu0 0
        %3795 = vmatprep.subr.bf16.mxu0 0
        %3796 = vmatpush2.bf16.msra.mxu0 0
        %3797 = vmatprep.subr.bf16.mxu0 0
        %3798 = vmatpush2.bf16.msra.mxu0 0
        %3799 = vmatprep.subr.bf16.mxu0 0
        %3800 = vmatpush2.bf16.msra.mxu0 0
        %3801 = vmatprep.mubr.bf16.mxu0 0
        %3802 = vmatmul.mubr.bf16.gmra.mxu0 %v3694
        %v3803 = vpop.f32.mrf.mxu0
        %v3804 = vadd.f32 %v3719, %v3803
        %v3805 = vpop.f32.mrf.mxu0
        %v3806 = vpop.f32.mrf.mxu0
        %v3807 = vadd.f32 %v3719, %v3806
        %v3808 = vpop.f32.mrf.mxu0
        %3809 = vmatprep.mubr.bf16.mxu0 0
        %3810 = vmatmul.mubr.bf16.gmra.mxu0 %v3695
        %v3811 = vpop.f32.mrf.mxu0
        %v3812 = vadd.f32 %v3719, %v3811
        %v3813 = vpop.f32.mrf.mxu0
        %v3814 = vpop.f32.mrf.mxu0
        %v3815 = vadd.f32 %v3719, %v3814
        %v3816 = vpop.f32.mrf.mxu0
        %3817 = vmatprep.mubr.bf16.mxu0 0
        %3818 = vmatmul.mubr.bf16.gmra.mxu0 %v3696
        %v3819 = vpop.f32.mrf.mxu0
        %v3820 = vadd.f32 %v3719, %v3819
        %v3821 = vpop.f32.mrf.mxu0
        %v3822 = vpop.f32.mrf.mxu0
        %v3823 = vadd.f32 %v3719, %v3822
        %v3824 = vpop.f32.mrf.mxu0
        %3825 = vmatprep.mubr.bf16.mxu0 0
        %3826 = vmatmul.mubr.bf16.gmra.mxu0 %v3697
        %v3827 = vpop.f32.mrf.mxu0
        %v3828 = vadd.f32 %v3719, %v3827
        %v3829 = vpop.f32.mrf.mxu0
        %v3830 = vpop.f32.mrf.mxu0
        %v3831 = vadd.f32 %v3719, %v3830
        %v3832 = vpop.f32.mrf.mxu0
        %3833 = vdwg.mxu0
        %v3834 = vtanh.pop %v3804
        %v3835 = vtanh.pop %v3807
        %v3836 = vtanh.pop %v3812
        %v3837 = vtanh.pop %v3815
        %v3838 = vtanh.pop %v3820
        %v3839 = vtanh.pop %v3823
        %v3840 = vtanh.pop %v3828
        %v3841 = vtanh.pop %v3831
        %v3842 = vadd.f32 %v3834, 1.0
        %v3843 = vadd.f32 %v3835, 1.0
        %v3844 = vadd.f32 %v3836, 1.0
        %v3845 = vadd.f32 %v3837, 1.0
        %v3846 = vadd.f32 %v3838, 1.0
        %v3847 = vadd.f32 %v3839, 1.0
        %v3848 = vadd.f32 %v3840, 1.0
        %v3849 = vadd.f32 %v3841, 1.0
        %v3850 = vmul.f32 %v3842, 3.5
        %v3851 = vmul.f32 %v3843, 3.5
        %v3852 = vmul.f32 %v3844, 3.5
        %v3853 = vmul.f32 %v3845, 3.5
        %v3854 = vmul.f32 %v3846, 3.5
        %v3855 = vmul.f32 %v3847, 3.5
        %v3856 = vmul.f32 %v3848, 3.5
        %v3857 = vmul.f32 %v3849, 3.5
        %v3858 = vadd.f32 %v3850, -5.0
        %v3859 = vadd.f32 %v3851, -5.0
        %v3860 = vadd.f32 %v3852, -5.0
        %v3861 = vadd.f32 %v3853, -5.0
        %v3862 = vadd.f32 %v3854, -5.0
        %v3863 = vadd.f32 %v3855, -5.0
        %v3864 = vadd.f32 %v3856, -5.0
        %v3865 = vadd.f32 %v3857, -5.0
        %v3866 = vsel %vm3676, %v3858, %v3804
        %v3867 = vsel %vm3676, %v3859, %v3807
        %v3868 = vsel %vm3676, %v3860, %v3812
        %v3869 = vsel %vm3676, %v3861, %v3815
        %v3870 = vsel %vm3676, %v3862, %v3820
        %v3871 = vsel %vm3676, %v3863, %v3823
        %v3872 = vsel %vm3676, %v3864, %v3828
        %v3873 = vsel %vm3676, %v3865, %v3831
        %3874 = vst.msk [vmem:[%s349 + $0x40] sm:$0xff] %vm3685, %v3866
        %3875 = vst.msk [vmem:[%s349 + $0x48] sm:$0xff] %vm3685, %v3867
        %3876 = vst.msk [vmem:[%s349 + $0x50] sm:$0xff] %vm3685, %v3868
        %3877 = vst.msk [vmem:[%s349 + $0x58] sm:$0xff] %vm3685, %v3869
        %3878 = vst.msk [vmem:[%s349 + $0x60] sm:$0xff] %vm3685, %v3870
        %3879 = vst.msk [vmem:[%s349 + $0x68] sm:$0xff] %vm3685, %v3871
        %3880 = vst.msk [vmem:[%s349 + $0x70] sm:$0xff] %vm3685, %v3872
        %3881 = vst.msk [vmem:[%s349 + $0x78] sm:$0xff] %vm3685, %v3873
        %s3882 = smul.u32 16, %s21
        %p3883 = scmp.lt.s32.totalorder %s3882, 31
        %s3884 = scalar_select %p3883, %s3882, 31
        %s3885 = smul.addr %s3884, 8
        %s3886 = scalar_lea.vmem %s9, %s3885
        // Predicated region
        $region61: #{ra_actor_forward.1} parent=55 // pred_check
          %p3887 = pneg %p233
        $region62: #{ra_actor_forward.1} parent=55 // pred_check_branch
          %3889 = sbr.rel (%p3887) target = $region64
        $region63: #{ra_actor_forward.1} parent=55 // pred_region
          %s3890 = smul.u32 16, %s21
        $region64: #{ra_actor_forward.1} parent=55 // pred_fallthru
          _
      $region56: #{ra_actor_forward.1} parent=5 // pred_fallthru
        _
      %p3891 = scmp.le.s32.totalorder 2, %s16
      // Predicated region
      $region65: #{ra_actor_forward.1} parent=5 // pred_check
        %p3892 = pneg %p3891
      $region66: #{ra_actor_forward.1} parent=5 // pred_check_branch
        %3894 = sbr.rel (%p3892) target = $region68
      $region67: #{ra_actor_forward.1} parent=5 // pred_region
        %s3895 = ssub.s32 %s16, 2
        // Predicated region
        $region69: #{ra_actor_forward.1} parent=67 // pred_check
          %p3896 = pneg %p239
        $region70: #{ra_actor_forward.1} parent=67 // pred_check_branch
          %3898 = sbr.rel (%p3896) target = $region72
        $region71: #{ra_actor_forward.1} parent=67 // pred_region
          %s3899 = smul.u32 16, %s22
          %p3900 = scmp.lt.s32.totalorder %s3899, 31
          %s3901 = scalar_select %p3900, %s3899, 31
          %s3902 = smul.addr %s3901, 8
          %s3903 = scalar_lea.vmem %s9, %s3902
        $region72: #{ra_actor_forward.1} parent=67 // pred_fallthru
          _
      $region68: #{ra_actor_forward.1} parent=5 // pred_fallthru
        _
    $region6: #{ra_actor_forward.1} parent=1 // loop_footer
      %s20 = sadd.s32 1, %s16
    $region7: #{ra_actor_forward.1} parent=1 // loop_footer_branch
      %15 = sbr.rel target = $region3
    $region8: #{ra_actor_forward.1} parent=1 // loop_exit
      _
    %3904 = vsyncpa [#allocation3], 1
    %s3905 = scalar_lea.sflag [#allocation3], 1
    %3906 = vsyncpa %s3905, 1

</llo_original>
